<compile_context>
chip_gen: v6e
topology: v6e:2x2x1
jax: 0.10.0
libtpu: 0.0.40
codegen_flags: <defaults>
</compile_context>

<pallas_src>
import math

import jax
import jax.numpy as jnp
from jax.experimental import pallas as pl
from jax.experimental.pallas import tpu as pltpu

# ----------------------- config (small, synthetic) -----------------------
MODULO = 7            # vocab_size / n_classes
MAX_LEN = 8           # input_len / output_len
LATENT_DIM = 32       # input_dim / latent_dim / output_dim
LATENT_FRAC = 1
LATENT_LEN = int(LATENT_FRAC * MAX_LEN)
MLP_HIDDEN = 4 * LATENT_DIM          # 128
NUM_SELF_LAYERS = 2
NUM_BLOCKS = 1 + NUM_SELF_LAYERS     # cross-attn + self-attn layers
LN_EPS = 1e-5
VOCAB_PAD = 8         # pad vocab rows 7 -> 8 (zero rows; tokens < 7)
PAD_CLASSES = 128     # lane-dense decoder output, sliced to MODULO outside


def _layernorm(x, g, b):
    m = jnp.mean(x, axis=-1, keepdims=True)
    v = jnp.mean((x - m) ** 2, axis=-1, keepdims=True)
    return (x - m) * jax.lax.rsqrt(v + LN_EPS) * g + b


# ----------------------- fused forward kernel -----------------------
def fused_perceiver_kernel(tokens_ref, emb_ref, pos_ref, lat_ref,
                           ln_ref, wqkv_ref, bqkv_ref, wo_ref, bo_ref,
                           w1_ref, b1_ref, w2_ref, b2_ref,
                           decw_ref, decb_ref, o_ref):
    N = pos_ref.shape[0]                 # input sequence length
    V, D = emb_ref.shape                 # (padded) vocab, latent dim
    L = lat_ref.shape[0]                 # latent length
    B = tokens_ref.shape[0] // N         # batch (tokens passed as [B*N, 1])

    # ---- embedding gather (one-hot matmul; no dynamic gather needed) + pos ----
    tok = tokens_ref[...]                                            # [B*N, 1] int32
    onehot = (tok == jax.lax.broadcasted_iota(jnp.int32, (B * N, V), 1))
    x = jnp.dot(onehot.astype(jnp.float32), emb_ref[...],
                preferred_element_type=jnp.float32)                  # [B*N, D]
    x = x + jnp.tile(pos_ref[...], (B, 1))                           # trainable pos

    # ---- learned latents, broadcast over batch (batch folded into sublanes) ----
    lat = jnp.tile(lat_ref[...], (B, 1))                             # [B*L, D]

    scale = 1.0 / math.sqrt(D)

    def block(li, q_in, kv_in, q_len, kv_len):
        """Pre-LN single-head attention + MLP block, batch folded into rows."""
        ln = ln_ref[li]                                              # [6, D]
        qn = _layernorm(q_in, ln[0:1, :], ln[1:2, :])
        kn = _layernorm(kv_in, ln[2:3, :], ln[3:4, :])

        # fused QKV projection (one MXU push per side)
        w_qkv = wqkv_ref[li]                                         # [D, 3D]
        b_qkv = bqkv_ref[li]                                         # [1, 3D]
        qp = jnp.dot(qn, w_qkv, preferred_element_type=jnp.float32) + b_qkv
        kp = jnp.dot(kn, w_qkv, preferred_element_type=jnp.float32) + b_qkv

        q = qp[:, 0:D].reshape(B, q_len, D)
        k = kp[:, D:2 * D].reshape(B, kv_len, D)
        v = kp[:, 2 * D:3 * D].reshape(B, kv_len, D)

        # batched attention, no explicit transpose
        s = jnp.einsum('bqd,bkd->bqk', q, k,
                       preferred_element_type=jnp.float32) * scale   # [B, Lq, Lk]
        s = s - jnp.max(s, axis=-1, keepdims=True)
        p = jnp.exp(s)
        p = p * pl.reciprocal(jnp.sum(p, axis=-1, keepdims=True), approx=True)
        a = jnp.einsum('bqk,bkd->bqd', p, v,
                       preferred_element_type=jnp.float32)           # [B, Lq, D]
        a = a.reshape(B * q_len, D)

        attn_out = (jnp.dot(a, wo_ref[li], preferred_element_type=jnp.float32)
                    + bo_ref[li])
        h = q_in + attn_out                                          # residual

        hn = _layernorm(h, ln[4:5, :], ln[5:6, :])
        # TODO(synk): PyTorch nn.GELU defaults to exact erf GELU; tanh approximation
        #             used here (erf lowering support in Mosaic not guaranteed).
        m1 = jax.nn.gelu(jnp.dot(hn, w1_ref[li],
                                 preferred_element_type=jnp.float32) + b1_ref[li])
        m2 = jnp.dot(m1, w2_ref[li], preferred_element_type=jnp.float32) + b2_ref[li]
        return h + m2                                                # residual

    # encoder cross-attention (latents attend to inputs)
    lat = block(0, lat, x, L, N)
    # latent self-attention layers (static unroll)
    for i in range(NUM_SELF_LAYERS):
        lat = block(1 + i, lat, lat, L, L)

    # decoder: projection only (no cross-attn, no residual); lane-dense output
    o_ref[...] = (jnp.dot(lat, decw_ref[...], preferred_element_type=jnp.float32)
                  + decb_ref[...])


# ----------------------- wrapper -----------------------
@jax.jit
def grokking_perceiver_forward(tokens, params):
    B, N = tokens.shape
    tokens2d = tokens.reshape(B * N, 1).astype(jnp.int32)   # token id per sublane row

    # TODO(synk): for larger batches, add a leading "parallel" batch-tile grid axis
    #             so v7x's two TensorCores are both used; unnecessary at B=2.
    out = pl.pallas_call(
        fused_perceiver_kernel,
        out_shape=jax.ShapeDtypeStruct((B * LATENT_LEN, PAD_CLASSES), jnp.float32),
        compiler_params=pltpu.CompilerParams(vmem_limit_bytes=32 * 1024 * 1024),
    )(tokens2d, params["emb"], params["pos"], params["latents"],
      params["ln"], params["wqkv"], params["bqkv"], params["wo"], params["bo"],
      params["w1"], params["b1"], params["w2"], params["b2"],
      params["dec_w"], params["dec_b"])

    # slice the lane-dense logits slab down to n_classes
    return out.reshape(B, LATENT_LEN, PAD_CLASSES)[:, :, :MODULO]


# ----------------------- parameter init (deterministic, packed layout) -----------------------
def init_params(key):
    s = 0.02
    keys = iter(jax.random.split(key, 3 + 6 * NUM_BLOCKS + 1))

    emb = s * jax.random.normal(next(keys), (MODULO, LATENT_DIM), jnp.float32)
    pos = s * jax.random.normal(next(keys), (MAX_LEN, LATENT_DIM), jnp.float32)
    latents = s * jax.random.normal(next(keys), (LATENT_LEN, LATENT_DIM), jnp.float32)

    wqkv_l, wo_l, w1_l, w2_l = [], [], [], []
    for _ in range(NUM_BLOCKS):
        wq = s * jax.random.normal(next(keys), (LATENT_DIM, LATENT_DIM), jnp.float32)
        wk = s * jax.random.normal(next(keys), (LATENT_DIM, LATENT_DIM), jnp.float32)
        wv = s * jax.random.normal(next(keys), (LATENT_DIM, LATENT_DIM), jnp.float32)
        wqkv_l.append(jnp.concatenate([wq, wk, wv], axis=1))            # [D, 3D]
        wo_l.append(s * jax.random.normal(next(keys), (LATENT_DIM, LATENT_DIM), jnp.float32))
        w1_l.append(s * jax.random.normal(next(keys), (LATENT_DIM, MLP_HIDDEN), jnp.float32))
        w2_l.append(s * jax.random.normal(next(keys), (MLP_HIDDEN, LATENT_DIM), jnp.float32))

    dec_w = s * jax.random.normal(next(keys), (LATENT_DIM, MODULO), jnp.float32)

    ones = jnp.ones((1, LATENT_DIM), jnp.float32)
    zeros = jnp.zeros((1, LATENT_DIM), jnp.float32)
    # rows: q-LN gain/bias, kv-LN gain/bias, MLP-LN gain/bias
    ln_block = jnp.concatenate([ones, zeros, ones, zeros, ones, zeros], axis=0)

    return {
        # vocab table padded 7 -> 8 rows (tokens < 7, extra row never selected)
        "emb": jnp.pad(emb, ((0, VOCAB_PAD - MODULO), (0, 0))),
        "pos": pos,
        "latents": latents,
        "ln": jnp.stack([ln_block] * NUM_BLOCKS),                              # [3, 6, D]
        "wqkv": jnp.stack(wqkv_l),                                             # [3, D, 3D]
        "bqkv": jnp.zeros((NUM_BLOCKS, 1, 3 * LATENT_DIM), jnp.float32),
        "wo": jnp.stack(wo_l),                                                 # [3, D, D]
        "bo": jnp.zeros((NUM_BLOCKS, 1, LATENT_DIM), jnp.float32),
        "w1": jnp.stack(w1_l),                                                 # [3, D, H]
        "b1": jnp.zeros((NUM_BLOCKS, 1, MLP_HIDDEN), jnp.float32),
        "w2": jnp.stack(w2_l),                                                 # [3, H, D]
        "b2": jnp.zeros((NUM_BLOCKS, 1, LATENT_DIM), jnp.float32),
        # lane-dense decoder: n_classes padded 7 -> 128, sliced in the wrapper
        "dec_w": jnp.pad(dec_w, ((0, 0), (0, PAD_CLASSES - MODULO))),
        "dec_b": jnp.zeros((1, PAD_CLASSES), jnp.float32),
    }


if __name__ == "__main__":
    key = jax.random.PRNGKey(0)
    pkey, xkey = jax.random.split(key)
    params = init_params(pkey)

    batch = 2
    tokens = jax.random.randint(xkey, (batch, MAX_LEN), 0, MODULO, dtype=jnp.int32)

    out = grokking_perceiver_forward(tokens, params)
    out = jax.block_until_ready(out)
    assert out.shape == (batch, MAX_LEN, MODULO), out.shape
    assert jnp.all(jnp.isfinite(out))
    print("KERNEL_OK")
</pallas_src>

<mosaic_0001>
module attributes {stable_mosaic.version = 11 : i64} {
  func.func @fused_perceiver_kernel(%arg0: memref<16x1xi32, #tpu.memory_space<vmem>>, %arg1: memref<8x32xf32, #tpu.memory_space<vmem>>, %arg2: memref<8x32xf32, #tpu.memory_space<vmem>>, %arg3: memref<8x32xf32, #tpu.memory_space<vmem>>, %arg4: memref<3x6x32xf32, #tpu.memory_space<vmem>>, %arg5: memref<3x32x96xf32, #tpu.memory_space<vmem>>, %arg6: memref<3x1x96xf32, #tpu.memory_space<vmem>>, %arg7: memref<3x32x32xf32, #tpu.memory_space<vmem>>, %arg8: memref<3x1x32xf32, #tpu.memory_space<vmem>>, %arg9: memref<3x32x128xf32, #tpu.memory_space<vmem>>, %arg10: memref<3x1x128xf32, #tpu.memory_space<vmem>>, %arg11: memref<3x128x32xf32, #tpu.memory_space<vmem>>, %arg12: memref<3x1x32xf32, #tpu.memory_space<vmem>>, %arg13: memref<32x128xf32, #tpu.memory_space<vmem>>, %arg14: memref<1x128xf32, #tpu.memory_space<vmem>>, %arg15: memref<16x128xf32, #tpu.memory_space<vmem>>) attributes {dimension_semantics = [], scalar_prefetch = 0 : i64, scratch_operands = 0 : i64, tpu.core_type = #tpu.core_type<tc>} {
    %c0 = arith.constant 0 : index
    %c0_0 = arith.constant 0 : index
    %0 = vector.load %arg0[%c0, %c0_0] : memref<16x1xi32, #tpu.memory_space<vmem>>, vector<16x1xi32>
    %1 = tpu.iota {dimensions = array<i32: 1>} : vector<16x8xi32>
    %2 = vector.broadcast %0 : vector<16x1xi32> to vector<16x8xi32>
    %3 = arith.cmpi eq, %2, %1 : vector<16x8xi32>
    %4 = arith.extui %3 : vector<16x8xi1> to vector<16x8xi32>
    %5 = arith.sitofp %4 : vector<16x8xi32> to vector<16x8xf32>
    %c0_1 = arith.constant 0 : index
    %c0_2 = arith.constant 0 : index
    %6 = vector.load %arg1[%c0_1, %c0_2] : memref<8x32xf32, #tpu.memory_space<vmem>>, vector<8x32xf32>
    %cst = arith.constant dense<0.000000e+00> : vector<16x32xf32>
    %7 = tpu.matmul %5, %6, %cst {dimension_numbers = #tpu.dot_dimension_numbers<[1], [0], [0], [1], [0, 0, 1, 1], [], []>} : vector<16x8xf32>, vector<8x32xf32>, vector<16x32xf32> -> vector<16x32xf32>
    %c0_3 = arith.constant 0 : index
    %c0_4 = arith.constant 0 : index
    %8 = vector.load %arg2[%c0_3, %c0_4] : memref<8x32xf32, #tpu.memory_space<vmem>>, vector<8x32xf32>
    %9 = tpu.concatenate %8, %8 in 0 : vector<8x32xf32>, vector<8x32xf32> -> vector<16x32xf32>
    %10 = arith.addf %7, %9 : vector<16x32xf32>
    %c0_5 = arith.constant 0 : index
    %c0_6 = arith.constant 0 : index
    %11 = vector.load %arg3[%c0_5, %c0_6] : memref<8x32xf32, #tpu.memory_space<vmem>>, vector<8x32xf32>
    %12 = tpu.concatenate %11, %11 in 0 : vector<8x32xf32>, vector<8x32xf32> -> vector<16x32xf32>
    %c0_7 = arith.constant 0 : index
    %c0_8 = arith.constant 0 : index
    %c0_9 = arith.constant 0 : index
    %13 = vector.load %arg4[%c0_7, %c0_8, %c0_9] : memref<3x6x32xf32, #tpu.memory_space<vmem>>, vector<1x6x32xf32>
    %14 = vector.shape_cast %13 : vector<1x6x32xf32> to vector<6x32xf32>
    %15 = vector.extract_strided_slice %14 {offsets = [0, 0], sizes = [1, 32], strides = [1, 1]} : vector<6x32xf32> to vector<1x32xf32>
    %16 = vector.extract_strided_slice %14 {offsets = [1, 0], sizes = [1, 32], strides = [1, 1]} : vector<6x32xf32> to vector<1x32xf32>
    %cst_10 = arith.constant dense<0.000000e+00> : vector<16xf32>
    %17 = vector.multi_reduction <add>, %12, %cst_10 [1] : vector<16x32xf32> to vector<16xf32>
    %18 = vector.shape_cast %17 : vector<16xf32> to vector<16x1xf32>
    %cst_11 = arith.constant 3.200000e+01 : f32
    %19 = vector.broadcast %cst_11 : f32 to vector<16x1xf32>
    %20 = arith.divf %18, %19 : vector<16x1xf32>
    %21 = vector.broadcast %20 : vector<16x1xf32> to vector<16x32xf32>
    %22 = arith.subf %12, %21 : vector<16x32xf32>
    %23 = arith.mulf %22, %22 : vector<16x32xf32>
    %cst_12 = arith.constant dense<0.000000e+00> : vector<16xf32>
    %24 = vector.multi_reduction <add>, %23, %cst_12 [1] : vector<16x32xf32> to vector<16xf32>
    %25 = vector.shape_cast %24 : vector<16xf32> to vector<16x1xf32>
    %cst_13 = arith.constant 3.200000e+01 : f32
    %26 = vector.broadcast %cst_13 : f32 to vector<16x1xf32>
    %27 = arith.divf %25, %26 : vector<16x1xf32>
    %28 = vector.broadcast %20 : vector<16x1xf32> to vector<16x32xf32>
    %29 = arith.subf %12, %28 : vector<16x32xf32>
    %cst_14 = arith.constant 9.99999974E-6 : f32
    %30 = vector.broadcast %cst_14 : f32 to vector<16x1xf32>
    %31 = arith.addf %27, %30 : vector<16x1xf32>
    %32 = math.rsqrt %31 : vector<16x1xf32>
    %33 = vector.broadcast %32 : vector<16x1xf32> to vector<16x32xf32>
    %34 = arith.mulf %29, %33 : vector<16x32xf32>
    %35 = vector.broadcast %15 : vector<1x32xf32> to vector<16x32xf32>
    %36 = arith.mulf %34, %35 : vector<16x32xf32>
    %37 = vector.broadcast %16 : vector<1x32xf32> to vector<16x32xf32>
    %38 = arith.addf %36, %37 : vector<16x32xf32>
    %39 = vector.extract_strided_slice %14 {offsets = [2, 0], sizes = [1, 32], strides = [1, 1]} : vector<6x32xf32> to vector<1x32xf32>
    %40 = vector.extract_strided_slice %14 {offsets = [3, 0], sizes = [1, 32], strides = [1, 1]} : vector<6x32xf32> to vector<1x32xf32>
    %cst_15 = arith.constant dense<0.000000e+00> : vector<16xf32>
    %41 = vector.multi_reduction <add>, %10, %cst_15 [1] : vector<16x32xf32> to vector<16xf32>
    %42 = vector.shape_cast %41 : vector<16xf32> to vector<16x1xf32>
    %cst_16 = arith.constant 3.200000e+01 : f32
    %43 = vector.broadcast %cst_16 : f32 to vector<16x1xf32>
    %44 = arith.divf %42, %43 : vector<16x1xf32>
    %45 = vector.broadcast %44 : vector<16x1xf32> to vector<16x32xf32>
    %46 = arith.subf %10, %45 : vector<16x32xf32>
    %47 = arith.mulf %46, %46 : vector<16x32xf32>
    %cst_17 = arith.constant dense<0.000000e+00> : vector<16xf32>
    %48 = vector.multi_reduction <add>, %47, %cst_17 [1] : vector<16x32xf32> to vector<16xf32>
    %49 = vector.shape_cast %48 : vector<16xf32> to vector<16x1xf32>
    %cst_18 = arith.constant 3.200000e+01 : f32
    %50 = vector.broadcast %cst_18 : f32 to vector<16x1xf32>
    %51 = arith.divf %49, %50 : vector<16x1xf32>
    %52 = vector.broadcast %44 : vector<16x1xf32> to vector<16x32xf32>
    %53 = arith.subf %10, %52 : vector<16x32xf32>
    %cst_19 = arith.constant 9.99999974E-6 : f32
    %54 = vector.broadcast %cst_19 : f32 to vector<16x1xf32>
    %55 = arith.addf %51, %54 : vector<16x1xf32>
    %56 = math.rsqrt %55 : vector<16x1xf32>
    %57 = vector.broadcast %56 : vector<16x1xf32> to vector<16x32xf32>
    %58 = arith.mulf %53, %57 : vector<16x32xf32>
    %59 = vector.broadcast %39 : vector<1x32xf32> to vector<16x32xf32>
    %60 = arith.mulf %58, %59 : vector<16x32xf32>
    %61 = vector.broadcast %40 : vector<1x32xf32> to vector<16x32xf32>
    %62 = arith.addf %60, %61 : vector<16x32xf32>
    %c0_20 = arith.constant 0 : index
    %c0_21 = arith.constant 0 : index
    %c0_22 = arith.constant 0 : index
    %63 = vector.load %arg5[%c0_20, %c0_21, %c0_22] : memref<3x32x96xf32, #tpu.memory_space<vmem>>, vector<1x32x96xf32>
    %64 = vector.shape_cast %63 : vector<1x32x96xf32> to vector<32x96xf32>
    %c0_23 = arith.constant 0 : index
    %c0_24 = arith.constant 0 : index
    %c0_25 = arith.constant 0 : index
    %65 = vector.load %arg6[%c0_23, %c0_24, %c0_25] : memref<3x1x96xf32, #tpu.memory_space<vmem>>, vector<1x1x96xf32>
    %66 = vector.shape_cast %65 : vector<1x1x96xf32> to vector<1x96xf32>
    %cst_26 = arith.constant dense<0.000000e+00> : vector<16x96xf32>
    %67 = tpu.matmul %38, %64, %cst_26 {dimension_numbers = #tpu.dot_dimension_numbers<[1], [0], [0], [1], [0, 0, 1, 1], [], []>} : vector<16x32xf32>, vector<32x96xf32>, vector<16x96xf32> -> vector<16x96xf32>
    %68 = vector.broadcast %66 : vector<1x96xf32> to vector<16x96xf32>
    %69 = arith.addf %67, %68 : vector<16x96xf32>
    %cst_27 = arith.constant dense<0.000000e+00> : vector<16x96xf32>
    %70 = tpu.matmul %62, %64, %cst_27 {dimension_numbers = #tpu.dot_dimension_numbers<[1], [0], [0], [1], [0, 0, 1, 1], [], []>} : vector<16x32xf32>, vector<32x96xf32>, vector<16x96xf32> -> vector<16x96xf32>
    %71 = vector.broadcast %66 : vector<1x96xf32> to vector<16x96xf32>
    %72 = arith.addf %70, %71 : vector<16x96xf32>
    %73 = vector.extract_strided_slice %69 {offsets = [0, 0], sizes = [16, 32], strides = [1, 1]} : vector<16x96xf32> to vector<16x32xf32>
    %74 = vector.shape_cast %73 : vector<16x32xf32> to vector<2x8x32xf32>
    %75 = vector.extract_strided_slice %72 {offsets = [0, 32], sizes = [16, 32], strides = [1, 1]} : vector<16x96xf32> to vector<16x32xf32>
    %76 = vector.shape_cast %75 : vector<16x32xf32> to vector<2x8x32xf32>
    %77 = vector.extract_strided_slice %72 {offsets = [0, 64], sizes = [16, 32], strides = [1, 1]} : vector<16x96xf32> to vector<16x32xf32>
    %78 = vector.shape_cast %77 : vector<16x32xf32> to vector<2x8x32xf32>
    "tpu.trace_start"() <{level = 10 : i32, message = "bqd,bkd->bqk"}> : () -> ()
    %cst_28 = arith.constant dense<0.000000e+00> : vector<2x8x8xf32>
    %79 = tpu.matmul %74, %76, %cst_28 {dimension_numbers = #tpu.dot_dimension_numbers<[2], [2], [1], [1], [0, 0, 0, 1, 1, 1], [0], [0]>} : vector<2x8x32xf32>, vector<2x8x32xf32>, vector<2x8x8xf32> -> vector<2x8x8xf32>
    "tpu.trace_stop"() : () -> ()
    %cst_29 = arith.constant 0.176776692 : f32
    %80 = vector.broadcast %cst_29 : f32 to vector<2x8x8xf32>
    %81 = arith.mulf %79, %80 : vector<2x8x8xf32>
    %cst_30 = arith.constant dense<0xFF800000> : vector<2x8xf32>
    %82 = vector.multi_reduction <maximumf>, %81, %cst_30 [2] : vector<2x8x8xf32> to vector<2x8xf32>
    %83 = vector.shape_cast %82 : vector<2x8xf32> to vector<2x8x1xf32>
    %84 = vector.broadcast %83 : vector<2x8x1xf32> to vector<2x8x8xf32>
    %85 = arith.subf %81, %84 : vector<2x8x8xf32>
    %86 = math.exp %85 : vector<2x8x8xf32>
    %cst_31 = arith.constant dense<0.000000e+00> : vector<2x8xf32>
    %87 = vector.multi_reduction <add>, %86, %cst_31 [2] : vector<2x8x8xf32> to vector<2x8xf32>
    %88 = vector.shape_cast %87 : vector<2x8xf32> to vector<2x8x1xf32>
    %89 = tpu.reciprocal %88 {approx = true} : vector<2x8x1xf32> -> vector<2x8x1xf32>
    %90 = vector.broadcast %89 : vector<2x8x1xf32> to vector<2x8x8xf32>
    %91 = arith.mulf %86, %90 : vector<2x8x8xf32>
    "tpu.trace_start"() <{level = 10 : i32, message = "bqk,bkd->bqd"}> : () -> ()
    %cst_32 = arith.constant dense<0.000000e+00> : vector<2x8x32xf32>
    %92 = tpu.matmul %91, %78, %cst_32 {dimension_numbers = #tpu.dot_dimension_numbers<[2], [1], [1], [2], [0, 0, 0, 1, 1, 2], [0], [0]>} : vector<2x8x8xf32>, vector<2x8x32xf32>, vector<2x8x32xf32> -> vector<2x8x32xf32>
    "tpu.trace_stop"() : () -> ()
    %93 = vector.shape_cast %92 : vector<2x8x32xf32> to vector<16x32xf32>
    %c0_33 = arith.constant 0 : index
    %c0_34 = arith.constant 0 : index
    %c0_35 = arith.constant 0 : index
    %94 = vector.load %arg7[%c0_33, %c0_34, %c0_35] : memref<3x32x32xf32, #tpu.memory_space<vmem>>, vector<1x32x32xf32>
    %95 = vector.shape_cast %94 : vector<1x32x32xf32> to vector<32x32xf32>
    %cst_36 = arith.constant dense<0.000000e+00> : vector<16x32xf32>
    %96 = tpu.matmul %93, %95, %cst_36 {dimension_numbers = #tpu.dot_dimension_numbers<[1], [0], [0], [1], [0, 0, 1, 1], [], []>} : vector<16x32xf32>, vector<32x32xf32>, vector<16x32xf32> -> vector<16x32xf32>
    %c0_37 = arith.constant 0 : index
    %c0_38 = arith.constant 0 : index
    %c0_39 = arith.constant 0 : index
    %97 = vector.load %arg8[%c0_37, %c0_38, %c0_39] : memref<3x1x32xf32, #tpu.memory_space<vmem>>, vector<1x1x32xf32>
    %98 = vector.shape_cast %97 : vector<1x1x32xf32> to vector<1x32xf32>
    %99 = vector.broadcast %98 : vector<1x32xf32> to vector<16x32xf32>
    %100 = arith.addf %96, %99 : vector<16x32xf32>
    %101 = arith.addf %12, %100 : vector<16x32xf32>
    %102 = vector.extract_strided_slice %14 {offsets = [4, 0], sizes = [1, 32], strides = [1, 1]} : vector<6x32xf32> to vector<1x32xf32>
    %103 = vector.extract_strided_slice %14 {offsets = [5, 0], sizes = [1, 32], strides = [1, 1]} : vector<6x32xf32> to vector<1x32xf32>
    %cst_40 = arith.constant dense<0.000000e+00> : vector<16xf32>
    %104 = vector.multi_reduction <add>, %101, %cst_40 [1] : vector<16x32xf32> to vector<16xf32>
    %105 = vector.shape_cast %104 : vector<16xf32> to vector<16x1xf32>
    %cst_41 = arith.constant 3.200000e+01 : f32
    %106 = vector.broadcast %cst_41 : f32 to vector<16x1xf32>
    %107 = arith.divf %105, %106 : vector<16x1xf32>
    %108 = vector.broadcast %107 : vector<16x1xf32> to vector<16x32xf32>
    %109 = arith.subf %101, %108 : vector<16x32xf32>
    %110 = arith.mulf %109, %109 : vector<16x32xf32>
    %cst_42 = arith.constant dense<0.000000e+00> : vector<16xf32>
    %111 = vector.multi_reduction <add>, %110, %cst_42 [1] : vector<16x32xf32> to vector<16xf32>
    %112 = vector.shape_cast %111 : vector<16xf32> to vector<16x1xf32>
    %cst_43 = arith.constant 3.200000e+01 : f32
    %113 = vector.broadcast %cst_43 : f32 to vector<16x1xf32>
    %114 = arith.divf %112, %113 : vector<16x1xf32>
    %115 = vector.broadcast %107 : vector<16x1xf32> to vector<16x32xf32>
    %116 = arith.subf %101, %115 : vector<16x32xf32>
    %cst_44 = arith.constant 9.99999974E-6 : f32
    %117 = vector.broadcast %cst_44 : f32 to vector<16x1xf32>
    %118 = arith.addf %114, %117 : vector<16x1xf32>
    %119 = math.rsqrt %118 : vector<16x1xf32>
    %120 = vector.broadcast %119 : vector<16x1xf32> to vector<16x32xf32>
    %121 = arith.mulf %116, %120 : vector<16x32xf32>
    %122 = vector.broadcast %102 : vector<1x32xf32> to vector<16x32xf32>
    %123 = arith.mulf %121, %122 : vector<16x32xf32>
    %124 = vector.broadcast %103 : vector<1x32xf32> to vector<16x32xf32>
    %125 = arith.addf %123, %124 : vector<16x32xf32>
    %c0_45 = arith.constant 0 : index
    %c0_46 = arith.constant 0 : index
    %c0_47 = arith.constant 0 : index
    %126 = vector.load %arg9[%c0_45, %c0_46, %c0_47] : memref<3x32x128xf32, #tpu.memory_space<vmem>>, vector<1x32x128xf32>
    %127 = vector.shape_cast %126 : vector<1x32x128xf32> to vector<32x128xf32>
    %cst_48 = arith.constant dense<0.000000e+00> : vector<16x128xf32>
    %128 = tpu.matmul %125, %127, %cst_48 {dimension_numbers = #tpu.dot_dimension_numbers<[1], [0], [0], [1], [0, 0, 1, 1], [], []>} : vector<16x32xf32>, vector<32x128xf32>, vector<16x128xf32> -> vector<16x128xf32>
    %c0_49 = arith.constant 0 : index
    %c0_50 = arith.constant 0 : index
    %c0_51 = arith.constant 0 : index
    %129 = vector.load %arg10[%c0_49, %c0_50, %c0_51] : memref<3x1x128xf32, #tpu.memory_space<vmem>>, vector<1x1x128xf32>
    %130 = vector.shape_cast %129 : vector<1x1x128xf32> to vector<1x128xf32>
    %131 = vector.broadcast %130 : vector<1x128xf32> to vector<16x128xf32>
    %132 = arith.addf %128, %131 : vector<16x128xf32>
    %133 = arith.mulf %132, %132 : vector<16x128xf32>
    %134 = arith.mulf %132, %133 : vector<16x128xf32>
    %cst_52 = arith.constant 4.471500e-02 : f32
    %135 = vector.broadcast %cst_52 : f32 to vector<16x128xf32>
    %136 = arith.mulf %135, %134 : vector<16x128xf32>
    %137 = arith.addf %132, %136 : vector<16x128xf32>
    %cst_53 = arith.constant 0.797884583 : f32
    %138 = vector.broadcast %cst_53 : f32 to vector<16x128xf32>
    %139 = arith.mulf %138, %137 : vector<16x128xf32>
    %140 = math.tanh %139 : vector<16x128xf32>
    %cst_54 = arith.constant 1.000000e+00 : f32
    %141 = vector.broadcast %cst_54 : f32 to vector<16x128xf32>
    %142 = arith.addf %141, %140 : vector<16x128xf32>
    %cst_55 = arith.constant 5.000000e-01 : f32
    %143 = vector.broadcast %cst_55 : f32 to vector<16x128xf32>
    %144 = arith.mulf %143, %142 : vector<16x128xf32>
    %145 = arith.mulf %132, %144 : vector<16x128xf32>
    %c0_56 = arith.constant 0 : index
    %c0_57 = arith.constant 0 : index
    %c0_58 = arith.constant 0 : index
    %146 = vector.load %arg11[%c0_56, %c0_57, %c0_58] : memref<3x128x32xf32, #tpu.memory_space<vmem>>, vector<1x128x32xf32>
    %147 = vector.shape_cast %146 : vector<1x128x32xf32> to vector<128x32xf32>
    %cst_59 = arith.constant dense<0.000000e+00> : vector<16x32xf32>
    %148 = tpu.matmul %145, %147, %cst_59 {dimension_numbers = #tpu.dot_dimension_numbers<[1], [0], [0], [1], [0, 0, 1, 1], [], []>} : vector<16x128xf32>, vector<128x32xf32>, vector<16x32xf32> -> vector<16x32xf32>
    %c0_60 = arith.constant 0 : index
    %c0_61 = arith.constant 0 : index
    %c0_62 = arith.constant 0 : index
    %149 = vector.load %arg12[%c0_60, %c0_61, %c0_62] : memref<3x1x32xf32, #tpu.memory_space<vmem>>, vector<1x1x32xf32>
    %150 = vector.shape_cast %149 : vector<1x1x32xf32> to vector<1x32xf32>
    %151 = vector.broadcast %150 : vector<1x32xf32> to vector<16x32xf32>
    %152 = arith.addf %148, %151 : vector<16x32xf32>
    %153 = arith.addf %101, %152 : vector<16x32xf32>
    %c1 = arith.constant 1 : index
    %c0_63 = arith.constant 0 : index
    %c0_64 = arith.constant 0 : index
    %154 = vector.load %arg4[%c1, %c0_63, %c0_64] : memref<3x6x32xf32, #tpu.memory_space<vmem>>, vector<1x6x32xf32>
    %155 = vector.shape_cast %154 : vector<1x6x32xf32> to vector<6x32xf32>
    %156 = vector.extract_strided_slice %155 {offsets = [0, 0], sizes = [1, 32], strides = [1, 1]} : vector<6x32xf32> to vector<1x32xf32>
    %157 = vector.extract_strided_slice %155 {offsets = [1, 0], sizes = [1, 32], strides = [1, 1]} : vector<6x32xf32> to vector<1x32xf32>
    %cst_65 = arith.constant dense<0.000000e+00> : vector<16xf32>
    %158 = vector.multi_reduction <add>, %153, %cst_65 [1] : vector<16x32xf32> to vector<16xf32>
    %159 = vector.shape_cast %158 : vector<16xf32> to vector<16x1xf32>
    %cst_66 = arith.constant 3.200000e+01 : f32
    %160 = vector.broadcast %cst_66 : f32 to vector<16x1xf32>
    %161 = arith.divf %159, %160 : vector<16x1xf32>
    %162 = vector.broadcast %161 : vector<16x1xf32> to vector<16x32xf32>
    %163 = arith.subf %153, %162 : vector<16x32xf32>
    %164 = arith.mulf %163, %163 : vector<16x32xf32>
    %cst_67 = arith.constant dense<0.000000e+00> : vector<16xf32>
    %165 = vector.multi_reduction <add>, %164, %cst_67 [1] : vector<16x32xf32> to vector<16xf32>
    %166 = vector.shape_cast %165 : vector<16xf32> to vector<16x1xf32>
    %cst_68 = arith.constant 3.200000e+01 : f32
    %167 = vector.broadcast %cst_68 : f32 to vector<16x1xf32>
    %168 = arith.divf %166, %167 : vector<16x1xf32>
    %169 = vector.broadcast %161 : vector<16x1xf32> to vector<16x32xf32>
    %170 = arith.subf %153, %169 : vector<16x32xf32>
    %cst_69 = arith.constant 9.99999974E-6 : f32
    %171 = vector.broadcast %cst_69 : f32 to vector<16x1xf32>
    %172 = arith.addf %168, %171 : vector<16x1xf32>
    %173 = math.rsqrt %172 : vector<16x1xf32>
    %174 = vector.broadcast %173 : vector<16x1xf32> to vector<16x32xf32>
    %175 = arith.mulf %170, %174 : vector<16x32xf32>
    %176 = vector.broadcast %156 : vector<1x32xf32> to vector<16x32xf32>
    %177 = arith.mulf %175, %176 : vector<16x32xf32>
    %178 = vector.broadcast %157 : vector<1x32xf32> to vector<16x32xf32>
    %179 = arith.addf %177, %178 : vector<16x32xf32>
    %180 = vector.extract_strided_slice %155 {offsets = [2, 0], sizes = [1, 32], strides = [1, 1]} : vector<6x32xf32> to vector<1x32xf32>
    %181 = vector.extract_strided_slice %155 {offsets = [3, 0], sizes = [1, 32], strides = [1, 1]} : vector<6x32xf32> to vector<1x32xf32>
    %cst_70 = arith.constant dense<0.000000e+00> : vector<16xf32>
    %182 = vector.multi_reduction <add>, %153, %cst_70 [1] : vector<16x32xf32> to vector<16xf32>
    %183 = vector.shape_cast %182 : vector<16xf32> to vector<16x1xf32>
    %cst_71 = arith.constant 3.200000e+01 : f32
    %184 = vector.broadcast %cst_71 : f32 to vector<16x1xf32>
    %185 = arith.divf %183, %184 : vector<16x1xf32>
    %186 = vector.broadcast %185 : vector<16x1xf32> to vector<16x32xf32>
    %187 = arith.subf %153, %186 : vector<16x32xf32>
    %188 = arith.mulf %187, %187 : vector<16x32xf32>
    %cst_72 = arith.constant dense<0.000000e+00> : vector<16xf32>
    %189 = vector.multi_reduction <add>, %188, %cst_72 [1] : vector<16x32xf32> to vector<16xf32>
    %190 = vector.shape_cast %189 : vector<16xf32> to vector<16x1xf32>
    %cst_73 = arith.constant 3.200000e+01 : f32
    %191 = vector.broadcast %cst_73 : f32 to vector<16x1xf32>
    %192 = arith.divf %190, %191 : vector<16x1xf32>
    %193 = vector.broadcast %185 : vector<16x1xf32> to vector<16x32xf32>
    %194 = arith.subf %153, %193 : vector<16x32xf32>
    %cst_74 = arith.constant 9.99999974E-6 : f32
    %195 = vector.broadcast %cst_74 : f32 to vector<16x1xf32>
    %196 = arith.addf %192, %195 : vector<16x1xf32>
    %197 = math.rsqrt %196 : vector<16x1xf32>
    %198 = vector.broadcast %197 : vector<16x1xf32> to vector<16x32xf32>
    %199 = arith.mulf %194, %198 : vector<16x32xf32>
    %200 = vector.broadcast %180 : vector<1x32xf32> to vector<16x32xf32>
    %201 = arith.mulf %199, %200 : vector<16x32xf32>
    %202 = vector.broadcast %181 : vector<1x32xf32> to vector<16x32xf32>
    %203 = arith.addf %201, %202 : vector<16x32xf32>
    %c1_75 = arith.constant 1 : index
    %c0_76 = arith.constant 0 : index
    %c0_77 = arith.constant 0 : index
    %204 = vector.load %arg5[%c1_75, %c0_76, %c0_77] : memref<3x32x96xf32, #tpu.memory_space<vmem>>, vector<1x32x96xf32>
    %205 = vector.shape_cast %204 : vector<1x32x96xf32> to vector<32x96xf32>
    %c1_78 = arith.constant 1 : index
    %c0_79 = arith.constant 0 : index
    %c0_80 = arith.constant 0 : index
    %206 = vector.load %arg6[%c1_78, %c0_79, %c0_80] : memref<3x1x96xf32, #tpu.memory_space<vmem>>, vector<1x1x96xf32>
    %207 = vector.shape_cast %206 : vector<1x1x96xf32> to vector<1x96xf32>
    %cst_81 = arith.constant dense<0.000000e+00> : vector<16x96xf32>
    %208 = tpu.matmul %179, %205, %cst_81 {dimension_numbers = #tpu.dot_dimension_numbers<[1], [0], [0], [1], [0, 0, 1, 1], [], []>} : vector<16x32xf32>, vector<32x96xf32>, vector<16x96xf32> -> vector<16x96xf32>
    %209 = vector.broadcast %207 : vector<1x96xf32> to vector<16x96xf32>
    %210 = arith.addf %208, %209 : vector<16x96xf32>
    %cst_82 = arith.constant dense<0.000000e+00> : vector<16x96xf32>
    %211 = tpu.matmul %203, %205, %cst_82 {dimension_numbers = #tpu.dot_dimension_numbers<[1], [0], [0], [1], [0, 0, 1, 1], [], []>} : vector<16x32xf32>, vector<32x96xf32>, vector<16x96xf32> -> vector<16x96xf32>
    %212 = vector.broadcast %207 : vector<1x96xf32> to vector<16x96xf32>
    %213 = arith.addf %211, %212 : vector<16x96xf32>
    %214 = vector.extract_strided_slice %210 {offsets = [0, 0], sizes = [16, 32], strides = [1, 1]} : vector<16x96xf32> to vector<16x32xf32>
    %215 = vector.shape_cast %214 : vector<16x32xf32> to vector<2x8x32xf32>
    %216 = vector.extract_strided_slice %213 {offsets = [0, 32], sizes = [16, 32], strides = [1, 1]} : vector<16x96xf32> to vector<16x32xf32>
    %217 = vector.shape_cast %216 : vector<16x32xf32> to vector<2x8x32xf32>
    %218 = vector.extract_strided_slice %213 {offsets = [0, 64], sizes = [16, 32], strides = [1, 1]} : vector<16x96xf32> to vector<16x32xf32>
    %219 = vector.shape_cast %218 : vector<16x32xf32> to vector<2x8x32xf32>
    "tpu.trace_start"() <{level = 10 : i32, message = "bqd,bkd->bqk"}> : () -> ()
    %cst_83 = arith.constant dense<0.000000e+00> : vector<2x8x8xf32>
    %220 = tpu.matmul %215, %217, %cst_83 {dimension_numbers = #tpu.dot_dimension_numbers<[2], [2], [1], [1], [0, 0, 0, 1, 1, 1], [0], [0]>} : vector<2x8x32xf32>, vector<2x8x32xf32>, vector<2x8x8xf32> -> vector<2x8x8xf32>
    "tpu.trace_stop"() : () -> ()
    %cst_84 = arith.constant 0.176776692 : f32
    %221 = vector.broadcast %cst_84 : f32 to vector<2x8x8xf32>
    %222 = arith.mulf %220, %221 : vector<2x8x8xf32>
    %cst_85 = arith.constant dense<0xFF800000> : vector<2x8xf32>
    %223 = vector.multi_reduction <maximumf>, %222, %cst_85 [2] : vector<2x8x8xf32> to vector<2x8xf32>
    %224 = vector.shape_cast %223 : vector<2x8xf32> to vector<2x8x1xf32>
    %225 = vector.broadcast %224 : vector<2x8x1xf32> to vector<2x8x8xf32>
    %226 = arith.subf %222, %225 : vector<2x8x8xf32>
    %227 = math.exp %226 : vector<2x8x8xf32>
    %cst_86 = arith.constant dense<0.000000e+00> : vector<2x8xf32>
    %228 = vector.multi_reduction <add>, %227, %cst_86 [2] : vector<2x8x8xf32> to vector<2x8xf32>
    %229 = vector.shape_cast %228 : vector<2x8xf32> to vector<2x8x1xf32>
    %230 = tpu.reciprocal %229 {approx = true} : vector<2x8x1xf32> -> vector<2x8x1xf32>
    %231 = vector.broadcast %230 : vector<2x8x1xf32> to vector<2x8x8xf32>
    %232 = arith.mulf %227, %231 : vector<2x8x8xf32>
    "tpu.trace_start"() <{level = 10 : i32, message = "bqk,bkd->bqd"}> : () -> ()
    %cst_87 = arith.constant dense<0.000000e+00> : vector<2x8x32xf32>
    %233 = tpu.matmul %232, %219, %cst_87 {dimension_numbers = #tpu.dot_dimension_numbers<[2], [1], [1], [2], [0, 0, 0, 1, 1, 2], [0], [0]>} : vector<2x8x8xf32>, vector<2x8x32xf32>, vector<2x8x32xf32> -> vector<2x8x32xf32>
    "tpu.trace_stop"() : () -> ()
    %234 = vector.shape_cast %233 : vector<2x8x32xf32> to vector<16x32xf32>
    %c1_88 = arith.constant 1 : index
    %c0_89 = arith.constant 0 : index
    %c0_90 = arith.constant 0 : index
    %235 = vector.load %arg7[%c1_88, %c0_89, %c0_90] : memref<3x32x32xf32, #tpu.memory_space<vmem>>, vector<1x32x32xf32>
    %236 = vector.shape_cast %235 : vector<1x32x32xf32> to vector<32x32xf32>
    %cst_91 = arith.constant dense<0.000000e+00> : vector<16x32xf32>
    %237 = tpu.matmul %234, %236, %cst_91 {dimension_numbers = #tpu.dot_dimension_numbers<[1], [0], [0], [1], [0, 0, 1, 1], [], []>} : vector<16x32xf32>, vector<32x32xf32>, vector<16x32xf32> -> vector<16x32xf32>
    %c1_92 = arith.constant 1 : index
    %c0_93 = arith.constant 0 : index
    %c0_94 = arith.constant 0 : index
    %238 = vector.load %arg8[%c1_92, %c0_93, %c0_94] : memref<3x1x32xf32, #tpu.memory_space<vmem>>, vector<1x1x32xf32>
    %239 = vector.shape_cast %238 : vector<1x1x32xf32> to vector<1x32xf32>
    %240 = vector.broadcast %239 : vector<1x32xf32> to vector<16x32xf32>
    %241 = arith.addf %237, %240 : vector<16x32xf32>
    %242 = arith.addf %153, %241 : vector<16x32xf32>
    %243 = vector.extract_strided_slice %155 {offsets = [4, 0], sizes = [1, 32], strides = [1, 1]} : vector<6x32xf32> to vector<1x32xf32>
    %244 = vector.extract_strided_slice %155 {offsets = [5, 0], sizes = [1, 32], strides = [1, 1]} : vector<6x32xf32> to vector<1x32xf32>
    %cst_95 = arith.constant dense<0.000000e+00> : vector<16xf32>
    %245 = vector.multi_reduction <add>, %242, %cst_95 [1] : vector<16x32xf32> to vector<16xf32>
    %246 = vector.shape_cast %245 : vector<16xf32> to vector<16x1xf32>
    %cst_96 = arith.constant 3.200000e+01 : f32
    %247 = vector.broadcast %cst_96 : f32 to vector<16x1xf32>
    %248 = arith.divf %246, %247 : vector<16x1xf32>
    %249 = vector.broadcast %248 : vector<16x1xf32> to vector<16x32xf32>
    %250 = arith.subf %242, %249 : vector<16x32xf32>
    %251 = arith.mulf %250, %250 : vector<16x32xf32>
    %cst_97 = arith.constant dense<0.000000e+00> : vector<16xf32>
    %252 = vector.multi_reduction <add>, %251, %cst_97 [1] : vector<16x32xf32> to vector<16xf32>
    %253 = vector.shape_cast %252 : vector<16xf32> to vector<16x1xf32>
    %cst_98 = arith.constant 3.200000e+01 : f32
    %254 = vector.broadcast %cst_98 : f32 to vector<16x1xf32>
    %255 = arith.divf %253, %254 : vector<16x1xf32>
    %256 = vector.broadcast %248 : vector<16x1xf32> to vector<16x32xf32>
    %257 = arith.subf %242, %256 : vector<16x32xf32>
    %cst_99 = arith.constant 9.99999974E-6 : f32
    %258 = vector.broadcast %cst_99 : f32 to vector<16x1xf32>
    %259 = arith.addf %255, %258 : vector<16x1xf32>
    %260 = math.rsqrt %259 : vector<16x1xf32>
    %261 = vector.broadcast %260 : vector<16x1xf32> to vector<16x32xf32>
    %262 = arith.mulf %257, %261 : vector<16x32xf32>
    %263 = vector.broadcast %243 : vector<1x32xf32> to vector<16x32xf32>
    %264 = arith.mulf %262, %263 : vector<16x32xf32>
    %265 = vector.broadcast %244 : vector<1x32xf32> to vector<16x32xf32>
    %266 = arith.addf %264, %265 : vector<16x32xf32>
    %c1_100 = arith.constant 1 : index
    %c0_101 = arith.constant 0 : index
    %c0_102 = arith.constant 0 : index
    %267 = vector.load %arg9[%c1_100, %c0_101, %c0_102] : memref<3x32x128xf32, #tpu.memory_space<vmem>>, vector<1x32x128xf32>
    %268 = vector.shape_cast %267 : vector<1x32x128xf32> to vector<32x128xf32>
    %cst_103 = arith.constant dense<0.000000e+00> : vector<16x128xf32>
    %269 = tpu.matmul %266, %268, %cst_103 {dimension_numbers = #tpu.dot_dimension_numbers<[1], [0], [0], [1], [0, 0, 1, 1], [], []>} : vector<16x32xf32>, vector<32x128xf32>, vector<16x128xf32> -> vector<16x128xf32>
    %c1_104 = arith.constant 1 : index
    %c0_105 = arith.constant 0 : index
    %c0_106 = arith.constant 0 : index
    %270 = vector.load %arg10[%c1_104, %c0_105, %c0_106] : memref<3x1x128xf32, #tpu.memory_space<vmem>>, vector<1x1x128xf32>
    %271 = vector.shape_cast %270 : vector<1x1x128xf32> to vector<1x128xf32>
    %272 = vector.broadcast %271 : vector<1x128xf32> to vector<16x128xf32>
    %273 = arith.addf %269, %272 : vector<16x128xf32>
    %274 = arith.mulf %273, %273 : vector<16x128xf32>
    %275 = arith.mulf %273, %274 : vector<16x128xf32>
    %cst_107 = arith.constant 4.471500e-02 : f32
    %276 = vector.broadcast %cst_107 : f32 to vector<16x128xf32>
    %277 = arith.mulf %276, %275 : vector<16x128xf32>
    %278 = arith.addf %273, %277 : vector<16x128xf32>
    %cst_108 = arith.constant 0.797884583 : f32
    %279 = vector.broadcast %cst_108 : f32 to vector<16x128xf32>
    %280 = arith.mulf %279, %278 : vector<16x128xf32>
    %281 = math.tanh %280 : vector<16x128xf32>
    %cst_109 = arith.constant 1.000000e+00 : f32
    %282 = vector.broadcast %cst_109 : f32 to vector<16x128xf32>
    %283 = arith.addf %282, %281 : vector<16x128xf32>
    %cst_110 = arith.constant 5.000000e-01 : f32
    %284 = vector.broadcast %cst_110 : f32 to vector<16x128xf32>
    %285 = arith.mulf %284, %283 : vector<16x128xf32>
    %286 = arith.mulf %273, %285 : vector<16x128xf32>
    %c1_111 = arith.constant 1 : index
    %c0_112 = arith.constant 0 : index
    %c0_113 = arith.constant 0 : index
    %287 = vector.load %arg11[%c1_111, %c0_112, %c0_113] : memref<3x128x32xf32, #tpu.memory_space<vmem>>, vector<1x128x32xf32>
    %288 = vector.shape_cast %287 : vector<1x128x32xf32> to vector<128x32xf32>
    %cst_114 = arith.constant dense<0.000000e+00> : vector<16x32xf32>
    %289 = tpu.matmul %286, %288, %cst_114 {dimension_numbers = #tpu.dot_dimension_numbers<[1], [0], [0], [1], [0, 0, 1, 1], [], []>} : vector<16x128xf32>, vector<128x32xf32>, vector<16x32xf32> -> vector<16x32xf32>
    %c1_115 = arith.constant 1 : index
    %c0_116 = arith.constant 0 : index
    %c0_117 = arith.constant 0 : index
    %290 = vector.load %arg12[%c1_115, %c0_116, %c0_117] : memref<3x1x32xf32, #tpu.memory_space<vmem>>, vector<1x1x32xf32>
    %291 = vector.shape_cast %290 : vector<1x1x32xf32> to vector<1x32xf32>
    %292 = vector.broadcast %291 : vector<1x32xf32> to vector<16x32xf32>
    %293 = arith.addf %289, %292 : vector<16x32xf32>
    %294 = arith.addf %242, %293 : vector<16x32xf32>
    %c2 = arith.constant 2 : index
    %c0_118 = arith.constant 0 : index
    %c0_119 = arith.constant 0 : index
    %295 = vector.load %arg4[%c2, %c0_118, %c0_119] : memref<3x6x32xf32, #tpu.memory_space<vmem>>, vector<1x6x32xf32>
    %296 = vector.shape_cast %295 : vector<1x6x32xf32> to vector<6x32xf32>
    %297 = vector.extract_strided_slice %296 {offsets = [0, 0], sizes = [1, 32], strides = [1, 1]} : vector<6x32xf32> to vector<1x32xf32>
    %298 = vector.extract_strided_slice %296 {offsets = [1, 0], sizes = [1, 32], strides = [1, 1]} : vector<6x32xf32> to vector<1x32xf32>
    %cst_120 = arith.constant dense<0.000000e+00> : vector<16xf32>
    %299 = vector.multi_reduction <add>, %294, %cst_120 [1] : vector<16x32xf32> to vector<16xf32>
    %300 = vector.shape_cast %299 : vector<16xf32> to vector<16x1xf32>
    %cst_121 = arith.constant 3.200000e+01 : f32
    %301 = vector.broadcast %cst_121 : f32 to vector<16x1xf32>
    %302 = arith.divf %300, %301 : vector<16x1xf32>
    %303 = vector.broadcast %302 : vector<16x1xf32> to vector<16x32xf32>
    %304 = arith.subf %294, %303 : vector<16x32xf32>
    %305 = arith.mulf %304, %304 : vector<16x32xf32>
    %cst_122 = arith.constant dense<0.000000e+00> : vector<16xf32>
    %306 = vector.multi_reduction <add>, %305, %cst_122 [1] : vector<16x32xf32> to vector<16xf32>
    %307 = vector.shape_cast %306 : vector<16xf32> to vector<16x1xf32>
    %cst_123 = arith.constant 3.200000e+01 : f32
    %308 = vector.broadcast %cst_123 : f32 to vector<16x1xf32>
    %309 = arith.divf %307, %308 : vector<16x1xf32>
    %310 = vector.broadcast %302 : vector<16x1xf32> to vector<16x32xf32>
    %311 = arith.subf %294, %310 : vector<16x32xf32>
    %cst_124 = arith.constant 9.99999974E-6 : f32
    %312 = vector.broadcast %cst_124 : f32 to vector<16x1xf32>
    %313 = arith.addf %309, %312 : vector<16x1xf32>
    %314 = math.rsqrt %313 : vector<16x1xf32>
    %315 = vector.broadcast %314 : vector<16x1xf32> to vector<16x32xf32>
    %316 = arith.mulf %311, %315 : vector<16x32xf32>
    %317 = vector.broadcast %297 : vector<1x32xf32> to vector<16x32xf32>
    %318 = arith.mulf %316, %317 : vector<16x32xf32>
    %319 = vector.broadcast %298 : vector<1x32xf32> to vector<16x32xf32>
    %320 = arith.addf %318, %319 : vector<16x32xf32>
    %321 = vector.extract_strided_slice %296 {offsets = [2, 0], sizes = [1, 32], strides = [1, 1]} : vector<6x32xf32> to vector<1x32xf32>
    %322 = vector.extract_strided_slice %296 {offsets = [3, 0], sizes = [1, 32], strides = [1, 1]} : vector<6x32xf32> to vector<1x32xf32>
    %cst_125 = arith.constant dense<0.000000e+00> : vector<16xf32>
    %323 = vector.multi_reduction <add>, %294, %cst_125 [1] : vector<16x32xf32> to vector<16xf32>
    %324 = vector.shape_cast %323 : vector<16xf32> to vector<16x1xf32>
    %cst_126 = arith.constant 3.200000e+01 : f32
    %325 = vector.broadcast %cst_126 : f32 to vector<16x1xf32>
    %326 = arith.divf %324, %325 : vector<16x1xf32>
    %327 = vector.broadcast %326 : vector<16x1xf32> to vector<16x32xf32>
    %328 = arith.subf %294, %327 : vector<16x32xf32>
    %329 = arith.mulf %328, %328 : vector<16x32xf32>
    %cst_127 = arith.constant dense<0.000000e+00> : vector<16xf32>
    %330 = vector.multi_reduction <add>, %329, %cst_127 [1] : vector<16x32xf32> to vector<16xf32>
    %331 = vector.shape_cast %330 : vector<16xf32> to vector<16x1xf32>
    %cst_128 = arith.constant 3.200000e+01 : f32
    %332 = vector.broadcast %cst_128 : f32 to vector<16x1xf32>
    %333 = arith.divf %331, %332 : vector<16x1xf32>
    %334 = vector.broadcast %326 : vector<16x1xf32> to vector<16x32xf32>
    %335 = arith.subf %294, %334 : vector<16x32xf32>
    %cst_129 = arith.constant 9.99999974E-6 : f32
    %336 = vector.broadcast %cst_129 : f32 to vector<16x1xf32>
    %337 = arith.addf %333, %336 : vector<16x1xf32>
    %338 = math.rsqrt %337 : vector<16x1xf32>
    %339 = vector.broadcast %338 : vector<16x1xf32> to vector<16x32xf32>
    %340 = arith.mulf %335, %339 : vector<16x32xf32>
    %341 = vector.broadcast %321 : vector<1x32xf32> to vector<16x32xf32>
    %342 = arith.mulf %340, %341 : vector<16x32xf32>
    %343 = vector.broadcast %322 : vector<1x32xf32> to vector<16x32xf32>
    %344 = arith.addf %342, %343 : vector<16x32xf32>
    %c2_130 = arith.constant 2 : index
    %c0_131 = arith.constant 0 : index
    %c0_132 = arith.constant 0 : index
    %345 = vector.load %arg5[%c2_130, %c0_131, %c0_132] : memref<3x32x96xf32, #tpu.memory_space<vmem>>, vector<1x32x96xf32>
    %346 = vector.shape_cast %345 : vector<1x32x96xf32> to vector<32x96xf32>
    %c2_133 = arith.constant 2 : index
    %c0_134 = arith.constant 0 : index
    %c0_135 = arith.constant 0 : index
    %347 = vector.load %arg6[%c2_133, %c0_134, %c0_135] : memref<3x1x96xf32, #tpu.memory_space<vmem>>, vector<1x1x96xf32>
    %348 = vector.shape_cast %347 : vector<1x1x96xf32> to vector<1x96xf32>
    %cst_136 = arith.constant dense<0.000000e+00> : vector<16x96xf32>
    %349 = tpu.matmul %320, %346, %cst_136 {dimension_numbers = #tpu.dot_dimension_numbers<[1], [0], [0], [1], [0, 0, 1, 1], [], []>} : vector<16x32xf32>, vector<32x96xf32>, vector<16x96xf32> -> vector<16x96xf32>
    %350 = vector.broadcast %348 : vector<1x96xf32> to vector<16x96xf32>
    %351 = arith.addf %349, %350 : vector<16x96xf32>
    %cst_137 = arith.constant dense<0.000000e+00> : vector<16x96xf32>
    %352 = tpu.matmul %344, %346, %cst_137 {dimension_numbers = #tpu.dot_dimension_numbers<[1], [0], [0], [1], [0, 0, 1, 1], [], []>} : vector<16x32xf32>, vector<32x96xf32>, vector<16x96xf32> -> vector<16x96xf32>
    %353 = vector.broadcast %348 : vector<1x96xf32> to vector<16x96xf32>
    %354 = arith.addf %352, %353 : vector<16x96xf32>
    %355 = vector.extract_strided_slice %351 {offsets = [0, 0], sizes = [16, 32], strides = [1, 1]} : vector<16x96xf32> to vector<16x32xf32>
    %356 = vector.shape_cast %355 : vector<16x32xf32> to vector<2x8x32xf32>
    %357 = vector.extract_strided_slice %354 {offsets = [0, 32], sizes = [16, 32], strides = [1, 1]} : vector<16x96xf32> to vector<16x32xf32>
    %358 = vector.shape_cast %357 : vector<16x32xf32> to vector<2x8x32xf32>
    %359 = vector.extract_strided_slice %354 {offsets = [0, 64], sizes = [16, 32], strides = [1, 1]} : vector<16x96xf32> to vector<16x32xf32>
    %360 = vector.shape_cast %359 : vector<16x32xf32> to vector<2x8x32xf32>
    "tpu.trace_start"() <{level = 10 : i32, message = "bqd,bkd->bqk"}> : () -> ()
    %cst_138 = arith.constant dense<0.000000e+00> : vector<2x8x8xf32>
    %361 = tpu.matmul %356, %358, %cst_138 {dimension_numbers = #tpu.dot_dimension_numbers<[2], [2], [1], [1], [0, 0, 0, 1, 1, 1], [0], [0]>} : vector<2x8x32xf32>, vector<2x8x32xf32>, vector<2x8x8xf32> -> vector<2x8x8xf32>
    "tpu.trace_stop"() : () -> ()
    %cst_139 = arith.constant 0.176776692 : f32
    %362 = vector.broadcast %cst_139 : f32 to vector<2x8x8xf32>
    %363 = arith.mulf %361, %362 : vector<2x8x8xf32>
    %cst_140 = arith.constant dense<0xFF800000> : vector<2x8xf32>
    %364 = vector.multi_reduction <maximumf>, %363, %cst_140 [2] : vector<2x8x8xf32> to vector<2x8xf32>
    %365 = vector.shape_cast %364 : vector<2x8xf32> to vector<2x8x1xf32>
    %366 = vector.broadcast %365 : vector<2x8x1xf32> to vector<2x8x8xf32>
    %367 = arith.subf %363, %366 : vector<2x8x8xf32>
    %368 = math.exp %367 : vector<2x8x8xf32>
    %cst_141 = arith.constant dense<0.000000e+00> : vector<2x8xf32>
    %369 = vector.multi_reduction <add>, %368, %cst_141 [2] : vector<2x8x8xf32> to vector<2x8xf32>
    %370 = vector.shape_cast %369 : vector<2x8xf32> to vector<2x8x1xf32>
    %371 = tpu.reciprocal %370 {approx = true} : vector<2x8x1xf32> -> vector<2x8x1xf32>
    %372 = vector.broadcast %371 : vector<2x8x1xf32> to vector<2x8x8xf32>
    %373 = arith.mulf %368, %372 : vector<2x8x8xf32>
    "tpu.trace_start"() <{level = 10 : i32, message = "bqk,bkd->bqd"}> : () -> ()
    %cst_142 = arith.constant dense<0.000000e+00> : vector<2x8x32xf32>
    %374 = tpu.matmul %373, %360, %cst_142 {dimension_numbers = #tpu.dot_dimension_numbers<[2], [1], [1], [2], [0, 0, 0, 1, 1, 2], [0], [0]>} : vector<2x8x8xf32>, vector<2x8x32xf32>, vector<2x8x32xf32> -> vector<2x8x32xf32>
    "tpu.trace_stop"() : () -> ()
    %375 = vector.shape_cast %374 : vector<2x8x32xf32> to vector<16x32xf32>
    %c2_143 = arith.constant 2 : index
    %c0_144 = arith.constant 0 : index
    %c0_145 = arith.constant 0 : index
    %376 = vector.load %arg7[%c2_143, %c0_144, %c0_145] : memref<3x32x32xf32, #tpu.memory_space<vmem>>, vector<1x32x32xf32>
    %377 = vector.shape_cast %376 : vector<1x32x32xf32> to vector<32x32xf32>
    %cst_146 = arith.constant dense<0.000000e+00> : vector<16x32xf32>
    %378 = tpu.matmul %375, %377, %cst_146 {dimension_numbers = #tpu.dot_dimension_numbers<[1], [0], [0], [1], [0, 0, 1, 1], [], []>} : vector<16x32xf32>, vector<32x32xf32>, vector<16x32xf32> -> vector<16x32xf32>
    %c2_147 = arith.constant 2 : index
    %c0_148 = arith.constant 0 : index
    %c0_149 = arith.constant 0 : index
    %379 = vector.load %arg8[%c2_147, %c0_148, %c0_149] : memref<3x1x32xf32, #tpu.memory_space<vmem>>, vector<1x1x32xf32>
    %380 = vector.shape_cast %379 : vector<1x1x32xf32> to vector<1x32xf32>
    %381 = vector.broadcast %380 : vector<1x32xf32> to vector<16x32xf32>
    %382 = arith.addf %378, %381 : vector<16x32xf32>
    %383 = arith.addf %294, %382 : vector<16x32xf32>
    %384 = vector.extract_strided_slice %296 {offsets = [4, 0], sizes = [1, 32], strides = [1, 1]} : vector<6x32xf32> to vector<1x32xf32>
    %385 = vector.extract_strided_slice %296 {offsets = [5, 0], sizes = [1, 32], strides = [1, 1]} : vector<6x32xf32> to vector<1x32xf32>
    %cst_150 = arith.constant dense<0.000000e+00> : vector<16xf32>
    %386 = vector.multi_reduction <add>, %383, %cst_150 [1] : vector<16x32xf32> to vector<16xf32>
    %387 = vector.shape_cast %386 : vector<16xf32> to vector<16x1xf32>
    %cst_151 = arith.constant 3.200000e+01 : f32
    %388 = vector.broadcast %cst_151 : f32 to vector<16x1xf32>
    %389 = arith.divf %387, %388 : vector<16x1xf32>
    %390 = vector.broadcast %389 : vector<16x1xf32> to vector<16x32xf32>
    %391 = arith.subf %383, %390 : vector<16x32xf32>
    %392 = arith.mulf %391, %391 : vector<16x32xf32>
    %cst_152 = arith.constant dense<0.000000e+00> : vector<16xf32>
    %393 = vector.multi_reduction <add>, %392, %cst_152 [1] : vector<16x32xf32> to vector<16xf32>
    %394 = vector.shape_cast %393 : vector<16xf32> to vector<16x1xf32>
    %cst_153 = arith.constant 3.200000e+01 : f32
    %395 = vector.broadcast %cst_153 : f32 to vector<16x1xf32>
    %396 = arith.divf %394, %395 : vector<16x1xf32>
    %397 = vector.broadcast %389 : vector<16x1xf32> to vector<16x32xf32>
    %398 = arith.subf %383, %397 : vector<16x32xf32>
    %cst_154 = arith.constant 9.99999974E-6 : f32
    %399 = vector.broadcast %cst_154 : f32 to vector<16x1xf32>
    %400 = arith.addf %396, %399 : vector<16x1xf32>
    %401 = math.rsqrt %400 : vector<16x1xf32>
    %402 = vector.broadcast %401 : vector<16x1xf32> to vector<16x32xf32>
    %403 = arith.mulf %398, %402 : vector<16x32xf32>
    %404 = vector.broadcast %384 : vector<1x32xf32> to vector<16x32xf32>
    %405 = arith.mulf %403, %404 : vector<16x32xf32>
    %406 = vector.broadcast %385 : vector<1x32xf32> to vector<16x32xf32>
    %407 = arith.addf %405, %406 : vector<16x32xf32>
    %c2_155 = arith.constant 2 : index
    %c0_156 = arith.constant 0 : index
    %c0_157 = arith.constant 0 : index
    %408 = vector.load %arg9[%c2_155, %c0_156, %c0_157] : memref<3x32x128xf32, #tpu.memory_space<vmem>>, vector<1x32x128xf32>
    %409 = vector.shape_cast %408 : vector<1x32x128xf32> to vector<32x128xf32>
    %cst_158 = arith.constant dense<0.000000e+00> : vector<16x128xf32>
    %410 = tpu.matmul %407, %409, %cst_158 {dimension_numbers = #tpu.dot_dimension_numbers<[1], [0], [0], [1], [0, 0, 1, 1], [], []>} : vector<16x32xf32>, vector<32x128xf32>, vector<16x128xf32> -> vector<16x128xf32>
    %c2_159 = arith.constant 2 : index
    %c0_160 = arith.constant 0 : index
    %c0_161 = arith.constant 0 : index
    %411 = vector.load %arg10[%c2_159, %c0_160, %c0_161] : memref<3x1x128xf32, #tpu.memory_space<vmem>>, vector<1x1x128xf32>
    %412 = vector.shape_cast %411 : vector<1x1x128xf32> to vector<1x128xf32>
    %413 = vector.broadcast %412 : vector<1x128xf32> to vector<16x128xf32>
    %414 = arith.addf %410, %413 : vector<16x128xf32>
    %415 = arith.mulf %414, %414 : vector<16x128xf32>
    %416 = arith.mulf %414, %415 : vector<16x128xf32>
    %cst_162 = arith.constant 4.471500e-02 : f32
    %417 = vector.broadcast %cst_162 : f32 to vector<16x128xf32>
    %418 = arith.mulf %417, %416 : vector<16x128xf32>
    %419 = arith.addf %414, %418 : vector<16x128xf32>
    %cst_163 = arith.constant 0.797884583 : f32
    %420 = vector.broadcast %cst_163 : f32 to vector<16x128xf32>
    %421 = arith.mulf %420, %419 : vector<16x128xf32>
    %422 = math.tanh %421 : vector<16x128xf32>
    %cst_164 = arith.constant 1.000000e+00 : f32
    %423 = vector.broadcast %cst_164 : f32 to vector<16x128xf32>
    %424 = arith.addf %423, %422 : vector<16x128xf32>
    %cst_165 = arith.constant 5.000000e-01 : f32
    %425 = vector.broadcast %cst_165 : f32 to vector<16x128xf32>
    %426 = arith.mulf %425, %424 : vector<16x128xf32>
    %427 = arith.mulf %414, %426 : vector<16x128xf32>
    %c2_166 = arith.constant 2 : index
    %c0_167 = arith.constant 0 : index
    %c0_168 = arith.constant 0 : index
    %428 = vector.load %arg11[%c2_166, %c0_167, %c0_168] : memref<3x128x32xf32, #tpu.memory_space<vmem>>, vector<1x128x32xf32>
    %429 = vector.shape_cast %428 : vector<1x128x32xf32> to vector<128x32xf32>
    %cst_169 = arith.constant dense<0.000000e+00> : vector<16x32xf32>
    %430 = tpu.matmul %427, %429, %cst_169 {dimension_numbers = #tpu.dot_dimension_numbers<[1], [0], [0], [1], [0, 0, 1, 1], [], []>} : vector<16x128xf32>, vector<128x32xf32>, vector<16x32xf32> -> vector<16x32xf32>
    %c2_170 = arith.constant 2 : index
    %c0_171 = arith.constant 0 : index
    %c0_172 = arith.constant 0 : index
    %431 = vector.load %arg12[%c2_170, %c0_171, %c0_172] : memref<3x1x32xf32, #tpu.memory_space<vmem>>, vector<1x1x32xf32>
    %432 = vector.shape_cast %431 : vector<1x1x32xf32> to vector<1x32xf32>
    %433 = vector.broadcast %432 : vector<1x32xf32> to vector<16x32xf32>
    %434 = arith.addf %430, %433 : vector<16x32xf32>
    %435 = arith.addf %383, %434 : vector<16x32xf32>
    %c0_173 = arith.constant 0 : index
    %c0_174 = arith.constant 0 : index
    %436 = vector.load %arg13[%c0_173, %c0_174] : memref<32x128xf32, #tpu.memory_space<vmem>>, vector<32x128xf32>
    %cst_175 = arith.constant dense<0.000000e+00> : vector<16x128xf32>
    %437 = tpu.matmul %435, %436, %cst_175 {dimension_numbers = #tpu.dot_dimension_numbers<[1], [0], [0], [1], [0, 0, 1, 1], [], []>} : vector<16x32xf32>, vector<32x128xf32>, vector<16x128xf32> -> vector<16x128xf32>
    %c0_176 = arith.constant 0 : index
    %c0_177 = arith.constant 0 : index
    %438 = vector.load %arg14[%c0_176, %c0_177] : memref<1x128xf32, #tpu.memory_space<vmem>>, vector<1x128xf32>
    %439 = vector.broadcast %438 : vector<1x128xf32> to vector<16x128xf32>
    %440 = arith.addf %437, %439 : vector<16x128xf32>
    %c0_178 = arith.constant 0 : index
    %c0_179 = arith.constant 0 : index
    %441 = vector.load %arg15[%c0_178, %c0_179] : memref<16x128xf32, #tpu.memory_space<vmem>>, vector<16x128xf32>
    tpu.vector_store %arg15[%c0_178, %c0_179], %440 {strides = array<i32>} : memref<16x128xf32, #tpu.memory_space<vmem>>, vector<16x128xf32>,
    return
  }
}

</mosaic_0001>

<llo_original>
// kernel: grokking_perceiver_forward.1
$region0: #{grokking_perceiver_forward.1}
  #allocation0 [shape = 'u32[]', space=smem, size = 0x4, offset = 0x4, fixed_abs, tag = 'smem constant byte address 0x4 - core index']
  #allocation1 [shape = 'u32[144,128]{1,0:T(1,128)}', space=vmem, size = 0x12000, scoped, tag = 'internal scratch']
  %s0 = inlined_call_operand.vmem [shape: s32[16,1], index: 0, kind: input, shape index: {}]
  %s1 = inlined_call_operand.vmem [shape: f32[8,32], index: 1, kind: input, shape index: {}]
  %s2 = inlined_call_operand.vmem [shape: f32[8,32], index: 2, kind: input, shape index: {}]
  %s3 = inlined_call_operand.vmem [shape: f32[8,32], index: 3, kind: input, shape index: {}]
  %s4 = inlined_call_operand.vmem [shape: f32[3,6,32], index: 4, kind: input, shape index: {}]
  %s5 = inlined_call_operand.vmem [shape: f32[3,32,96], index: 5, kind: input, shape index: {}]
  %s6 = inlined_call_operand.vmem [shape: f32[3,1,96], index: 6, kind: input, shape index: {}]
  %s7 = inlined_call_operand.vmem [shape: f32[3,32,32], index: 7, kind: input, shape index: {}]
  %s8 = inlined_call_operand.vmem [shape: f32[3,1,32], index: 8, kind: input, shape index: {}]
  %s9 = inlined_call_operand.vmem [shape: f32[3,32,128], index: 9, kind: input, shape index: {}]
  %s10 = inlined_call_operand.vmem [shape: f32[3,1,128], index: 10, kind: input, shape index: {}]
  %s11 = inlined_call_operand.vmem [shape: f32[3,128,32], index: 11, kind: input, shape index: {}]
  %s12 = inlined_call_operand.vmem [shape: f32[3,1,32], index: 12, kind: input, shape index: {}]
  %s13 = inlined_call_operand.vmem [shape: f32[32,128], index: 13, kind: input, shape index: {}]
  %s14 = inlined_call_operand.vmem [shape: f32[1,128], index: 14, kind: input, shape index: {}]
  %s15 = inlined_call_operand.vmem [shape: f32[16,128], index: 15, kind: output, shape index: {}]
  %s16 = sld [smem:[#allocation0]]
  $region70: #{grokking_perceiver_forward.1} parent=0
    _
  %s18 = ssub.s32 1, %s16
  %s19 = scalar_select 0, %s18, %s16
  // Predicated region
  $region2: #{grokking_perceiver_forward.1} parent=0 // pred_check
    _
  $region3: #{grokking_perceiver_forward.1} parent=0 // pred_check_branch
    %21 = sbr.rel (0) target = $region5
  $region4: #{grokking_perceiver_forward.1} parent=0 // pred_region
    _
  $region5: #{grokking_perceiver_forward.1} parent=0 // pred_fallthru
    _
  // Predicated region
  $region6: #{grokking_perceiver_forward.1} parent=0 // pred_check
    _
  $region7: #{grokking_perceiver_forward.1} parent=0 // pred_check_branch
    %23 = sbr.rel (0) target = $region9
  $region8: #{grokking_perceiver_forward.1} parent=0 // pred_region
    _
  $region9: #{grokking_perceiver_forward.1} parent=0 // pred_fallthru
    _
  // Predicated region
  $region10: #{grokking_perceiver_forward.1} parent=0 // pred_check
    _
  $region11: #{grokking_perceiver_forward.1} parent=0 // pred_check_branch
    %25 = sbr.rel (0) target = $region13
  $region12: #{grokking_perceiver_forward.1} parent=0 // pred_region
    _
  $region13: #{grokking_perceiver_forward.1} parent=0 // pred_fallthru
    _
  // Predicated region
  $region14: #{grokking_perceiver_forward.1} parent=0 // pred_check
    _
  $region15: #{grokking_perceiver_forward.1} parent=0 // pred_check_branch
    %27 = sbr.rel (0) target = $region17
  $region16: #{grokking_perceiver_forward.1} parent=0 // pred_region
    _
  $region17: #{grokking_perceiver_forward.1} parent=0 // pred_fallthru
    _
  // Predicated region
  $region18: #{grokking_perceiver_forward.1} parent=0 // pred_check
    _
  $region19: #{grokking_perceiver_forward.1} parent=0 // pred_check_branch
    %29 = sbr.rel (0) target = $region21
  $region20: #{grokking_perceiver_forward.1} parent=0 // pred_region
    _
  $region21: #{grokking_perceiver_forward.1} parent=0 // pred_fallthru
    _
  // Predicated region
  $region22: #{grokking_perceiver_forward.1} parent=0 // pred_check
    _
  $region23: #{grokking_perceiver_forward.1} parent=0 // pred_check_branch
    %31 = sbr.rel (0) target = $region25
  $region24: #{grokking_perceiver_forward.1} parent=0 // pred_region
    _
  $region25: #{grokking_perceiver_forward.1} parent=0 // pred_fallthru
    _
  // Predicated region
  $region26: #{grokking_perceiver_forward.1} parent=0 // pred_check
    _
  $region27: #{grokking_perceiver_forward.1} parent=0 // pred_check_branch
    %33 = sbr.rel (0) target = $region29
  $region28: #{grokking_perceiver_forward.1} parent=0 // pred_region
    _
  $region29: #{grokking_perceiver_forward.1} parent=0 // pred_fallthru
    _
  // Predicated region
  $region30: #{grokking_perceiver_forward.1} parent=0 // pred_check
    _
  $region31: #{grokking_perceiver_forward.1} parent=0 // pred_check_branch
    %35 = sbr.rel (0) target = $region33
  $region32: #{grokking_perceiver_forward.1} parent=0 // pred_region
    _
  $region33: #{grokking_perceiver_forward.1} parent=0 // pred_fallthru
    _
  // Predicated region
  $region34: #{grokking_perceiver_forward.1} parent=0 // pred_check
    _
  $region35: #{grokking_perceiver_forward.1} parent=0 // pred_check_branch
    %37 = sbr.rel (0) target = $region37
  $region36: #{grokking_perceiver_forward.1} parent=0 // pred_region
    _
  $region37: #{grokking_perceiver_forward.1} parent=0 // pred_fallthru
    _
  // Predicated region
  $region38: #{grokking_perceiver_forward.1} parent=0 // pred_check
    _
  $region39: #{grokking_perceiver_forward.1} parent=0 // pred_check_branch
    %39 = sbr.rel (0) target = $region41
  $region40: #{grokking_perceiver_forward.1} parent=0 // pred_region
    _
  $region41: #{grokking_perceiver_forward.1} parent=0 // pred_fallthru
    _
  // Predicated region
  $region42: #{grokking_perceiver_forward.1} parent=0 // pred_check
    _
  $region43: #{grokking_perceiver_forward.1} parent=0 // pred_check_branch
    %41 = sbr.rel (0) target = $region45
  $region44: #{grokking_perceiver_forward.1} parent=0 // pred_region
    _
  $region45: #{grokking_perceiver_forward.1} parent=0 // pred_fallthru
    _
  // Predicated region
  $region46: #{grokking_perceiver_forward.1} parent=0 // pred_check
    _
  $region47: #{grokking_perceiver_forward.1} parent=0 // pred_check_branch
    %43 = sbr.rel (0) target = $region49
  $region48: #{grokking_perceiver_forward.1} parent=0 // pred_region
    _
  $region49: #{grokking_perceiver_forward.1} parent=0 // pred_fallthru
    _
  // Predicated region
  $region50: #{grokking_perceiver_forward.1} parent=0 // pred_check
    _
  $region51: #{grokking_perceiver_forward.1} parent=0 // pred_check_branch
    %45 = sbr.rel (0) target = $region53
  $region52: #{grokking_perceiver_forward.1} parent=0 // pred_region
    _
  $region53: #{grokking_perceiver_forward.1} parent=0 // pred_fallthru
    _
  // Predicated region
  $region54: #{grokking_perceiver_forward.1} parent=0 // pred_check
    _
  $region55: #{grokking_perceiver_forward.1} parent=0 // pred_check_branch
    %47 = sbr.rel (0) target = $region57
  $region56: #{grokking_perceiver_forward.1} parent=0 // pred_region
    _
  $region57: #{grokking_perceiver_forward.1} parent=0 // pred_fallthru
    _
  // Predicated region
  $region58: #{grokking_perceiver_forward.1} parent=0 // pred_check
    _
  $region59: #{grokking_perceiver_forward.1} parent=0 // pred_check_branch
    %49 = sbr.rel (0) target = $region61
  $region60: #{grokking_perceiver_forward.1} parent=0 // pred_region
    _
  $region61: #{grokking_perceiver_forward.1} parent=0 // pred_fallthru
    _
  %v50 = vld [vmem:[%s0] sm:$0xff]
  %v51 = vld [vmem:[%s0 + $0x8] sm:$0xff]
  %v52 = vlaneseq
  %v53 = vand.u32 %v52, 127
  %54 = vset.pattern.permute.xlu0 0
  %55 = vperm.xlu0 %54, %v50
  %v56 = vpop.permute.xlu0 %55
  %57 = vset.pattern.permute.xlu0 0
  %58 = vperm.xlu0 %57, %v51
  %v59 = vpop.permute.xlu0 %58
  %vm60 = vcmp.eq.s32.totalorder %v56, %v53
  %vm61 = vcmp.eq.s32.totalorder %v59, %v53
  %v62 = vsel %vm60, 1, 0
  %v63 = vsel %vm61, 1, 0
  %v64 = vcvt.s32.f32 %v62
  %v65 = vcvt.s32.f32 %v63
  %v66 = vld [vmem:[%s1] sm:$0xff]
  %v67 = vld [vmem:[%s2] sm:$0xff]
  %vm68 = vcmask 64512
  %v70 = vsel %vm68, %v64, 0
  %v73 = vsel %vm68, %v65, 0
  %75 = vmatprep.subr.mxu0 0.0
  %76 = vmatpush1.msra.mxu0 0.0
  %77 = vmatprep.subr.mxu0 0.0
  %78 = vmatpush1.msra.mxu0 0.0
  %79 = vmatprep.subr.mxu0 0.0
  %80 = vmatpush1.msra.mxu0 0.0
  %81 = vmatprep.subr.mxu0 0.0
  %82 = vmatpush1.msra.mxu0 0.0
  %83 = vmatprep.subr.mxu0 0.0
  %84 = vmatpush1.msra.mxu0 0.0
  %85 = vmatprep.subr.mxu0 0.0
  %86 = vmatpush1.msra.mxu0 0.0
  %87 = vmatprep.subr.mxu0 0.0
  %88 = vmatpush1.msra.mxu0 0.0
  %89 = vmatprep.subr.mxu0 0.0
  %90 = vmatpush1.msra.mxu0 0.0
  %91 = vmatprep.subr.mxu0 0.0
  %92 = vmatpush1.msra.mxu0 0.0
  %93 = vmatprep.subr.mxu0 0.0
  %94 = vmatpush1.msra.mxu0 0.0
  %95 = vmatprep.subr.mxu0 0.0
  %96 = vmatpush1.msra.mxu0 0.0
  %97 = vmatprep.subr.mxu0 0.0
  %98 = vmatpush1.msra.mxu0 0.0
  %99 = vmatprep.subr.mxu0 0.0
  %100 = vmatpush1.msra.mxu0 0.0
  %101 = vmatprep.subr.mxu0 0.0
  %102 = vmatpush1.msra.mxu0 0.0
  %103 = vmatprep.subr.mxu0 0.0
  %104 = vmatpush1.msra.mxu0 0.0
  %105 = vmatprep.subr.mxu0 0.0
  %106 = vmatpush1.msra.mxu0 %v66
  %107 = vmatprep.subr.mxu0 0.0
  %108 = vmatpush2.msra.mxu0 0.0
  %109 = vmatprep.subr.mxu0 0.0
  %110 = vmatpush2.msra.mxu0 0.0
  %111 = vmatprep.subr.mxu0 0.0
  %112 = vmatpush2.msra.mxu0 0.0
  %113 = vmatprep.subr.mxu0 0.0
  %114 = vmatpush2.msra.mxu0 0.0
  %115 = vmatprep.subr.mxu0 0.0
  %116 = vmatpush2.msra.mxu0 0.0
  %117 = vmatprep.subr.mxu0 0.0
  %118 = vmatpush2.msra.mxu0 0.0
  %119 = vmatprep.subr.mxu0 0.0
  %120 = vmatpush2.msra.mxu0 0.0
  %121 = vmatprep.subr.mxu0 0.0
  %122 = vmatpush2.msra.mxu0 0.0
  %123 = vmatprep.subr.mxu0 0.0
  %124 = vmatpush2.msra.mxu0 0.0
  %125 = vmatprep.subr.mxu0 0.0
  %126 = vmatpush2.msra.mxu0 0.0
  %127 = vmatprep.subr.mxu0 0.0
  %128 = vmatpush2.msra.mxu0 0.0
  %129 = vmatprep.subr.mxu0 0.0
  %130 = vmatpush2.msra.mxu0 0.0
  %131 = vmatprep.subr.mxu0 0.0
  %132 = vmatpush2.msra.mxu0 0.0
  %133 = vmatprep.subr.mxu0 0.0
  %134 = vmatpush2.msra.mxu0 0.0
  %135 = vmatprep.subr.mxu0 0.0
  %136 = vmatpush2.msra.mxu0 0.0
  %137 = vmatprep.subr.mxu0 0.0
  %138 = vmatpush2.msra.mxu0 0.0
  %139 = vmatprep.mubr.f32.mxu0 0.0
  %140 = vmatmul.mubr.f32.gmra.mxu0 %v70
  %v141 = vpop.f32.mrf.mxu0
  %v142 = vadd.f32 %v67, %v141
  %v143 = vpop.f32.mrf.mxu0
  %144 = vmatprep.mubr.f32.mxu0 0.0
  %145 = vmatmul.mubr.f32.gmra.mxu0 %v73
  %v146 = vpop.f32.mrf.mxu0
  %v147 = vadd.f32 %v67, %v146
  %v148 = vpop.f32.mrf.mxu0
  %149 = vdwg.mxu0
  %v150 = vld [vmem:[%s3] sm:$0xff]
  %v151 = vld [vmem:[%s4] sm:$0x3f]
  %vm152 = vcmask 261120
  %v153 = vsel %vm152, %v150, 0.0
  %154 = vadd.xlane.f32.xlu0 %v153
  %v155 = vpop.xlane.xlu0 %154
  %v156 = vrcp.pop 32.0
  %v157 = vmul.f32 %v155, %v156
  %v158 = vsub.f32 %v150, %v157
  %v159 = vmul.f32 %v158, %v158
  %v160 = vsel %vm152, %v159, 0.0
  %161 = vadd.xlane.f32.xlu0 %v160
  %v162 = vpop.xlane.xlu0 %161
  %v163 = vmul.f32 %v162, %v156
  %v164 = vadd.f32 %v163, 1e-05
  %v165 = vrsqrt.pop %v164
  %v166 = vmul.f32 %v158, %v165
  %v167 = vlaneseq
  %v168 = vshrl.u32 %v167, 7
  %v169 = vsub.s32 0, %v168
  %v170 = vrot.slane %v151, %v169
  %v171 = vmul.f32 %v166, %v170
  %v172 = vlaneseq
  %v173 = vshrl.u32 %v172, 7
  %v174 = vsub.s32 1, %v173
  %v175 = vrot.slane %v151, %v174
  %v176 = vadd.f32 %v171, %v175
  %v177 = vsel %vm152, %v142, 0.0
  %178 = vadd.xlane.f32.xlu0 %v177
  %v179 = vpop.xlane.xlu0 %178
  %v180 = vsel %vm152, %v147, 0.0
  %181 = vadd.xlane.f32.xlu0 %v180
  %v182 = vpop.xlane.xlu0 %181
  %v183 = vmul.f32 %v179, %v156
  %v184 = vmul.f32 %v182, %v156
  %v185 = vsub.f32 %v142, %v183
  %v186 = vsub.f32 %v147, %v184
  %v187 = vmul.f32 %v185, %v185
  %v188 = vmul.f32 %v186, %v186
  %v189 = vsel %vm152, %v187, 0.0
  %190 = vadd.xlane.f32.xlu0 %v189
  %v191 = vpop.xlane.xlu0 %190
  %v192 = vsel %vm152, %v188, 0.0
  %193 = vadd.xlane.f32.xlu0 %v192
  %v194 = vpop.xlane.xlu0 %193
  %v195 = vmul.f32 %v191, %v156
  %v196 = vmul.f32 %v194, %v156
  %v197 = vadd.f32 %v195, 1e-05
  %v198 = vadd.f32 %v196, 1e-05
  %v199 = vrsqrt.pop %v197
  %v200 = vrsqrt.pop %v198
  %v201 = vmul.f32 %v185, %v199
  %v202 = vmul.f32 %v186, %v200
  %v203 = vlaneseq
  %v204 = vshrl.u32 %v203, 7
  %v205 = vsub.s32 2, %v204
  %v206 = vrot.slane %v151, %v205
  %v207 = vmul.f32 %v201, %v206
  %v208 = vmul.f32 %v202, %v206
  %v209 = vlaneseq
  %v210 = vshrl.u32 %v209, 7
  %v211 = vsub.s32 3, %v210
  %v212 = vrot.slane %v151, %v211
  %v213 = vadd.f32 %v207, %v212
  %v214 = vadd.f32 %v208, %v212
  %v215 = vld [vmem:[%s5] sm:$0xff]
  %v216 = vld [vmem:[%s5 + $0x8] sm:$0xff]
  %v217 = vld [vmem:[%s5 + $0x10] sm:$0xff]
  %v218 = vld [vmem:[%s5 + $0x18] sm:$0xff]
  %v219 = vld [vmem:[%s6] sm:$0x1]
  %v221 = vlaneseq
  %v222 = vshrl.u32 %v221, 7
  %v223 = vsub.s32 0, %v222
  %v224 = vrot.slane %v219, %v223
  %v227 = vsel %vm152, %v176, 0
  %229 = vmatprep.subr.mxu0 0.0
  %230 = vmatpush1.msra.mxu0 0.0
  %231 = vmatprep.subr.mxu0 0.0
  %232 = vmatpush1.msra.mxu0 0.0
  %233 = vmatprep.subr.mxu0 0.0
  %234 = vmatpush1.msra.mxu0 0.0
  %235 = vmatprep.subr.mxu0 0.0
  %236 = vmatpush1.msra.mxu0 0.0
  %237 = vmatprep.subr.mxu0 0.0
  %238 = vmatpush1.msra.mxu0 0.0
  %239 = vmatprep.subr.mxu0 0.0
  %240 = vmatpush1.msra.mxu0 0.0
  %241 = vmatprep.subr.mxu0 0.0
  %242 = vmatpush1.msra.mxu0 0.0
  %243 = vmatprep.subr.mxu0 0.0
  %244 = vmatpush1.msra.mxu0 0.0
  %245 = vmatprep.subr.mxu0 0.0
  %246 = vmatpush1.msra.mxu0 0.0
  %247 = vmatprep.subr.mxu0 0.0
  %248 = vmatpush1.msra.mxu0 0.0
  %249 = vmatprep.subr.mxu0 0.0
  %250 = vmatpush1.msra.mxu0 0.0
  %251 = vmatprep.subr.mxu0 0.0
  %252 = vmatpush1.msra.mxu0 0.0
  %253 = vmatprep.subr.mxu0 0.0
  %254 = vmatpush1.msra.mxu0 %v218
  %255 = vmatprep.subr.mxu0 0.0
  %256 = vmatpush1.msra.mxu0 %v217
  %257 = vmatprep.subr.mxu0 0.0
  %258 = vmatpush1.msra.mxu0 %v216
  %259 = vmatprep.subr.mxu0 0.0
  %260 = vmatpush1.msra.mxu0 %v215
  %261 = vmatprep.subr.mxu0 0.0
  %262 = vmatpush2.msra.mxu0 0.0
  %263 = vmatprep.subr.mxu0 0.0
  %264 = vmatpush2.msra.mxu0 0.0
  %265 = vmatprep.subr.mxu0 0.0
  %266 = vmatpush2.msra.mxu0 0.0
  %267 = vmatprep.subr.mxu0 0.0
  %268 = vmatpush2.msra.mxu0 0.0
  %269 = vmatprep.subr.mxu0 0.0
  %270 = vmatpush2.msra.mxu0 0.0
  %271 = vmatprep.subr.mxu0 0.0
  %272 = vmatpush2.msra.mxu0 0.0
  %273 = vmatprep.subr.mxu0 0.0
  %274 = vmatpush2.msra.mxu0 0.0
  %275 = vmatprep.subr.mxu0 0.0
  %276 = vmatpush2.msra.mxu0 0.0
  %277 = vmatprep.subr.mxu0 0.0
  %278 = vmatpush2.msra.mxu0 0.0
  %279 = vmatprep.subr.mxu0 0.0
  %280 = vmatpush2.msra.mxu0 0.0
  %281 = vmatprep.subr.mxu0 0.0
  %282 = vmatpush2.msra.mxu0 0.0
  %283 = vmatprep.subr.mxu0 0.0
  %284 = vmatpush2.msra.mxu0 0.0
  %285 = vmatprep.subr.mxu0 0.0
  %286 = vmatpush2.msra.mxu0 0.0
  %287 = vmatprep.subr.mxu0 0.0
  %288 = vmatpush2.msra.mxu0 0.0
  %289 = vmatprep.subr.mxu0 0.0
  %290 = vmatpush2.msra.mxu0 0.0
  %291 = vmatprep.subr.mxu0 0.0
  %292 = vmatpush2.msra.mxu0 0.0
  %293 = vmatprep.mubr.f32.mxu0 0.0
  %294 = vmatmul.mubr.f32.gmra.mxu0 %v227
  %v295 = vpop.f32.mrf.mxu0
  %v296 = vadd.f32 %v224, %v295
  %v297 = vpop.f32.mrf.mxu0
  %298 = vmatprep.mubr.f32.mxu0 0.0
  %299 = vmatmul.mubr.f32.gmra.mxu0 %v227
  %v300 = vpop.f32.mrf.mxu0
  %v301 = vadd.f32 %v224, %v300
  %v302 = vpop.f32.mrf.mxu0
  %303 = vdwg.mxu0
  %v305 = vsel %vm152, %v213, 0
  %v308 = vsel %vm152, %v214, 0
  %310 = vmatprep.subr.mxu0 0.0
  %311 = vmatpush1.msra.mxu0 0.0
  %312 = vmatprep.subr.mxu0 0.0
  %313 = vmatpush1.msra.mxu0 0.0
  %314 = vmatprep.subr.mxu0 0.0
  %315 = vmatpush1.msra.mxu0 0.0
  %316 = vmatprep.subr.mxu0 0.0
  %317 = vmatpush1.msra.mxu0 0.0
  %318 = vmatprep.subr.mxu0 0.0
  %319 = vmatpush1.msra.mxu0 0.0
  %320 = vmatprep.subr.mxu0 0.0
  %321 = vmatpush1.msra.mxu0 0.0
  %322 = vmatprep.subr.mxu0 0.0
  %323 = vmatpush1.msra.mxu0 0.0
  %324 = vmatprep.subr.mxu0 0.0
  %325 = vmatpush1.msra.mxu0 0.0
  %326 = vmatprep.subr.mxu0 0.0
  %327 = vmatpush1.msra.mxu0 0.0
  %328 = vmatprep.subr.mxu0 0.0
  %329 = vmatpush1.msra.mxu0 0.0
  %330 = vmatprep.subr.mxu0 0.0
  %331 = vmatpush1.msra.mxu0 0.0
  %332 = vmatprep.subr.mxu0 0.0
  %333 = vmatpush1.msra.mxu0 0.0
  %334 = vmatprep.subr.mxu0 0.0
  %335 = vmatpush1.msra.mxu0 %v218
  %336 = vmatprep.subr.mxu0 0.0
  %337 = vmatpush1.msra.mxu0 %v217
  %338 = vmatprep.subr.mxu0 0.0
  %339 = vmatpush1.msra.mxu0 %v216
  %340 = vmatprep.subr.mxu0 0.0
  %341 = vmatpush1.msra.mxu0 %v215
  %342 = vmatprep.subr.mxu0 0.0
  %343 = vmatpush2.msra.mxu0 0.0
  %344 = vmatprep.subr.mxu0 0.0
  %345 = vmatpush2.msra.mxu0 0.0
  %346 = vmatprep.subr.mxu0 0.0
  %347 = vmatpush2.msra.mxu0 0.0
  %348 = vmatprep.subr.mxu0 0.0
  %349 = vmatpush2.msra.mxu0 0.0
  %350 = vmatprep.subr.mxu0 0.0
  %351 = vmatpush2.msra.mxu0 0.0
  %352 = vmatprep.subr.mxu0 0.0
  %353 = vmatpush2.msra.mxu0 0.0
  %354 = vmatprep.subr.mxu0 0.0
  %355 = vmatpush2.msra.mxu0 0.0
  %356 = vmatprep.subr.mxu0 0.0
  %357 = vmatpush2.msra.mxu0 0.0
  %358 = vmatprep.subr.mxu0 0.0
  %359 = vmatpush2.msra.mxu0 0.0
  %360 = vmatprep.subr.mxu0 0.0
  %361 = vmatpush2.msra.mxu0 0.0
  %362 = vmatprep.subr.mxu0 0.0
  %363 = vmatpush2.msra.mxu0 0.0
  %364 = vmatprep.subr.mxu0 0.0
  %365 = vmatpush2.msra.mxu0 0.0
  %366 = vmatprep.subr.mxu0 0.0
  %367 = vmatpush2.msra.mxu0 0.0
  %368 = vmatprep.subr.mxu0 0.0
  %369 = vmatpush2.msra.mxu0 0.0
  %370 = vmatprep.subr.mxu0 0.0
  %371 = vmatpush2.msra.mxu0 0.0
  %372 = vmatprep.subr.mxu0 0.0
  %373 = vmatpush2.msra.mxu0 0.0
  %374 = vmatprep.mubr.f32.mxu0 0.0
  %375 = vmatmul.mubr.f32.gmra.mxu0 %v305
  %v376 = vpop.f32.mrf.mxu0
  %v377 = vadd.f32 %v224, %v376
  %v378 = vpop.f32.mrf.mxu0
  %379 = vmatprep.mubr.f32.mxu0 0.0
  %380 = vmatmul.mubr.f32.gmra.mxu0 %v308
  %v381 = vpop.f32.mrf.mxu0
  %v382 = vadd.f32 %v224, %v381
  %v383 = vpop.f32.mrf.mxu0
  %384 = vdwg.mxu0
  %386 = vrot.lane.b32.xlu0 %v377, 96
  %v387 = vpop.permute.xlu0 %386
  %v389 = vsel %vm152, %v296, 0
  %v391 = vsel %vm152, %v387, 0
  %393 = vmatprep.subr.mxu0 0.0
  %394 = vmatpush1.xpose.msra.mxu0 0.0
  %395 = vmatprep.subr.mxu0 0.0
  %396 = vmatpush1.xpose.msra.mxu0 0.0
  %397 = vmatprep.subr.mxu0 0.0
  %398 = vmatpush1.xpose.msra.mxu0 0.0
  %399 = vmatprep.subr.mxu0 0.0
  %400 = vmatpush1.xpose.msra.mxu0 0.0
  %401 = vmatprep.subr.mxu0 0.0
  %402 = vmatpush1.xpose.msra.mxu0 0.0
  %403 = vmatprep.subr.mxu0 0.0
  %404 = vmatpush1.xpose.msra.mxu0 0.0
  %405 = vmatprep.subr.mxu0 0.0
  %406 = vmatpush1.xpose.msra.mxu0 0.0
  %407 = vmatprep.subr.mxu0 0.0
  %408 = vmatpush1.xpose.msra.mxu0 0.0
  %409 = vmatprep.subr.mxu0 0.0
  %410 = vmatpush1.xpose.msra.mxu0 0.0
  %411 = vmatprep.subr.mxu0 0.0
  %412 = vmatpush1.xpose.msra.mxu0 0.0
  %413 = vmatprep.subr.mxu0 0.0
  %414 = vmatpush1.xpose.msra.mxu0 0.0
  %415 = vmatprep.subr.mxu0 0.0
  %416 = vmatpush1.xpose.msra.mxu0 0.0
  %417 = vmatprep.subr.mxu0 0.0
  %418 = vmatpush1.xpose.msra.mxu0 0.0
  %419 = vmatprep.subr.mxu0 0.0
  %420 = vmatpush1.xpose.msra.mxu0 0.0
  %421 = vmatprep.subr.mxu0 0.0
  %422 = vmatpush1.xpose.msra.mxu0 0.0
  %423 = vmatprep.subr.mxu0 0.0
  %424 = vmatpush1.xpose.msra.mxu0 %v391
  %425 = vmatprep.subr.mxu0 0.0
  %426 = vmatpush2.xpose.msra.mxu0 0.0
  %427 = vmatprep.subr.mxu0 0.0
  %428 = vmatpush2.xpose.msra.mxu0 0.0
  %429 = vmatprep.subr.mxu0 0.0
  %430 = vmatpush2.xpose.msra.mxu0 0.0
  %431 = vmatprep.subr.mxu0 0.0
  %432 = vmatpush2.xpose.msra.mxu0 0.0
  %433 = vmatprep.subr.mxu0 0.0
  %434 = vmatpush2.xpose.msra.mxu0 0.0
  %435 = vmatprep.subr.mxu0 0.0
  %436 = vmatpush2.xpose.msra.mxu0 0.0
  %437 = vmatprep.subr.mxu0 0.0
  %438 = vmatpush2.xpose.msra.mxu0 0.0
  %439 = vmatprep.subr.mxu0 0.0
  %440 = vmatpush2.xpose.msra.mxu0 0.0
  %441 = vmatprep.subr.mxu0 0.0
  %442 = vmatpush2.xpose.msra.mxu0 0.0
  %443 = vmatprep.subr.mxu0 0.0
  %444 = vmatpush2.xpose.msra.mxu0 0.0
  %445 = vmatprep.subr.mxu0 0.0
  %446 = vmatpush2.xpose.msra.mxu0 0.0
  %447 = vmatprep.subr.mxu0 0.0
  %448 = vmatpush2.xpose.msra.mxu0 0.0
  %449 = vmatprep.subr.mxu0 0.0
  %450 = vmatpush2.xpose.msra.mxu0 0.0
  %451 = vmatprep.subr.mxu0 0.0
  %452 = vmatpush2.xpose.msra.mxu0 0.0
  %453 = vmatprep.subr.mxu0 0.0
  %454 = vmatpush2.xpose.msra.mxu0 0.0
  %455 = vmatprep.subr.mxu0 0.0
  %456 = vmatpush2.xpose.msra.mxu0 0.0
  %457 = vmatprep.mubr.f32.mxu0 0.0
  %458 = vmatmul.mubr.f32.gmra.mxu0 %v389
  %v459 = vpop.f32.mrf.mxu0
  %v460 = vadd.f32 0.0, %v459
  %v461 = vpop.f32.mrf.mxu0
  %462 = vdwg.mxu0
  %464 = vrot.lane.b32.xlu0 %v382, 96
  %v465 = vpop.permute.xlu0 %464
  %v467 = vsel %vm152, %v301, 0
  %v469 = vsel %vm152, %v465, 0
  %471 = vmatprep.subr.mxu0 0.0
  %472 = vmatpush1.xpose.msra.mxu0 0.0
  %473 = vmatprep.subr.mxu0 0.0
  %474 = vmatpush1.xpose.msra.mxu0 0.0
  %475 = vmatprep.subr.mxu0 0.0
  %476 = vmatpush1.xpose.msra.mxu0 0.0
  %477 = vmatprep.subr.mxu0 0.0
  %478 = vmatpush1.xpose.msra.mxu0 0.0
  %479 = vmatprep.subr.mxu0 0.0
  %480 = vmatpush1.xpose.msra.mxu0 0.0
  %481 = vmatprep.subr.mxu0 0.0
  %482 = vmatpush1.xpose.msra.mxu0 0.0
  %483 = vmatprep.subr.mxu0 0.0
  %484 = vmatpush1.xpose.msra.mxu0 0.0
  %485 = vmatprep.subr.mxu0 0.0
  %486 = vmatpush1.xpose.msra.mxu0 0.0
  %487 = vmatprep.subr.mxu0 0.0
  %488 = vmatpush1.xpose.msra.mxu0 0.0
  %489 = vmatprep.subr.mxu0 0.0
  %490 = vmatpush1.xpose.msra.mxu0 0.0
  %491 = vmatprep.subr.mxu0 0.0
  %492 = vmatpush1.xpose.msra.mxu0 0.0
  %493 = vmatprep.subr.mxu0 0.0
  %494 = vmatpush1.xpose.msra.mxu0 0.0
  %495 = vmatprep.subr.mxu0 0.0
  %496 = vmatpush1.xpose.msra.mxu0 0.0
  %497 = vmatprep.subr.mxu0 0.0
  %498 = vmatpush1.xpose.msra.mxu0 0.0
  %499 = vmatprep.subr.mxu0 0.0
  %500 = vmatpush1.xpose.msra.mxu0 0.0
  %501 = vmatprep.subr.mxu0 0.0
  %502 = vmatpush1.xpose.msra.mxu0 %v469
  %503 = vmatprep.subr.mxu0 0.0
  %504 = vmatpush2.xpose.msra.mxu0 0.0
  %505 = vmatprep.subr.mxu0 0.0
  %506 = vmatpush2.xpose.msra.mxu0 0.0
  %507 = vmatprep.subr.mxu0 0.0
  %508 = vmatpush2.xpose.msra.mxu0 0.0
  %509 = vmatprep.subr.mxu0 0.0
  %510 = vmatpush2.xpose.msra.mxu0 0.0
  %511 = vmatprep.subr.mxu0 0.0
  %512 = vmatpush2.xpose.msra.mxu0 0.0
  %513 = vmatprep.subr.mxu0 0.0
  %514 = vmatpush2.xpose.msra.mxu0 0.0
  %515 = vmatprep.subr.mxu0 0.0
  %516 = vmatpush2.xpose.msra.mxu0 0.0
  %517 = vmatprep.subr.mxu0 0.0
  %518 = vmatpush2.xpose.msra.mxu0 0.0
  %519 = vmatprep.subr.mxu0 0.0
  %520 = vmatpush2.xpose.msra.mxu0 0.0
  %521 = vmatprep.subr.mxu0 0.0
  %522 = vmatpush2.xpose.msra.mxu0 0.0
  %523 = vmatprep.subr.mxu0 0.0
  %524 = vmatpush2.xpose.msra.mxu0 0.0
  %525 = vmatprep.subr.mxu0 0.0
  %526 = vmatpush2.xpose.msra.mxu0 0.0
  %527 = vmatprep.subr.mxu0 0.0
  %528 = vmatpush2.xpose.msra.mxu0 0.0
  %529 = vmatprep.subr.mxu0 0.0
  %530 = vmatpush2.xpose.msra.mxu0 0.0
  %531 = vmatprep.subr.mxu0 0.0
  %532 = vmatpush2.xpose.msra.mxu0 0.0
  %533 = vmatprep.subr.mxu0 0.0
  %534 = vmatpush2.xpose.msra.mxu0 0.0
  %535 = vmatprep.mubr.f32.mxu0 0.0
  %536 = vmatmul.mubr.f32.gmra.mxu0 %v467
  %v537 = vpop.f32.mrf.mxu0
  %v538 = vadd.f32 0.0, %v537
  %v539 = vpop.f32.mrf.mxu0
  %540 = vdwg.mxu0
  %v541 = vmul.f32 %v460, 0.17677669
  %v542 = vmul.f32 %v538, 0.17677669
  %v543 = vsel %vm68, %v541, -inf
  %544 = vmax.xlane.f32.xlu0 %v543
  %v545 = vpop.xlane.xlu0 %544
  %v546 = vsel %vm68, %v542, -inf
  %547 = vmax.xlane.f32.xlu0 %v546
  %v548 = vpop.xlane.xlu0 %547
  %v549 = vsub.f32 %v541, %v545
  %v550 = vsub.f32 %v542, %v548
  %v551 = vmul.f32 %v549, 1.442695
  %v552 = vpow.pop %v551
  %v553 = vmul.f32 %v550, 1.442695
  %v554 = vpow.pop %v553
  %v555 = vsel %vm68, %v552, 0.0
  %556 = vadd.xlane.f32.xlu0 %v555
  %v557 = vpop.xlane.xlu0 %556
  %v558 = vsel %vm68, %v554, 0.0
  %559 = vadd.xlane.f32.xlu0 %v558
  %v560 = vpop.xlane.xlu0 %559
  %v561 = vrcp.pop %v557
  %v562 = vrcp.pop %v560
  %v563 = vmul.f32 %v552, %v561
  %v564 = vmul.f32 %v554, %v562
  %565 = vrot.lane.b32.xlu0 %v377, 64
  %v566 = vpop.permute.xlu0 %565
  %v569 = vsel %vm68, %v563, 0
  %571 = vmatprep.subr.mxu0 0.0
  %572 = vmatpush1.msra.mxu0 0.0
  %573 = vmatprep.subr.mxu0 0.0
  %574 = vmatpush1.msra.mxu0 0.0
  %575 = vmatprep.subr.mxu0 0.0
  %576 = vmatpush1.msra.mxu0 0.0
  %577 = vmatprep.subr.mxu0 0.0
  %578 = vmatpush1.msra.mxu0 0.0
  %579 = vmatprep.subr.mxu0 0.0
  %580 = vmatpush1.msra.mxu0 0.0
  %581 = vmatprep.subr.mxu0 0.0
  %582 = vmatpush1.msra.mxu0 0.0
  %583 = vmatprep.subr.mxu0 0.0
  %584 = vmatpush1.msra.mxu0 0.0
  %585 = vmatprep.subr.mxu0 0.0
  %586 = vmatpush1.msra.mxu0 0.0
  %587 = vmatprep.subr.mxu0 0.0
  %588 = vmatpush1.msra.mxu0 0.0
  %589 = vmatprep.subr.mxu0 0.0
  %590 = vmatpush1.msra.mxu0 0.0
  %591 = vmatprep.subr.mxu0 0.0
  %592 = vmatpush1.msra.mxu0 0.0
  %593 = vmatprep.subr.mxu0 0.0
  %594 = vmatpush1.msra.mxu0 0.0
  %595 = vmatprep.subr.mxu0 0.0
  %596 = vmatpush1.msra.mxu0 0.0
  %597 = vmatprep.subr.mxu0 0.0
  %598 = vmatpush1.msra.mxu0 0.0
  %599 = vmatprep.subr.mxu0 0.0
  %600 = vmatpush1.msra.mxu0 0.0
  %601 = vmatprep.subr.mxu0 0.0
  %602 = vmatpush1.msra.mxu0 %v566
  %603 = vmatprep.subr.mxu0 0.0
  %604 = vmatpush2.msra.mxu0 0.0
  %605 = vmatprep.subr.mxu0 0.0
  %606 = vmatpush2.msra.mxu0 0.0
  %607 = vmatprep.subr.mxu0 0.0
  %608 = vmatpush2.msra.mxu0 0.0
  %609 = vmatprep.subr.mxu0 0.0
  %610 = vmatpush2.msra.mxu0 0.0
  %611 = vmatprep.subr.mxu0 0.0
  %612 = vmatpush2.msra.mxu0 0.0
  %613 = vmatprep.subr.mxu0 0.0
  %614 = vmatpush2.msra.mxu0 0.0
  %615 = vmatprep.subr.mxu0 0.0
  %616 = vmatpush2.msra.mxu0 0.0
  %617 = vmatprep.subr.mxu0 0.0
  %618 = vmatpush2.msra.mxu0 0.0
  %619 = vmatprep.subr.mxu0 0.0
  %620 = vmatpush2.msra.mxu0 0.0
  %621 = vmatprep.subr.mxu0 0.0
  %622 = vmatpush2.msra.mxu0 0.0
  %623 = vmatprep.subr.mxu0 0.0
  %624 = vmatpush2.msra.mxu0 0.0
  %625 = vmatprep.subr.mxu0 0.0
  %626 = vmatpush2.msra.mxu0 0.0
  %627 = vmatprep.subr.mxu0 0.0
  %628 = vmatpush2.msra.mxu0 0.0
  %629 = vmatprep.subr.mxu0 0.0
  %630 = vmatpush2.msra.mxu0 0.0
  %631 = vmatprep.subr.mxu0 0.0
  %632 = vmatpush2.msra.mxu0 0.0
  %633 = vmatprep.subr.mxu0 0.0
  %634 = vmatpush2.msra.mxu0 0.0
  %635 = vmatprep.mubr.f32.mxu0 0.0
  %636 = vmatmul.mubr.f32.gmra.mxu0 %v569
  %v637 = vpop.f32.mrf.mxu0
  %v638 = vadd.f32 0.0, %v637
  %v639 = vpop.f32.mrf.mxu0
  %640 = vdwg.mxu0
  %641 = vrot.lane.b32.xlu0 %v382, 64
  %v642 = vpop.permute.xlu0 %641
  %v645 = vsel %vm68, %v564, 0
  %647 = vmatprep.subr.mxu0 0.0
  %648 = vmatpush1.msra.mxu0 0.0
  %649 = vmatprep.subr.mxu0 0.0
  %650 = vmatpush1.msra.mxu0 0.0
  %651 = vmatprep.subr.mxu0 0.0
  %652 = vmatpush1.msra.mxu0 0.0
  %653 = vmatprep.subr.mxu0 0.0
  %654 = vmatpush1.msra.mxu0 0.0
  %655 = vmatprep.subr.mxu0 0.0
  %656 = vmatpush1.msra.mxu0 0.0
  %657 = vmatprep.subr.mxu0 0.0
  %658 = vmatpush1.msra.mxu0 0.0
  %659 = vmatprep.subr.mxu0 0.0
  %660 = vmatpush1.msra.mxu0 0.0
  %661 = vmatprep.subr.mxu0 0.0
  %662 = vmatpush1.msra.mxu0 0.0
  %663 = vmatprep.subr.mxu0 0.0
  %664 = vmatpush1.msra.mxu0 0.0
  %665 = vmatprep.subr.mxu0 0.0
  %666 = vmatpush1.msra.mxu0 0.0
  %667 = vmatprep.subr.mxu0 0.0
  %668 = vmatpush1.msra.mxu0 0.0
  %669 = vmatprep.subr.mxu0 0.0
  %670 = vmatpush1.msra.mxu0 0.0
  %671 = vmatprep.subr.mxu0 0.0
  %672 = vmatpush1.msra.mxu0 0.0
  %673 = vmatprep.subr.mxu0 0.0
  %674 = vmatpush1.msra.mxu0 0.0
  %675 = vmatprep.subr.mxu0 0.0
  %676 = vmatpush1.msra.mxu0 0.0
  %677 = vmatprep.subr.mxu0 0.0
  %678 = vmatpush1.msra.mxu0 %v642
  %679 = vmatprep.subr.mxu0 0.0
  %680 = vmatpush2.msra.mxu0 0.0
  %681 = vmatprep.subr.mxu0 0.0
  %682 = vmatpush2.msra.mxu0 0.0
  %683 = vmatprep.subr.mxu0 0.0
  %684 = vmatpush2.msra.mxu0 0.0
  %685 = vmatprep.subr.mxu0 0.0
  %686 = vmatpush2.msra.mxu0 0.0
  %687 = vmatprep.subr.mxu0 0.0
  %688 = vmatpush2.msra.mxu0 0.0
  %689 = vmatprep.subr.mxu0 0.0
  %690 = vmatpush2.msra.mxu0 0.0
  %691 = vmatprep.subr.mxu0 0.0
  %692 = vmatpush2.msra.mxu0 0.0
  %693 = vmatprep.subr.mxu0 0.0
  %694 = vmatpush2.msra.mxu0 0.0
  %695 = vmatprep.subr.mxu0 0.0
  %696 = vmatpush2.msra.mxu0 0.0
  %697 = vmatprep.subr.mxu0 0.0
  %698 = vmatpush2.msra.mxu0 0.0
  %699 = vmatprep.subr.mxu0 0.0
  %700 = vmatpush2.msra.mxu0 0.0
  %701 = vmatprep.subr.mxu0 0.0
  %702 = vmatpush2.msra.mxu0 0.0
  %703 = vmatprep.subr.mxu0 0.0
  %704 = vmatpush2.msra.mxu0 0.0
  %705 = vmatprep.subr.mxu0 0.0
  %706 = vmatpush2.msra.mxu0 0.0
  %707 = vmatprep.subr.mxu0 0.0
  %708 = vmatpush2.msra.mxu0 0.0
  %709 = vmatprep.subr.mxu0 0.0
  %710 = vmatpush2.msra.mxu0 0.0
  %711 = vmatprep.mubr.f32.mxu0 0.0
  %712 = vmatmul.mubr.f32.gmra.mxu0 %v645
  %v713 = vpop.f32.mrf.mxu0
  %v714 = vadd.f32 0.0, %v713
  %v715 = vpop.f32.mrf.mxu0
  %716 = vdwg.mxu0
  %v717 = vld [vmem:[%s7] sm:$0xff]
  %v718 = vld [vmem:[%s7 + $0x8] sm:$0xff]
  %v719 = vld [vmem:[%s7 + $0x10] sm:$0xff]
  %v720 = vld [vmem:[%s7 + $0x18] sm:$0xff]
  %v721 = vld [vmem:[%s8] sm:$0x1]
  %v723 = vlaneseq
  %v724 = vshrl.u32 %v723, 7
  %v725 = vsub.s32 0, %v724
  %v726 = vrot.slane %v721, %v725
  %v729 = vsel %vm152, %v638, 0
  %v732 = vsel %vm152, %v714, 0
  %734 = vmatprep.subr.mxu0 0.0
  %735 = vmatpush1.msra.mxu0 0.0
  %736 = vmatprep.subr.mxu0 0.0
  %737 = vmatpush1.msra.mxu0 0.0
  %738 = vmatprep.subr.mxu0 0.0
  %739 = vmatpush1.msra.mxu0 0.0
  %740 = vmatprep.subr.mxu0 0.0
  %741 = vmatpush1.msra.mxu0 0.0
  %742 = vmatprep.subr.mxu0 0.0
  %743 = vmatpush1.msra.mxu0 0.0
  %744 = vmatprep.subr.mxu0 0.0
  %745 = vmatpush1.msra.mxu0 0.0
  %746 = vmatprep.subr.mxu0 0.0
  %747 = vmatpush1.msra.mxu0 0.0
  %748 = vmatprep.subr.mxu0 0.0
  %749 = vmatpush1.msra.mxu0 0.0
  %750 = vmatprep.subr.mxu0 0.0
  %751 = vmatpush1.msra.mxu0 0.0
  %752 = vmatprep.subr.mxu0 0.0
  %753 = vmatpush1.msra.mxu0 0.0
  %754 = vmatprep.subr.mxu0 0.0
  %755 = vmatpush1.msra.mxu0 0.0
  %756 = vmatprep.subr.mxu0 0.0
  %757 = vmatpush1.msra.mxu0 0.0
  %758 = vmatprep.subr.mxu0 0.0
  %759 = vmatpush1.msra.mxu0 %v720
  %760 = vmatprep.subr.mxu0 0.0
  %761 = vmatpush1.msra.mxu0 %v719
  %762 = vmatprep.subr.mxu0 0.0
  %763 = vmatpush1.msra.mxu0 %v718
  %764 = vmatprep.subr.mxu0 0.0
  %765 = vmatpush1.msra.mxu0 %v717
  %766 = vmatprep.subr.mxu0 0.0
  %767 = vmatpush2.msra.mxu0 0.0
  %768 = vmatprep.subr.mxu0 0.0
  %769 = vmatpush2.msra.mxu0 0.0
  %770 = vmatprep.subr.mxu0 0.0
  %771 = vmatpush2.msra.mxu0 0.0
  %772 = vmatprep.subr.mxu0 0.0
  %773 = vmatpush2.msra.mxu0 0.0
  %774 = vmatprep.subr.mxu0 0.0
  %775 = vmatpush2.msra.mxu0 0.0
  %776 = vmatprep.subr.mxu0 0.0
  %777 = vmatpush2.msra.mxu0 0.0
  %778 = vmatprep.subr.mxu0 0.0
  %779 = vmatpush2.msra.mxu0 0.0
  %780 = vmatprep.subr.mxu0 0.0
  %781 = vmatpush2.msra.mxu0 0.0
  %782 = vmatprep.subr.mxu0 0.0
  %783 = vmatpush2.msra.mxu0 0.0
  %784 = vmatprep.subr.mxu0 0.0
  %785 = vmatpush2.msra.mxu0 0.0
  %786 = vmatprep.subr.mxu0 0.0
  %787 = vmatpush2.msra.mxu0 0.0
  %788 = vmatprep.subr.mxu0 0.0
  %789 = vmatpush2.msra.mxu0 0.0
  %790 = vmatprep.subr.mxu0 0.0
  %791 = vmatpush2.msra.mxu0 0.0
  %792 = vmatprep.subr.mxu0 0.0
  %793 = vmatpush2.msra.mxu0 0.0
  %794 = vmatprep.subr.mxu0 0.0
  %795 = vmatpush2.msra.mxu0 0.0
  %796 = vmatprep.subr.mxu0 0.0
  %797 = vmatpush2.msra.mxu0 0.0
  %798 = vmatprep.mubr.f32.mxu0 0.0
  %799 = vmatmul.mubr.f32.gmra.mxu0 %v729
  %v800 = vpop.f32.mrf.mxu0
  %v801 = vadd.f32 %v726, %v800
  %v802 = vpop.f32.mrf.mxu0
  %803 = vmatprep.mubr.f32.mxu0 0.0
  %804 = vmatmul.mubr.f32.gmra.mxu0 %v732
  %v805 = vpop.f32.mrf.mxu0
  %v806 = vadd.f32 %v726, %v805
  %v807 = vpop.f32.mrf.mxu0
  %808 = vdwg.mxu0
  %v809 = vadd.f32 %v150, %v801
  %v810 = vadd.f32 %v150, %v806
  %v811 = vsel %vm152, %v809, 0.0
  %812 = vadd.xlane.f32.xlu0 %v811
  %v813 = vpop.xlane.xlu0 %812
  %v814 = vsel %vm152, %v810, 0.0
  %815 = vadd.xlane.f32.xlu0 %v814
  %v816 = vpop.xlane.xlu0 %815
  %v817 = vmul.f32 %v813, %v156
  %v818 = vmul.f32 %v816, %v156
  %v819 = vsub.f32 %v809, %v817
  %v820 = vsub.f32 %v810, %v818
  %v821 = vmul.f32 %v819, %v819
  %v822 = vmul.f32 %v820, %v820
  %v823 = vsel %vm152, %v821, 0.0
  %824 = vadd.xlane.f32.xlu0 %v823
  %v825 = vpop.xlane.xlu0 %824
  %v826 = vsel %vm152, %v822, 0.0
  %827 = vadd.xlane.f32.xlu0 %v826
  %v828 = vpop.xlane.xlu0 %827
  %v829 = vmul.f32 %v825, %v156
  %v830 = vmul.f32 %v828, %v156
  %v831 = vadd.f32 %v829, 1e-05
  %v832 = vadd.f32 %v830, 1e-05
  %v833 = vrsqrt.pop %v831
  %v834 = vrsqrt.pop %v832
  %v835 = vmul.f32 %v819, %v833
  %v836 = vmul.f32 %v820, %v834
  %v837 = vlaneseq
  %v838 = vshrl.u32 %v837, 7
  %v839 = vsub.s32 4, %v838
  %v840 = vrot.slane %v151, %v839
  %v841 = vmul.f32 %v835, %v840
  %v842 = vmul.f32 %v836, %v840
  %v843 = vlaneseq
  %v844 = vshrl.u32 %v843, 7
  %v845 = vsub.s32 5, %v844
  %v846 = vrot.slane %v151, %v845
  %v847 = vadd.f32 %v841, %v846
  %v848 = vadd.f32 %v842, %v846
  %v849 = vld [vmem:[%s9] sm:$0xff]
  %v850 = vld [vmem:[%s9 + $0x8] sm:$0xff]
  %v851 = vld [vmem:[%s9 + $0x10] sm:$0xff]
  %v852 = vld [vmem:[%s9 + $0x18] sm:$0xff]
  %v853 = vld [vmem:[%s10] sm:$0x1]
  %v855 = vlaneseq
  %v856 = vshrl.u32 %v855, 7
  %v857 = vsub.s32 0, %v856
  %v858 = vrot.slane %v853, %v857
  %v861 = vsel %vm152, %v847, 0
  %v864 = vsel %vm152, %v848, 0
  %866 = vmatprep.subr.mxu0 0.0
  %867 = vmatpush1.msra.mxu0 0.0
  %868 = vmatprep.subr.mxu0 0.0
  %869 = vmatpush1.msra.mxu0 0.0
  %870 = vmatprep.subr.mxu0 0.0
  %871 = vmatpush1.msra.mxu0 0.0
  %872 = vmatprep.subr.mxu0 0.0
  %873 = vmatpush1.msra.mxu0 0.0
  %874 = vmatprep.subr.mxu0 0.0
  %875 = vmatpush1.msra.mxu0 0.0
  %876 = vmatprep.subr.mxu0 0.0
  %877 = vmatpush1.msra.mxu0 0.0
  %878 = vmatprep.subr.mxu0 0.0
  %879 = vmatpush1.msra.mxu0 0.0
  %880 = vmatprep.subr.mxu0 0.0
  %881 = vmatpush1.msra.mxu0 0.0
  %882 = vmatprep.subr.mxu0 0.0
  %883 = vmatpush1.msra.mxu0 0.0
  %884 = vmatprep.subr.mxu0 0.0
  %885 = vmatpush1.msra.mxu0 0.0
  %886 = vmatprep.subr.mxu0 0.0
  %887 = vmatpush1.msra.mxu0 0.0
  %888 = vmatprep.subr.mxu0 0.0
  %889 = vmatpush1.msra.mxu0 0.0
  %890 = vmatprep.subr.mxu0 0.0
  %891 = vmatpush1.msra.mxu0 %v852
  %892 = vmatprep.subr.mxu0 0.0
  %893 = vmatpush1.msra.mxu0 %v851
  %894 = vmatprep.subr.mxu0 0.0
  %895 = vmatpush1.msra.mxu0 %v850
  %896 = vmatprep.subr.mxu0 0.0
  %897 = vmatpush1.msra.mxu0 %v849
  %898 = vmatprep.subr.mxu0 0.0
  %899 = vmatpush2.msra.mxu0 0.0
  %900 = vmatprep.subr.mxu0 0.0
  %901 = vmatpush2.msra.mxu0 0.0
  %902 = vmatprep.subr.mxu0 0.0
  %903 = vmatpush2.msra.mxu0 0.0
  %904 = vmatprep.subr.mxu0 0.0
  %905 = vmatpush2.msra.mxu0 0.0
  %906 = vmatprep.subr.mxu0 0.0
  %907 = vmatpush2.msra.mxu0 0.0
  %908 = vmatprep.subr.mxu0 0.0
  %909 = vmatpush2.msra.mxu0 0.0
  %910 = vmatprep.subr.mxu0 0.0
  %911 = vmatpush2.msra.mxu0 0.0
  %912 = vmatprep.subr.mxu0 0.0
  %913 = vmatpush2.msra.mxu0 0.0
  %914 = vmatprep.subr.mxu0 0.0
  %915 = vmatpush2.msra.mxu0 0.0
  %916 = vmatprep.subr.mxu0 0.0
  %917 = vmatpush2.msra.mxu0 0.0
  %918 = vmatprep.subr.mxu0 0.0
  %919 = vmatpush2.msra.mxu0 0.0
  %920 = vmatprep.subr.mxu0 0.0
  %921 = vmatpush2.msra.mxu0 0.0
  %922 = vmatprep.subr.mxu0 0.0
  %923 = vmatpush2.msra.mxu0 0.0
  %924 = vmatprep.subr.mxu0 0.0
  %925 = vmatpush2.msra.mxu0 0.0
  %926 = vmatprep.subr.mxu0 0.0
  %927 = vmatpush2.msra.mxu0 0.0
  %928 = vmatprep.subr.mxu0 0.0
  %929 = vmatpush2.msra.mxu0 0.0
  %930 = vmatprep.mubr.f32.mxu0 0.0
  %931 = vmatmul.mubr.f32.gmra.mxu0 %v861
  %v932 = vpop.f32.mrf.mxu0
  %v933 = vadd.f32 %v858, %v932
  %v934 = vpop.f32.mrf.mxu0
  %935 = vmatprep.mubr.f32.mxu0 0.0
  %936 = vmatmul.mubr.f32.gmra.mxu0 %v864
  %v937 = vpop.f32.mrf.mxu0
  %v938 = vadd.f32 %v858, %v937
  %v939 = vpop.f32.mrf.mxu0
  %940 = vdwg.mxu0
  %v941 = vmul.f32 %v933, %v933
  %v942 = vmul.f32 %v938, %v938
  %v943 = vmul.f32 %v933, %v941
  %v944 = vmul.f32 %v938, %v942
  %v945 = vmul.f32 %v943, 0.044715
  %v946 = vmul.f32 %v944, 0.044715
  %v947 = vadd.f32 %v933, %v945
  %v948 = vadd.f32 %v938, %v946
  %v949 = vmul.f32 %v947, 0.7978846
  %v950 = vmul.f32 %v948, 0.7978846
  %v951 = vtanh.pop %v949
  %v952 = vtanh.pop %v950
  %v953 = vadd.f32 %v951, 1.0
  %v954 = vadd.f32 %v952, 1.0
  %v955 = vmul.f32 %v953, 0.5
  %v956 = vmul.f32 %v954, 0.5
  %v957 = vmul.f32 %v933, %v955
  %v958 = vmul.f32 %v938, %v956
  %v959 = vld [vmem:[%s11] sm:$0xff]
  %v960 = vld [vmem:[%s11 + $0x8] sm:$0xff]
  %v961 = vld [vmem:[%s11 + $0x10] sm:$0xff]
  %v962 = vld [vmem:[%s11 + $0x18] sm:$0xff]
  %v963 = vld [vmem:[%s11 + $0x20] sm:$0xff]
  %v964 = vld [vmem:[%s11 + $0x28] sm:$0xff]
  %v965 = vld [vmem:[%s11 + $0x30] sm:$0xff]
  %v966 = vld [vmem:[%s11 + $0x38] sm:$0xff]
  %v967 = vld [vmem:[%s11 + $0x40] sm:$0xff]
  %v968 = vld [vmem:[%s11 + $0x48] sm:$0xff]
  %v969 = vld [vmem:[%s11 + $0x50] sm:$0xff]
  %v970 = vld [vmem:[%s11 + $0x58] sm:$0xff]
  %v971 = vld [vmem:[%s11 + $0x60] sm:$0xff]
  %v972 = vld [vmem:[%s11 + $0x68] sm:$0xff]
  %v973 = vld [vmem:[%s11 + $0x70] sm:$0xff]
  %v974 = vld [vmem:[%s11 + $0x78] sm:$0xff]
  %v975 = vld [vmem:[%s12] sm:$0x1]
  %v977 = vlaneseq
  %v978 = vshrl.u32 %v977, 7
  %v979 = vsub.s32 0, %v978
  %v980 = vrot.slane %v975, %v979
  %982 = vmatprep.subr.mxu0 0.0
  %983 = vmatpush1.msra.mxu0 %v974
  %984 = vmatprep.subr.mxu0 0.0
  %985 = vmatpush1.msra.mxu0 %v973
  %986 = vmatprep.subr.mxu0 0.0
  %987 = vmatpush1.msra.mxu0 %v972
  %988 = vmatprep.subr.mxu0 0.0
  %989 = vmatpush1.msra.mxu0 %v971
  %990 = vmatprep.subr.mxu0 0.0
  %991 = vmatpush1.msra.mxu0 %v970
  %992 = vmatprep.subr.mxu0 0.0
  %993 = vmatpush1.msra.mxu0 %v969
  %994 = vmatprep.subr.mxu0 0.0
  %995 = vmatpush1.msra.mxu0 %v968
  %996 = vmatprep.subr.mxu0 0.0
  %997 = vmatpush1.msra.mxu0 %v967
  %998 = vmatprep.subr.mxu0 0.0
  %999 = vmatpush1.msra.mxu0 %v966
  %1000 = vmatprep.subr.mxu0 0.0
  %1001 = vmatpush1.msra.mxu0 %v965
  %1002 = vmatprep.subr.mxu0 0.0
  %1003 = vmatpush1.msra.mxu0 %v964
  %1004 = vmatprep.subr.mxu0 0.0
  %1005 = vmatpush1.msra.mxu0 %v963
  %1006 = vmatprep.subr.mxu0 0.0
  %1007 = vmatpush1.msra.mxu0 %v962
  %1008 = vmatprep.subr.mxu0 0.0
  %1009 = vmatpush1.msra.mxu0 %v961
  %1010 = vmatprep.subr.mxu0 0.0
  %1011 = vmatpush1.msra.mxu0 %v960
  %1012 = vmatprep.subr.mxu0 0.0
  %1013 = vmatpush1.msra.mxu0 %v959
  %1014 = vmatprep.subr.mxu0 0.0
  %1015 = vmatpush2.msra.mxu0 0.0
  %1016 = vmatprep.subr.mxu0 0.0
  %1017 = vmatpush2.msra.mxu0 0.0
  %1018 = vmatprep.subr.mxu0 0.0
  %1019 = vmatpush2.msra.mxu0 0.0
  %1020 = vmatprep.subr.mxu0 0.0
  %1021 = vmatpush2.msra.mxu0 0.0
  %1022 = vmatprep.subr.mxu0 0.0
  %1023 = vmatpush2.msra.mxu0 0.0
  %1024 = vmatprep.subr.mxu0 0.0
  %1025 = vmatpush2.msra.mxu0 0.0
  %1026 = vmatprep.subr.mxu0 0.0
  %1027 = vmatpush2.msra.mxu0 0.0
  %1028 = vmatprep.subr.mxu0 0.0
  %1029 = vmatpush2.msra.mxu0 0.0
  %1030 = vmatprep.subr.mxu0 0.0
  %1031 = vmatpush2.msra.mxu0 0.0
  %1032 = vmatprep.subr.mxu0 0.0
  %1033 = vmatpush2.msra.mxu0 0.0
  %1034 = vmatprep.subr.mxu0 0.0
  %1035 = vmatpush2.msra.mxu0 0.0
  %1036 = vmatprep.subr.mxu0 0.0
  %1037 = vmatpush2.msra.mxu0 0.0
  %1038 = vmatprep.subr.mxu0 0.0
  %1039 = vmatpush2.msra.mxu0 0.0
  %1040 = vmatprep.subr.mxu0 0.0
  %1041 = vmatpush2.msra.mxu0 0.0
  %1042 = vmatprep.subr.mxu0 0.0
  %1043 = vmatpush2.msra.mxu0 0.0
  %1044 = vmatprep.subr.mxu0 0.0
  %1045 = vmatpush2.msra.mxu0 0.0
  %1046 = vmatprep.mubr.f32.mxu0 0.0
  %1047 = vmatmul.mubr.f32.gmra.mxu0 %v957
  %v1048 = vpop.f32.mrf.mxu0
  %v1049 = vadd.f32 %v980, %v1048
  %v1050 = vpop.f32.mrf.mxu0
  %1051 = vmatprep.mubr.f32.mxu0 0.0
  %1052 = vmatmul.mubr.f32.gmra.mxu0 %v958
  %v1053 = vpop.f32.mrf.mxu0
  %v1054 = vadd.f32 %v980, %v1053
  %v1055 = vpop.f32.mrf.mxu0
  %1056 = vdwg.mxu0
  %v1057 = vadd.f32 %v809, %v1049
  %v1058 = vadd.f32 %v810, %v1054
  %s1059 = scalar_lea.vmem %s4, 8
  %v1060 = vld [vmem:[%s1059] sm:$0x3f]
  %v1061 = vsel %vm152, %v1057, 0.0
  %1062 = vadd.xlane.f32.xlu0 %v1061
  %v1063 = vpop.xlane.xlu0 %1062
  %v1064 = vsel %vm152, %v1058, 0.0
  %1065 = vadd.xlane.f32.xlu0 %v1064
  %v1066 = vpop.xlane.xlu0 %1065
  %v1067 = vmul.f32 %v1063, %v156
  %v1068 = vmul.f32 %v1066, %v156
  %v1069 = vsub.f32 %v1057, %v1067
  %v1070 = vsub.f32 %v1058, %v1068
  %v1071 = vmul.f32 %v1069, %v1069
  %v1072 = vmul.f32 %v1070, %v1070
  %v1073 = vsel %vm152, %v1071, 0.0
  %1074 = vadd.xlane.f32.xlu0 %v1073
  %v1075 = vpop.xlane.xlu0 %1074
  %v1076 = vsel %vm152, %v1072, 0.0
  %1077 = vadd.xlane.f32.xlu0 %v1076
  %v1078 = vpop.xlane.xlu0 %1077
  %v1079 = vmul.f32 %v1075, %v156
  %v1080 = vmul.f32 %v1078, %v156
  %v1081 = vadd.f32 %v1079, 1e-05
  %v1082 = vadd.f32 %v1080, 1e-05
  %v1083 = vrsqrt.pop %v1081
  %v1084 = vrsqrt.pop %v1082
  %v1085 = vmul.f32 %v1069, %v1083
  %v1086 = vmul.f32 %v1070, %v1084
  %v1087 = vlaneseq
  %v1088 = vshrl.u32 %v1087, 7
  %v1089 = vsub.s32 0, %v1088
  %v1090 = vrot.slane %v1060, %v1089
  %v1091 = vmul.f32 %v1085, %v1090
  %v1092 = vmul.f32 %v1086, %v1090
  %v1093 = vlaneseq
  %v1094 = vshrl.u32 %v1093, 7
  %v1095 = vsub.s32 1, %v1094
  %v1096 = vrot.slane %v1060, %v1095
  %v1097 = vadd.f32 %v1091, %v1096
  %v1098 = vadd.f32 %v1092, %v1096
  %v1099 = vlaneseq
  %v1100 = vshrl.u32 %v1099, 7
  %v1101 = vsub.s32 2, %v1100
  %v1102 = vrot.slane %v1060, %v1101
  %v1103 = vmul.f32 %v1085, %v1102
  %v1104 = vmul.f32 %v1086, %v1102
  %v1105 = vlaneseq
  %v1106 = vshrl.u32 %v1105, 7
  %v1107 = vsub.s32 3, %v1106
  %v1108 = vrot.slane %v1060, %v1107
  %v1109 = vadd.f32 %v1103, %v1108
  %v1110 = vadd.f32 %v1104, %v1108
  %s1111 = scalar_lea.vmem %s5, 32
  %v1112 = vld [vmem:[%s1111] sm:$0xff]
  %v1113 = vld [vmem:[%s1111 + $0x8] sm:$0xff]
  %v1114 = vld [vmem:[%s1111 + $0x10] sm:$0xff]
  %v1115 = vld [vmem:[%s1111 + $0x18] sm:$0xff]
  %s1116 = scalar_lea.vmem %s6, 1
  %v1117 = vld [vmem:[%s1116] sm:$0x1]
  %v1119 = vlaneseq
  %v1120 = vshrl.u32 %v1119, 7
  %v1121 = vsub.s32 0, %v1120
  %v1122 = vrot.slane %v1117, %v1121
  %v1125 = vsel %vm152, %v1097, 0
  %v1128 = vsel %vm152, %v1098, 0
  %1130 = vmatprep.subr.mxu0 0.0
  %1131 = vmatpush1.msra.mxu0 0.0
  %1132 = vmatprep.subr.mxu0 0.0
  %1133 = vmatpush1.msra.mxu0 0.0
  %1134 = vmatprep.subr.mxu0 0.0
  %1135 = vmatpush1.msra.mxu0 0.0
  %1136 = vmatprep.subr.mxu0 0.0
  %1137 = vmatpush1.msra.mxu0 0.0
  %1138 = vmatprep.subr.mxu0 0.0
  %1139 = vmatpush1.msra.mxu0 0.0
  %1140 = vmatprep.subr.mxu0 0.0
  %1141 = vmatpush1.msra.mxu0 0.0
  %1142 = vmatprep.subr.mxu0 0.0
  %1143 = vmatpush1.msra.mxu0 0.0
  %1144 = vmatprep.subr.mxu0 0.0
  %1145 = vmatpush1.msra.mxu0 0.0
  %1146 = vmatprep.subr.mxu0 0.0
  %1147 = vmatpush1.msra.mxu0 0.0
  %1148 = vmatprep.subr.mxu0 0.0
  %1149 = vmatpush1.msra.mxu0 0.0
  %1150 = vmatprep.subr.mxu0 0.0
  %1151 = vmatpush1.msra.mxu0 0.0
  %1152 = vmatprep.subr.mxu0 0.0
  %1153 = vmatpush1.msra.mxu0 0.0
  %1154 = vmatprep.subr.mxu0 0.0
  %1155 = vmatpush1.msra.mxu0 %v1115
  %1156 = vmatprep.subr.mxu0 0.0
  %1157 = vmatpush1.msra.mxu0 %v1114
  %1158 = vmatprep.subr.mxu0 0.0
  %1159 = vmatpush1.msra.mxu0 %v1113
  %1160 = vmatprep.subr.mxu0 0.0
  %1161 = vmatpush1.msra.mxu0 %v1112
  %1162 = vmatprep.subr.mxu0 0.0
  %1163 = vmatpush2.msra.mxu0 0.0
  %1164 = vmatprep.subr.mxu0 0.0
  %1165 = vmatpush2.msra.mxu0 0.0
  %1166 = vmatprep.subr.mxu0 0.0
  %1167 = vmatpush2.msra.mxu0 0.0
  %1168 = vmatprep.subr.mxu0 0.0
  %1169 = vmatpush2.msra.mxu0 0.0
  %1170 = vmatprep.subr.mxu0 0.0
  %1171 = vmatpush2.msra.mxu0 0.0
  %1172 = vmatprep.subr.mxu0 0.0
  %1173 = vmatpush2.msra.mxu0 0.0
  %1174 = vmatprep.subr.mxu0 0.0
  %1175 = vmatpush2.msra.mxu0 0.0
  %1176 = vmatprep.subr.mxu0 0.0
  %1177 = vmatpush2.msra.mxu0 0.0
  %1178 = vmatprep.subr.mxu0 0.0
  %1179 = vmatpush2.msra.mxu0 0.0
  %1180 = vmatprep.subr.mxu0 0.0
  %1181 = vmatpush2.msra.mxu0 0.0
  %1182 = vmatprep.subr.mxu0 0.0
  %1183 = vmatpush2.msra.mxu0 0.0
  %1184 = vmatprep.subr.mxu0 0.0
  %1185 = vmatpush2.msra.mxu0 0.0
  %1186 = vmatprep.subr.mxu0 0.0
  %1187 = vmatpush2.msra.mxu0 0.0
  %1188 = vmatprep.subr.mxu0 0.0
  %1189 = vmatpush2.msra.mxu0 0.0
  %1190 = vmatprep.subr.mxu0 0.0
  %1191 = vmatpush2.msra.mxu0 0.0
  %1192 = vmatprep.subr.mxu0 0.0
  %1193 = vmatpush2.msra.mxu0 0.0
  %1194 = vmatprep.mubr.f32.mxu0 0.0
  %1195 = vmatmul.mubr.f32.gmra.mxu0 %v1125
  %v1196 = vpop.f32.mrf.mxu0
  %v1197 = vadd.f32 %v1122, %v1196
  %v1198 = vpop.f32.mrf.mxu0
  %1199 = vmatprep.mubr.f32.mxu0 0.0
  %1200 = vmatmul.mubr.f32.gmra.mxu0 %v1128
  %v1201 = vpop.f32.mrf.mxu0
  %v1202 = vadd.f32 %v1122, %v1201
  %v1203 = vpop.f32.mrf.mxu0
  %1204 = vdwg.mxu0
  %v1206 = vsel %vm152, %v1109, 0
  %v1209 = vsel %vm152, %v1110, 0
  %1211 = vmatprep.subr.mxu0 0.0
  %1212 = vmatpush1.msra.mxu0 0.0
  %1213 = vmatprep.subr.mxu0 0.0
  %1214 = vmatpush1.msra.mxu0 0.0
  %1215 = vmatprep.subr.mxu0 0.0
  %1216 = vmatpush1.msra.mxu0 0.0
  %1217 = vmatprep.subr.mxu0 0.0
  %1218 = vmatpush1.msra.mxu0 0.0
  %1219 = vmatprep.subr.mxu0 0.0
  %1220 = vmatpush1.msra.mxu0 0.0
  %1221 = vmatprep.subr.mxu0 0.0
  %1222 = vmatpush1.msra.mxu0 0.0
  %1223 = vmatprep.subr.mxu0 0.0
  %1224 = vmatpush1.msra.mxu0 0.0
  %1225 = vmatprep.subr.mxu0 0.0
  %1226 = vmatpush1.msra.mxu0 0.0
  %1227 = vmatprep.subr.mxu0 0.0
  %1228 = vmatpush1.msra.mxu0 0.0
  %1229 = vmatprep.subr.mxu0 0.0
  %1230 = vmatpush1.msra.mxu0 0.0
  %1231 = vmatprep.subr.mxu0 0.0
  %1232 = vmatpush1.msra.mxu0 0.0
  %1233 = vmatprep.subr.mxu0 0.0
  %1234 = vmatpush1.msra.mxu0 0.0
  %1235 = vmatprep.subr.mxu0 0.0
  %1236 = vmatpush1.msra.mxu0 %v1115
  %1237 = vmatprep.subr.mxu0 0.0
  %1238 = vmatpush1.msra.mxu0 %v1114
  %1239 = vmatprep.subr.mxu0 0.0
  %1240 = vmatpush1.msra.mxu0 %v1113
  %1241 = vmatprep.subr.mxu0 0.0
  %1242 = vmatpush1.msra.mxu0 %v1112
  %1243 = vmatprep.subr.mxu0 0.0
  %1244 = vmatpush2.msra.mxu0 0.0
  %1245 = vmatprep.subr.mxu0 0.0
  %1246 = vmatpush2.msra.mxu0 0.0
  %1247 = vmatprep.subr.mxu0 0.0
  %1248 = vmatpush2.msra.mxu0 0.0
  %1249 = vmatprep.subr.mxu0 0.0
  %1250 = vmatpush2.msra.mxu0 0.0
  %1251 = vmatprep.subr.mxu0 0.0
  %1252 = vmatpush2.msra.mxu0 0.0
  %1253 = vmatprep.subr.mxu0 0.0
  %1254 = vmatpush2.msra.mxu0 0.0
  %1255 = vmatprep.subr.mxu0 0.0
  %1256 = vmatpush2.msra.mxu0 0.0
  %1257 = vmatprep.subr.mxu0 0.0
  %1258 = vmatpush2.msra.mxu0 0.0
  %1259 = vmatprep.subr.mxu0 0.0
  %1260 = vmatpush2.msra.mxu0 0.0
  %1261 = vmatprep.subr.mxu0 0.0
  %1262 = vmatpush2.msra.mxu0 0.0
  %1263 = vmatprep.subr.mxu0 0.0
  %1264 = vmatpush2.msra.mxu0 0.0
  %1265 = vmatprep.subr.mxu0 0.0
  %1266 = vmatpush2.msra.mxu0 0.0
  %1267 = vmatprep.subr.mxu0 0.0
  %1268 = vmatpush2.msra.mxu0 0.0
  %1269 = vmatprep.subr.mxu0 0.0
  %1270 = vmatpush2.msra.mxu0 0.0
  %1271 = vmatprep.subr.mxu0 0.0
  %1272 = vmatpush2.msra.mxu0 0.0
  %1273 = vmatprep.subr.mxu0 0.0
  %1274 = vmatpush2.msra.mxu0 0.0
  %1275 = vmatprep.mubr.f32.mxu0 0.0
  %1276 = vmatmul.mubr.f32.gmra.mxu0 %v1206
  %v1277 = vpop.f32.mrf.mxu0
  %v1278 = vadd.f32 %v1122, %v1277
  %v1279 = vpop.f32.mrf.mxu0
  %1280 = vmatprep.mubr.f32.mxu0 0.0
  %1281 = vmatmul.mubr.f32.gmra.mxu0 %v1209
  %v1282 = vpop.f32.mrf.mxu0
  %v1283 = vadd.f32 %v1122, %v1282
  %v1284 = vpop.f32.mrf.mxu0
  %1285 = vdwg.mxu0
  %1287 = vrot.lane.b32.xlu0 %v1278, 96
  %v1288 = vpop.permute.xlu0 %1287
  %v1290 = vsel %vm152, %v1197, 0
  %v1292 = vsel %vm152, %v1288, 0
  %1294 = vmatprep.subr.mxu0 0.0
  %1295 = vmatpush1.xpose.msra.mxu0 0.0
  %1296 = vmatprep.subr.mxu0 0.0
  %1297 = vmatpush1.xpose.msra.mxu0 0.0
  %1298 = vmatprep.subr.mxu0 0.0
  %1299 = vmatpush1.xpose.msra.mxu0 0.0
  %1300 = vmatprep.subr.mxu0 0.0
  %1301 = vmatpush1.xpose.msra.mxu0 0.0
  %1302 = vmatprep.subr.mxu0 0.0
  %1303 = vmatpush1.xpose.msra.mxu0 0.0
  %1304 = vmatprep.subr.mxu0 0.0
  %1305 = vmatpush1.xpose.msra.mxu0 0.0
  %1306 = vmatprep.subr.mxu0 0.0
  %1307 = vmatpush1.xpose.msra.mxu0 0.0
  %1308 = vmatprep.subr.mxu0 0.0
  %1309 = vmatpush1.xpose.msra.mxu0 0.0
  %1310 = vmatprep.subr.mxu0 0.0
  %1311 = vmatpush1.xpose.msra.mxu0 0.0
  %1312 = vmatprep.subr.mxu0 0.0
  %1313 = vmatpush1.xpose.msra.mxu0 0.0
  %1314 = vmatprep.subr.mxu0 0.0
  %1315 = vmatpush1.xpose.msra.mxu0 0.0
  %1316 = vmatprep.subr.mxu0 0.0
  %1317 = vmatpush1.xpose.msra.mxu0 0.0
  %1318 = vmatprep.subr.mxu0 0.0
  %1319 = vmatpush1.xpose.msra.mxu0 0.0
  %1320 = vmatprep.subr.mxu0 0.0
  %1321 = vmatpush1.xpose.msra.mxu0 0.0
  %1322 = vmatprep.subr.mxu0 0.0
  %1323 = vmatpush1.xpose.msra.mxu0 0.0
  %1324 = vmatprep.subr.mxu0 0.0
  %1325 = vmatpush1.xpose.msra.mxu0 %v1292
  %1326 = vmatprep.subr.mxu0 0.0
  %1327 = vmatpush2.xpose.msra.mxu0 0.0
  %1328 = vmatprep.subr.mxu0 0.0
  %1329 = vmatpush2.xpose.msra.mxu0 0.0
  %1330 = vmatprep.subr.mxu0 0.0
  %1331 = vmatpush2.xpose.msra.mxu0 0.0
  %1332 = vmatprep.subr.mxu0 0.0
  %1333 = vmatpush2.xpose.msra.mxu0 0.0
  %1334 = vmatprep.subr.mxu0 0.0
  %1335 = vmatpush2.xpose.msra.mxu0 0.0
  %1336 = vmatprep.subr.mxu0 0.0
  %1337 = vmatpush2.xpose.msra.mxu0 0.0
  %1338 = vmatprep.subr.mxu0 0.0
  %1339 = vmatpush2.xpose.msra.mxu0 0.0
  %1340 = vmatprep.subr.mxu0 0.0
  %1341 = vmatpush2.xpose.msra.mxu0 0.0
  %1342 = vmatprep.subr.mxu0 0.0
  %1343 = vmatpush2.xpose.msra.mxu0 0.0
  %1344 = vmatprep.subr.mxu0 0.0
  %1345 = vmatpush2.xpose.msra.mxu0 0.0
  %1346 = vmatprep.subr.mxu0 0.0
  %1347 = vmatpush2.xpose.msra.mxu0 0.0
  %1348 = vmatprep.subr.mxu0 0.0
  %1349 = vmatpush2.xpose.msra.mxu0 0.0
  %1350 = vmatprep.subr.mxu0 0.0
  %1351 = vmatpush2.xpose.msra.mxu0 0.0
  %1352 = vmatprep.subr.mxu0 0.0
  %1353 = vmatpush2.xpose.msra.mxu0 0.0
  %1354 = vmatprep.subr.mxu0 0.0
  %1355 = vmatpush2.xpose.msra.mxu0 0.0
  %1356 = vmatprep.subr.mxu0 0.0
  %1357 = vmatpush2.xpose.msra.mxu0 0.0
  %1358 = vmatprep.mubr.f32.mxu0 0.0
  %1359 = vmatmul.mubr.f32.gmra.mxu0 %v1290
  %v1360 = vpop.f32.mrf.mxu0
  %v1361 = vadd.f32 0.0, %v1360
  %v1362 = vpop.f32.mrf.mxu0
  %1363 = vdwg.mxu0
  %1365 = vrot.lane.b32.xlu0 %v1283, 96
  %v1366 = vpop.permute.xlu0 %1365
  %v1368 = vsel %vm152, %v1202, 0
  %v1370 = vsel %vm152, %v1366, 0
  %1372 = vmatprep.subr.mxu0 0.0
  %1373 = vmatpush1.xpose.msra.mxu0 0.0
  %1374 = vmatprep.subr.mxu0 0.0
  %1375 = vmatpush1.xpose.msra.mxu0 0.0
  %1376 = vmatprep.subr.mxu0 0.0
  %1377 = vmatpush1.xpose.msra.mxu0 0.0
  %1378 = vmatprep.subr.mxu0 0.0
  %1379 = vmatpush1.xpose.msra.mxu0 0.0
  %1380 = vmatprep.subr.mxu0 0.0
  %1381 = vmatpush1.xpose.msra.mxu0 0.0
  %1382 = vmatprep.subr.mxu0 0.0
  %1383 = vmatpush1.xpose.msra.mxu0 0.0
  %1384 = vmatprep.subr.mxu0 0.0
  %1385 = vmatpush1.xpose.msra.mxu0 0.0
  %1386 = vmatprep.subr.mxu0 0.0
  %1387 = vmatpush1.xpose.msra.mxu0 0.0
  %1388 = vmatprep.subr.mxu0 0.0
  %1389 = vmatpush1.xpose.msra.mxu0 0.0
  %1390 = vmatprep.subr.mxu0 0.0
  %1391 = vmatpush1.xpose.msra.mxu0 0.0
  %1392 = vmatprep.subr.mxu0 0.0
  %1393 = vmatpush1.xpose.msra.mxu0 0.0
  %1394 = vmatprep.subr.mxu0 0.0
  %1395 = vmatpush1.xpose.msra.mxu0 0.0
  %1396 = vmatprep.subr.mxu0 0.0
  %1397 = vmatpush1.xpose.msra.mxu0 0.0
  %1398 = vmatprep.subr.mxu0 0.0
  %1399 = vmatpush1.xpose.msra.mxu0 0.0
  %1400 = vmatprep.subr.mxu0 0.0
  %1401 = vmatpush1.xpose.msra.mxu0 0.0
  %1402 = vmatprep.subr.mxu0 0.0
  %1403 = vmatpush1.xpose.msra.mxu0 %v1370
  %1404 = vmatprep.subr.mxu0 0.0
  %1405 = vmatpush2.xpose.msra.mxu0 0.0
  %1406 = vmatprep.subr.mxu0 0.0
  %1407 = vmatpush2.xpose.msra.mxu0 0.0
  %1408 = vmatprep.subr.mxu0 0.0
  %1409 = vmatpush2.xpose.msra.mxu0 0.0
  %1410 = vmatprep.subr.mxu0 0.0
  %1411 = vmatpush2.xpose.msra.mxu0 0.0
  %1412 = vmatprep.subr.mxu0 0.0
  %1413 = vmatpush2.xpose.msra.mxu0 0.0
  %1414 = vmatprep.subr.mxu0 0.0
  %1415 = vmatpush2.xpose.msra.mxu0 0.0
  %1416 = vmatprep.subr.mxu0 0.0
  %1417 = vmatpush2.xpose.msra.mxu0 0.0
  %1418 = vmatprep.subr.mxu0 0.0
  %1419 = vmatpush2.xpose.msra.mxu0 0.0
  %1420 = vmatprep.subr.mxu0 0.0
  %1421 = vmatpush2.xpose.msra.mxu0 0.0
  %1422 = vmatprep.subr.mxu0 0.0
  %1423 = vmatpush2.xpose.msra.mxu0 0.0
  %1424 = vmatprep.subr.mxu0 0.0
  %1425 = vmatpush2.xpose.msra.mxu0 0.0
  %1426 = vmatprep.subr.mxu0 0.0
  %1427 = vmatpush2.xpose.msra.mxu0 0.0
  %1428 = vmatprep.subr.mxu0 0.0
  %1429 = vmatpush2.xpose.msra.mxu0 0.0
  %1430 = vmatprep.subr.mxu0 0.0
  %1431 = vmatpush2.xpose.msra.mxu0 0.0
  %1432 = vmatprep.subr.mxu0 0.0
  %1433 = vmatpush2.xpose.msra.mxu0 0.0
  %1434 = vmatprep.subr.mxu0 0.0
  %1435 = vmatpush2.xpose.msra.mxu0 0.0
  %1436 = vmatprep.mubr.f32.mxu0 0.0
  %1437 = vmatmul.mubr.f32.gmra.mxu0 %v1368
  %v1438 = vpop.f32.mrf.mxu0
  %v1439 = vadd.f32 0.0, %v1438
  %v1440 = vpop.f32.mrf.mxu0
  %1441 = vdwg.mxu0
  %v1442 = vmul.f32 %v1361, 0.17677669
  %v1443 = vmul.f32 %v1439, 0.17677669
  %v1444 = vsel %vm68, %v1442, -inf
  %1445 = vmax.xlane.f32.xlu0 %v1444
  %v1446 = vpop.xlane.xlu0 %1445
  %v1447 = vsel %vm68, %v1443, -inf
  %1448 = vmax.xlane.f32.xlu0 %v1447
  %v1449 = vpop.xlane.xlu0 %1448
  %v1450 = vsub.f32 %v1442, %v1446
  %v1451 = vsub.f32 %v1443, %v1449
  %v1452 = vmul.f32 %v1450, 1.442695
  %v1453 = vpow.pop %v1452
  %v1454 = vmul.f32 %v1451, 1.442695
  %v1455 = vpow.pop %v1454
  %v1456 = vsel %vm68, %v1453, 0.0
  %1457 = vadd.xlane.f32.xlu0 %v1456
  %v1458 = vpop.xlane.xlu0 %1457
  %v1459 = vsel %vm68, %v1455, 0.0
  %1460 = vadd.xlane.f32.xlu0 %v1459
  %v1461 = vpop.xlane.xlu0 %1460
  %v1462 = vrcp.pop %v1458
  %v1463 = vrcp.pop %v1461
  %v1464 = vmul.f32 %v1453, %v1462
  %v1465 = vmul.f32 %v1455, %v1463
  %1466 = vrot.lane.b32.xlu0 %v1278, 64
  %v1467 = vpop.permute.xlu0 %1466
  %v1470 = vsel %vm68, %v1464, 0
  %1472 = vmatprep.subr.mxu0 0.0
  %1473 = vmatpush1.msra.mxu0 0.0
  %1474 = vmatprep.subr.mxu0 0.0
  %1475 = vmatpush1.msra.mxu0 0.0
  %1476 = vmatprep.subr.mxu0 0.0
  %1477 = vmatpush1.msra.mxu0 0.0
  %1478 = vmatprep.subr.mxu0 0.0
  %1479 = vmatpush1.msra.mxu0 0.0
  %1480 = vmatprep.subr.mxu0 0.0
  %1481 = vmatpush1.msra.mxu0 0.0
  %1482 = vmatprep.subr.mxu0 0.0
  %1483 = vmatpush1.msra.mxu0 0.0
  %1484 = vmatprep.subr.mxu0 0.0
  %1485 = vmatpush1.msra.mxu0 0.0
  %1486 = vmatprep.subr.mxu0 0.0
  %1487 = vmatpush1.msra.mxu0 0.0
  %1488 = vmatprep.subr.mxu0 0.0
  %1489 = vmatpush1.msra.mxu0 0.0
  %1490 = vmatprep.subr.mxu0 0.0
  %1491 = vmatpush1.msra.mxu0 0.0
  %1492 = vmatprep.subr.mxu0 0.0
  %1493 = vmatpush1.msra.mxu0 0.0
  %1494 = vmatprep.subr.mxu0 0.0
  %1495 = vmatpush1.msra.mxu0 0.0
  %1496 = vmatprep.subr.mxu0 0.0
  %1497 = vmatpush1.msra.mxu0 0.0
  %1498 = vmatprep.subr.mxu0 0.0
  %1499 = vmatpush1.msra.mxu0 0.0
  %1500 = vmatprep.subr.mxu0 0.0
  %1501 = vmatpush1.msra.mxu0 0.0
  %1502 = vmatprep.subr.mxu0 0.0
  %1503 = vmatpush1.msra.mxu0 %v1467
  %1504 = vmatprep.subr.mxu0 0.0
  %1505 = vmatpush2.msra.mxu0 0.0
  %1506 = vmatprep.subr.mxu0 0.0
  %1507 = vmatpush2.msra.mxu0 0.0
  %1508 = vmatprep.subr.mxu0 0.0
  %1509 = vmatpush2.msra.mxu0 0.0
  %1510 = vmatprep.subr.mxu0 0.0
  %1511 = vmatpush2.msra.mxu0 0.0
  %1512 = vmatprep.subr.mxu0 0.0
  %1513 = vmatpush2.msra.mxu0 0.0
  %1514 = vmatprep.subr.mxu0 0.0
  %1515 = vmatpush2.msra.mxu0 0.0
  %1516 = vmatprep.subr.mxu0 0.0
  %1517 = vmatpush2.msra.mxu0 0.0
  %1518 = vmatprep.subr.mxu0 0.0
  %1519 = vmatpush2.msra.mxu0 0.0
  %1520 = vmatprep.subr.mxu0 0.0
  %1521 = vmatpush2.msra.mxu0 0.0
  %1522 = vmatprep.subr.mxu0 0.0
  %1523 = vmatpush2.msra.mxu0 0.0
  %1524 = vmatprep.subr.mxu0 0.0
  %1525 = vmatpush2.msra.mxu0 0.0
  %1526 = vmatprep.subr.mxu0 0.0
  %1527 = vmatpush2.msra.mxu0 0.0
  %1528 = vmatprep.subr.mxu0 0.0
  %1529 = vmatpush2.msra.mxu0 0.0
  %1530 = vmatprep.subr.mxu0 0.0
  %1531 = vmatpush2.msra.mxu0 0.0
  %1532 = vmatprep.subr.mxu0 0.0
  %1533 = vmatpush2.msra.mxu0 0.0
  %1534 = vmatprep.subr.mxu0 0.0
  %1535 = vmatpush2.msra.mxu0 0.0
  %1536 = vmatprep.mubr.f32.mxu0 0.0
  %1537 = vmatmul.mubr.f32.gmra.mxu0 %v1470
  %v1538 = vpop.f32.mrf.mxu0
  %v1539 = vadd.f32 0.0, %v1538
  %v1540 = vpop.f32.mrf.mxu0
  %1541 = vdwg.mxu0
  %1542 = vrot.lane.b32.xlu0 %v1283, 64
  %v1543 = vpop.permute.xlu0 %1542
  %v1546 = vsel %vm68, %v1465, 0
  %1548 = vmatprep.subr.mxu0 0.0
  %1549 = vmatpush1.msra.mxu0 0.0
  %1550 = vmatprep.subr.mxu0 0.0
  %1551 = vmatpush1.msra.mxu0 0.0
  %1552 = vmatprep.subr.mxu0 0.0
  %1553 = vmatpush1.msra.mxu0 0.0
  %1554 = vmatprep.subr.mxu0 0.0
  %1555 = vmatpush1.msra.mxu0 0.0
  %1556 = vmatprep.subr.mxu0 0.0
  %1557 = vmatpush1.msra.mxu0 0.0
  %1558 = vmatprep.subr.mxu0 0.0
  %1559 = vmatpush1.msra.mxu0 0.0
  %1560 = vmatprep.subr.mxu0 0.0
  %1561 = vmatpush1.msra.mxu0 0.0
  %1562 = vmatprep.subr.mxu0 0.0
  %1563 = vmatpush1.msra.mxu0 0.0
  %1564 = vmatprep.subr.mxu0 0.0
  %1565 = vmatpush1.msra.mxu0 0.0
  %1566 = vmatprep.subr.mxu0 0.0
  %1567 = vmatpush1.msra.mxu0 0.0
  %1568 = vmatprep.subr.mxu0 0.0
  %1569 = vmatpush1.msra.mxu0 0.0
  %1570 = vmatprep.subr.mxu0 0.0
  %1571 = vmatpush1.msra.mxu0 0.0
  %1572 = vmatprep.subr.mxu0 0.0
  %1573 = vmatpush1.msra.mxu0 0.0
  %1574 = vmatprep.subr.mxu0 0.0
  %1575 = vmatpush1.msra.mxu0 0.0
  %1576 = vmatprep.subr.mxu0 0.0
  %1577 = vmatpush1.msra.mxu0 0.0
  %1578 = vmatprep.subr.mxu0 0.0
  %1579 = vmatpush1.msra.mxu0 %v1543
  %1580 = vmatprep.subr.mxu0 0.0
  %1581 = vmatpush2.msra.mxu0 0.0
  %1582 = vmatprep.subr.mxu0 0.0
  %1583 = vmatpush2.msra.mxu0 0.0
  %1584 = vmatprep.subr.mxu0 0.0
  %1585 = vmatpush2.msra.mxu0 0.0
  %1586 = vmatprep.subr.mxu0 0.0
  %1587 = vmatpush2.msra.mxu0 0.0
  %1588 = vmatprep.subr.mxu0 0.0
  %1589 = vmatpush2.msra.mxu0 0.0
  %1590 = vmatprep.subr.mxu0 0.0
  %1591 = vmatpush2.msra.mxu0 0.0
  %1592 = vmatprep.subr.mxu0 0.0
  %1593 = vmatpush2.msra.mxu0 0.0
  %1594 = vmatprep.subr.mxu0 0.0
  %1595 = vmatpush2.msra.mxu0 0.0
  %1596 = vmatprep.subr.mxu0 0.0
  %1597 = vmatpush2.msra.mxu0 0.0
  %1598 = vmatprep.subr.mxu0 0.0
  %1599 = vmatpush2.msra.mxu0 0.0
  %1600 = vmatprep.subr.mxu0 0.0
  %1601 = vmatpush2.msra.mxu0 0.0
  %1602 = vmatprep.subr.mxu0 0.0
  %1603 = vmatpush2.msra.mxu0 0.0
  %1604 = vmatprep.subr.mxu0 0.0
  %1605 = vmatpush2.msra.mxu0 0.0
  %1606 = vmatprep.subr.mxu0 0.0
  %1607 = vmatpush2.msra.mxu0 0.0
  %1608 = vmatprep.subr.mxu0 0.0
  %1609 = vmatpush2.msra.mxu0 0.0
  %1610 = vmatprep.subr.mxu0 0.0
  %1611 = vmatpush2.msra.mxu0 0.0
  %1612 = vmatprep.mubr.f32.mxu0 0.0
  %1613 = vmatmul.mubr.f32.gmra.mxu0 %v1546
  %v1614 = vpop.f32.mrf.mxu0
  %v1615 = vadd.f32 0.0, %v1614
  %v1616 = vpop.f32.mrf.mxu0
  %1617 = vdwg.mxu0
  %s1618 = scalar_lea.vmem %s7, 32
  %v1619 = vld [vmem:[%s1618] sm:$0xff]
  %v1620 = vld [vmem:[%s1618 + $0x8] sm:$0xff]
  %v1621 = vld [vmem:[%s1618 + $0x10] sm:$0xff]
  %v1622 = vld [vmem:[%s1618 + $0x18] sm:$0xff]
  %s1623 = scalar_lea.vmem %s8, 1
  %v1624 = vld [vmem:[%s1623] sm:$0x1]
  %v1626 = vlaneseq
  %v1627 = vshrl.u32 %v1626, 7
  %v1628 = vsub.s32 0, %v1627
  %v1629 = vrot.slane %v1624, %v1628
  %v1632 = vsel %vm152, %v1539, 0
  %v1635 = vsel %vm152, %v1615, 0
  %1637 = vmatprep.subr.mxu0 0.0
  %1638 = vmatpush1.msra.mxu0 0.0
  %1639 = vmatprep.subr.mxu0 0.0
  %1640 = vmatpush1.msra.mxu0 0.0
  %1641 = vmatprep.subr.mxu0 0.0
  %1642 = vmatpush1.msra.mxu0 0.0
  %1643 = vmatprep.subr.mxu0 0.0
  %1644 = vmatpush1.msra.mxu0 0.0
  %1645 = vmatprep.subr.mxu0 0.0
  %1646 = vmatpush1.msra.mxu0 0.0
  %1647 = vmatprep.subr.mxu0 0.0
  %1648 = vmatpush1.msra.mxu0 0.0
  %1649 = vmatprep.subr.mxu0 0.0
  %1650 = vmatpush1.msra.mxu0 0.0
  %1651 = vmatprep.subr.mxu0 0.0
  %1652 = vmatpush1.msra.mxu0 0.0
  %1653 = vmatprep.subr.mxu0 0.0
  %1654 = vmatpush1.msra.mxu0 0.0
  %1655 = vmatprep.subr.mxu0 0.0
  %1656 = vmatpush1.msra.mxu0 0.0
  %1657 = vmatprep.subr.mxu0 0.0
  %1658 = vmatpush1.msra.mxu0 0.0
  %1659 = vmatprep.subr.mxu0 0.0
  %1660 = vmatpush1.msra.mxu0 0.0
  %1661 = vmatprep.subr.mxu0 0.0
  %1662 = vmatpush1.msra.mxu0 %v1622
  %1663 = vmatprep.subr.mxu0 0.0
  %1664 = vmatpush1.msra.mxu0 %v1621
  %1665 = vmatprep.subr.mxu0 0.0
  %1666 = vmatpush1.msra.mxu0 %v1620
  %1667 = vmatprep.subr.mxu0 0.0
  %1668 = vmatpush1.msra.mxu0 %v1619
  %1669 = vmatprep.subr.mxu0 0.0
  %1670 = vmatpush2.msra.mxu0 0.0
  %1671 = vmatprep.subr.mxu0 0.0
  %1672 = vmatpush2.msra.mxu0 0.0
  %1673 = vmatprep.subr.mxu0 0.0
  %1674 = vmatpush2.msra.mxu0 0.0
  %1675 = vmatprep.subr.mxu0 0.0
  %1676 = vmatpush2.msra.mxu0 0.0
  %1677 = vmatprep.subr.mxu0 0.0
  %1678 = vmatpush2.msra.mxu0 0.0
  %1679 = vmatprep.subr.mxu0 0.0
  %1680 = vmatpush2.msra.mxu0 0.0
  %1681 = vmatprep.subr.mxu0 0.0
  %1682 = vmatpush2.msra.mxu0 0.0
  %1683 = vmatprep.subr.mxu0 0.0
  %1684 = vmatpush2.msra.mxu0 0.0
  %1685 = vmatprep.subr.mxu0 0.0
  %1686 = vmatpush2.msra.mxu0 0.0
  %1687 = vmatprep.subr.mxu0 0.0
  %1688 = vmatpush2.msra.mxu0 0.0
  %1689 = vmatprep.subr.mxu0 0.0
  %1690 = vmatpush2.msra.mxu0 0.0
  %1691 = vmatprep.subr.mxu0 0.0
  %1692 = vmatpush2.msra.mxu0 0.0
  %1693 = vmatprep.subr.mxu0 0.0
  %1694 = vmatpush2.msra.mxu0 0.0
  %1695 = vmatprep.subr.mxu0 0.0
  %1696 = vmatpush2.msra.mxu0 0.0
  %1697 = vmatprep.subr.mxu0 0.0
  %1698 = vmatpush2.msra.mxu0 0.0
  %1699 = vmatprep.subr.mxu0 0.0
  %1700 = vmatpush2.msra.mxu0 0.0
  %1701 = vmatprep.mubr.f32.mxu0 0.0
  %1702 = vmatmul.mubr.f32.gmra.mxu0 %v1632
  %v1703 = vpop.f32.mrf.mxu0
  %v1704 = vadd.f32 %v1629, %v1703
  %v1705 = vpop.f32.mrf.mxu0
  %1706 = vmatprep.mubr.f32.mxu0 0.0
  %1707 = vmatmul.mubr.f32.gmra.mxu0 %v1635
  %v1708 = vpop.f32.mrf.mxu0
  %v1709 = vadd.f32 %v1629, %v1708
  %v1710 = vpop.f32.mrf.mxu0
  %1711 = vdwg.mxu0
  %v1712 = vadd.f32 %v1057, %v1704
  %v1713 = vadd.f32 %v1058, %v1709
  %v1714 = vsel %vm152, %v1712, 0.0
  %1715 = vadd.xlane.f32.xlu0 %v1714
  %v1716 = vpop.xlane.xlu0 %1715
  %v1717 = vsel %vm152, %v1713, 0.0
  %1718 = vadd.xlane.f32.xlu0 %v1717
  %v1719 = vpop.xlane.xlu0 %1718
  %v1720 = vmul.f32 %v1716, %v156
  %v1721 = vmul.f32 %v1719, %v156
  %v1722 = vsub.f32 %v1712, %v1720
  %v1723 = vsub.f32 %v1713, %v1721
  %v1724 = vmul.f32 %v1722, %v1722
  %v1725 = vmul.f32 %v1723, %v1723
  %v1726 = vsel %vm152, %v1724, 0.0
  %1727 = vadd.xlane.f32.xlu0 %v1726
  %v1728 = vpop.xlane.xlu0 %1727
  %v1729 = vsel %vm152, %v1725, 0.0
  %1730 = vadd.xlane.f32.xlu0 %v1729
  %v1731 = vpop.xlane.xlu0 %1730
  %v1732 = vmul.f32 %v1728, %v156
  %v1733 = vmul.f32 %v1731, %v156
  %v1734 = vadd.f32 %v1732, 1e-05
  %v1735 = vadd.f32 %v1733, 1e-05
  %v1736 = vrsqrt.pop %v1734
  %v1737 = vrsqrt.pop %v1735
  %v1738 = vmul.f32 %v1722, %v1736
  %v1739 = vmul.f32 %v1723, %v1737
  %v1740 = vlaneseq
  %v1741 = vshrl.u32 %v1740, 7
  %v1742 = vsub.s32 4, %v1741
  %v1743 = vrot.slane %v1060, %v1742
  %v1744 = vmul.f32 %v1738, %v1743
  %v1745 = vmul.f32 %v1739, %v1743
  %v1746 = vlaneseq
  %v1747 = vshrl.u32 %v1746, 7
  %v1748 = vsub.s32 5, %v1747
  %v1749 = vrot.slane %v1060, %v1748
  %v1750 = vadd.f32 %v1744, %v1749
  %v1751 = vadd.f32 %v1745, %v1749
  %s1752 = scalar_lea.vmem %s9, 32
  %v1753 = vld [vmem:[%s1752] sm:$0xff]
  %v1754 = vld [vmem:[%s1752 + $0x8] sm:$0xff]
  %v1755 = vld [vmem:[%s1752 + $0x10] sm:$0xff]
  %v1756 = vld [vmem:[%s1752 + $0x18] sm:$0xff]
  %s1757 = scalar_lea.vmem %s10, 1
  %v1758 = vld [vmem:[%s1757] sm:$0x1]
  %v1760 = vlaneseq
  %v1761 = vshrl.u32 %v1760, 7
  %v1762 = vsub.s32 0, %v1761
  %v1763 = vrot.slane %v1758, %v1762
  %v1766 = vsel %vm152, %v1750, 0
  %v1769 = vsel %vm152, %v1751, 0
  %1771 = vmatprep.subr.mxu0 0.0
  %1772 = vmatpush1.msra.mxu0 0.0
  %1773 = vmatprep.subr.mxu0 0.0
  %1774 = vmatpush1.msra.mxu0 0.0
  %1775 = vmatprep.subr.mxu0 0.0
  %1776 = vmatpush1.msra.mxu0 0.0
  %1777 = vmatprep.subr.mxu0 0.0
  %1778 = vmatpush1.msra.mxu0 0.0
  %1779 = vmatprep.subr.mxu0 0.0
  %1780 = vmatpush1.msra.mxu0 0.0
  %1781 = vmatprep.subr.mxu0 0.0
  %1782 = vmatpush1.msra.mxu0 0.0
  %1783 = vmatprep.subr.mxu0 0.0
  %1784 = vmatpush1.msra.mxu0 0.0
  %1785 = vmatprep.subr.mxu0 0.0
  %1786 = vmatpush1.msra.mxu0 0.0
  %1787 = vmatprep.subr.mxu0 0.0
  %1788 = vmatpush1.msra.mxu0 0.0
  %1789 = vmatprep.subr.mxu0 0.0
  %1790 = vmatpush1.msra.mxu0 0.0
  %1791 = vmatprep.subr.mxu0 0.0
  %1792 = vmatpush1.msra.mxu0 0.0
  %1793 = vmatprep.subr.mxu0 0.0
  %1794 = vmatpush1.msra.mxu0 0.0
  %1795 = vmatprep.subr.mxu0 0.0
  %1796 = vmatpush1.msra.mxu0 %v1756
  %1797 = vmatprep.subr.mxu0 0.0
  %1798 = vmatpush1.msra.mxu0 %v1755
  %1799 = vmatprep.subr.mxu0 0.0
  %1800 = vmatpush1.msra.mxu0 %v1754
  %1801 = vmatprep.subr.mxu0 0.0
  %1802 = vmatpush1.msra.mxu0 %v1753
  %1803 = vmatprep.subr.mxu0 0.0
  %1804 = vmatpush2.msra.mxu0 0.0
  %1805 = vmatprep.subr.mxu0 0.0
  %1806 = vmatpush2.msra.mxu0 0.0
  %1807 = vmatprep.subr.mxu0 0.0
  %1808 = vmatpush2.msra.mxu0 0.0
  %1809 = vmatprep.subr.mxu0 0.0
  %1810 = vmatpush2.msra.mxu0 0.0
  %1811 = vmatprep.subr.mxu0 0.0
  %1812 = vmatpush2.msra.mxu0 0.0
  %1813 = vmatprep.subr.mxu0 0.0
  %1814 = vmatpush2.msra.mxu0 0.0
  %1815 = vmatprep.subr.mxu0 0.0
  %1816 = vmatpush2.msra.mxu0 0.0
  %1817 = vmatprep.subr.mxu0 0.0
  %1818 = vmatpush2.msra.mxu0 0.0
  %1819 = vmatprep.subr.mxu0 0.0
  %1820 = vmatpush2.msra.mxu0 0.0
  %1821 = vmatprep.subr.mxu0 0.0
  %1822 = vmatpush2.msra.mxu0 0.0
  %1823 = vmatprep.subr.mxu0 0.0
  %1824 = vmatpush2.msra.mxu0 0.0
  %1825 = vmatprep.subr.mxu0 0.0
  %1826 = vmatpush2.msra.mxu0 0.0
  %1827 = vmatprep.subr.mxu0 0.0
  %1828 = vmatpush2.msra.mxu0 0.0
  %1829 = vmatprep.subr.mxu0 0.0
  %1830 = vmatpush2.msra.mxu0 0.0
  %1831 = vmatprep.subr.mxu0 0.0
  %1832 = vmatpush2.msra.mxu0 0.0
  %1833 = vmatprep.subr.mxu0 0.0
  %1834 = vmatpush2.msra.mxu0 0.0
  %1835 = vmatprep.mubr.f32.mxu0 0.0
  %1836 = vmatmul.mubr.f32.gmra.mxu0 %v1766
  %v1837 = vpop.f32.mrf.mxu0
  %v1838 = vadd.f32 %v1763, %v1837
  %v1839 = vpop.f32.mrf.mxu0
  %1840 = vmatprep.mubr.f32.mxu0 0.0
  %1841 = vmatmul.mubr.f32.gmra.mxu0 %v1769
  %v1842 = vpop.f32.mrf.mxu0
  %v1843 = vadd.f32 %v1763, %v1842
  %v1844 = vpop.f32.mrf.mxu0
  %1845 = vdwg.mxu0
  %v1846 = vmul.f32 %v1838, %v1838
  %v1847 = vmul.f32 %v1843, %v1843
  %v1848 = vmul.f32 %v1838, %v1846
  %v1849 = vmul.f32 %v1843, %v1847
  %v1850 = vmul.f32 %v1848, 0.044715
  %v1851 = vmul.f32 %v1849, 0.044715
  %v1852 = vadd.f32 %v1838, %v1850
  %v1853 = vadd.f32 %v1843, %v1851
  %v1854 = vmul.f32 %v1852, 0.7978846
  %v1855 = vmul.f32 %v1853, 0.7978846
  %v1856 = vtanh.pop %v1854
  %v1857 = vtanh.pop %v1855
  %v1858 = vadd.f32 %v1856, 1.0
  %v1859 = vadd.f32 %v1857, 1.0
  %v1860 = vmul.f32 %v1858, 0.5
  %v1861 = vmul.f32 %v1859, 0.5
  %v1862 = vmul.f32 %v1838, %v1860
  %v1863 = vmul.f32 %v1843, %v1861
  %s1864 = scalar_lea.vmem %s11, 128
  %v1865 = vld [vmem:[%s1864] sm:$0xff]
  %v1866 = vld [vmem:[%s1864 + $0x8] sm:$0xff]
  %v1867 = vld [vmem:[%s1864 + $0x10] sm:$0xff]
  %v1868 = vld [vmem:[%s1864 + $0x18] sm:$0xff]
  %v1869 = vld [vmem:[%s1864 + $0x20] sm:$0xff]
  %v1870 = vld [vmem:[%s1864 + $0x28] sm:$0xff]
  %v1871 = vld [vmem:[%s1864 + $0x30] sm:$0xff]
  %v1872 = vld [vmem:[%s1864 + $0x38] sm:$0xff]
  %v1873 = vld [vmem:[%s1864 + $0x40] sm:$0xff]
  %v1874 = vld [vmem:[%s1864 + $0x48] sm:$0xff]
  %v1875 = vld [vmem:[%s1864 + $0x50] sm:$0xff]
  %v1876 = vld [vmem:[%s1864 + $0x58] sm:$0xff]
  %v1877 = vld [vmem:[%s1864 + $0x60] sm:$0xff]
  %v1878 = vld [vmem:[%s1864 + $0x68] sm:$0xff]
  %v1879 = vld [vmem:[%s1864 + $0x70] sm:$0xff]
  %v1880 = vld [vmem:[%s1864 + $0x78] sm:$0xff]
  %s1881 = scalar_lea.vmem %s12, 1
  %v1882 = vld [vmem:[%s1881] sm:$0x1]
  %v1884 = vlaneseq
  %v1885 = vshrl.u32 %v1884, 7
  %v1886 = vsub.s32 0, %v1885
  %v1887 = vrot.slane %v1882, %v1886
  %1889 = vmatprep.subr.mxu0 0.0
  %1890 = vmatpush1.msra.mxu0 %v1880
  %1891 = vmatprep.subr.mxu0 0.0
  %1892 = vmatpush1.msra.mxu0 %v1879
  %1893 = vmatprep.subr.mxu0 0.0
  %1894 = vmatpush1.msra.mxu0 %v1878
  %1895 = vmatprep.subr.mxu0 0.0
  %1896 = vmatpush1.msra.mxu0 %v1877
  %1897 = vmatprep.subr.mxu0 0.0
  %1898 = vmatpush1.msra.mxu0 %v1876
  %1899 = vmatprep.subr.mxu0 0.0
  %1900 = vmatpush1.msra.mxu0 %v1875
  %1901 = vmatprep.subr.mxu0 0.0
  %1902 = vmatpush1.msra.mxu0 %v1874
  %1903 = vmatprep.subr.mxu0 0.0
  %1904 = vmatpush1.msra.mxu0 %v1873
  %1905 = vmatprep.subr.mxu0 0.0
  %1906 = vmatpush1.msra.mxu0 %v1872
  %1907 = vmatprep.subr.mxu0 0.0
  %1908 = vmatpush1.msra.mxu0 %v1871
  %1909 = vmatprep.subr.mxu0 0.0
  %1910 = vmatpush1.msra.mxu0 %v1870
  %1911 = vmatprep.subr.mxu0 0.0
  %1912 = vmatpush1.msra.mxu0 %v1869
  %1913 = vmatprep.subr.mxu0 0.0
  %1914 = vmatpush1.msra.mxu0 %v1868
  %1915 = vmatprep.subr.mxu0 0.0
  %1916 = vmatpush1.msra.mxu0 %v1867
  %1917 = vmatprep.subr.mxu0 0.0
  %1918 = vmatpush1.msra.mxu0 %v1866
  %1919 = vmatprep.subr.mxu0 0.0
  %1920 = vmatpush1.msra.mxu0 %v1865
  %1921 = vmatprep.subr.mxu0 0.0
  %1922 = vmatpush2.msra.mxu0 0.0
  %1923 = vmatprep.subr.mxu0 0.0
  %1924 = vmatpush2.msra.mxu0 0.0
  %1925 = vmatprep.subr.mxu0 0.0
  %1926 = vmatpush2.msra.mxu0 0.0
  %1927 = vmatprep.subr.mxu0 0.0
  %1928 = vmatpush2.msra.mxu0 0.0
  %1929 = vmatprep.subr.mxu0 0.0
  %1930 = vmatpush2.msra.mxu0 0.0
  %1931 = vmatprep.subr.mxu0 0.0
  %1932 = vmatpush2.msra.mxu0 0.0
  %1933 = vmatprep.subr.mxu0 0.0
  %1934 = vmatpush2.msra.mxu0 0.0
  %1935 = vmatprep.subr.mxu0 0.0
  %1936 = vmatpush2.msra.mxu0 0.0
  %1937 = vmatprep.subr.mxu0 0.0
  %1938 = vmatpush2.msra.mxu0 0.0
  %1939 = vmatprep.subr.mxu0 0.0
  %1940 = vmatpush2.msra.mxu0 0.0
  %1941 = vmatprep.subr.mxu0 0.0
  %1942 = vmatpush2.msra.mxu0 0.0
  %1943 = vmatprep.subr.mxu0 0.0
  %1944 = vmatpush2.msra.mxu0 0.0
  %1945 = vmatprep.subr.mxu0 0.0
  %1946 = vmatpush2.msra.mxu0 0.0
  %1947 = vmatprep.subr.mxu0 0.0
  %1948 = vmatpush2.msra.mxu0 0.0
  %1949 = vmatprep.subr.mxu0 0.0
  %1950 = vmatpush2.msra.mxu0 0.0
  %1951 = vmatprep.subr.mxu0 0.0
  %1952 = vmatpush2.msra.mxu0 0.0
  %1953 = vmatprep.mubr.f32.mxu0 0.0
  %1954 = vmatmul.mubr.f32.gmra.mxu0 %v1862
  %v1955 = vpop.f32.mrf.mxu0
  %v1956 = vadd.f32 %v1887, %v1955
  %v1957 = vpop.f32.mrf.mxu0
  %1958 = vmatprep.mubr.f32.mxu0 0.0
  %1959 = vmatmul.mubr.f32.gmra.mxu0 %v1863
  %v1960 = vpop.f32.mrf.mxu0
  %v1961 = vadd.f32 %v1887, %v1960
  %v1962 = vpop.f32.mrf.mxu0
  %1963 = vdwg.mxu0
  %v1964 = vadd.f32 %v1712, %v1956
  %v1965 = vadd.f32 %v1713, %v1961
  %s1966 = scalar_lea.vmem %s4, 16
  %v1967 = vld [vmem:[%s1966] sm:$0x3f]
  %v1968 = vsel %vm152, %v1964, 0.0
  %1969 = vadd.xlane.f32.xlu0 %v1968
  %v1970 = vpop.xlane.xlu0 %1969
  %v1971 = vsel %vm152, %v1965, 0.0
  %1972 = vadd.xlane.f32.xlu0 %v1971
  %v1973 = vpop.xlane.xlu0 %1972
  %v1974 = vmul.f32 %v1970, %v156
  %v1975 = vmul.f32 %v1973, %v156
  %v1976 = vsub.f32 %v1964, %v1974
  %v1977 = vsub.f32 %v1965, %v1975
  %v1978 = vmul.f32 %v1976, %v1976
  %v1979 = vmul.f32 %v1977, %v1977
  %v1980 = vsel %vm152, %v1978, 0.0
  %1981 = vadd.xlane.f32.xlu0 %v1980
  %v1982 = vpop.xlane.xlu0 %1981
  %v1983 = vsel %vm152, %v1979, 0.0
  %1984 = vadd.xlane.f32.xlu0 %v1983
  %v1985 = vpop.xlane.xlu0 %1984
  %v1986 = vmul.f32 %v1982, %v156
  %v1987 = vmul.f32 %v1985, %v156
  %v1988 = vadd.f32 %v1986, 1e-05
  %v1989 = vadd.f32 %v1987, 1e-05
  %v1990 = vrsqrt.pop %v1988
  %v1991 = vrsqrt.pop %v1989
  %v1992 = vmul.f32 %v1976, %v1990
  %v1993 = vmul.f32 %v1977, %v1991
  %v1994 = vlaneseq
  %v1995 = vshrl.u32 %v1994, 7
  %v1996 = vsub.s32 0, %v1995
  %v1997 = vrot.slane %v1967, %v1996
  %v1998 = vmul.f32 %v1992, %v1997
  %v1999 = vmul.f32 %v1993, %v1997
  %v2000 = vlaneseq
  %v2001 = vshrl.u32 %v2000, 7
  %v2002 = vsub.s32 1, %v2001
  %v2003 = vrot.slane %v1967, %v2002
  %v2004 = vadd.f32 %v1998, %v2003
  %v2005 = vadd.f32 %v1999, %v2003
  %v2006 = vlaneseq
  %v2007 = vshrl.u32 %v2006, 7
  %v2008 = vsub.s32 2, %v2007
  %v2009 = vrot.slane %v1967, %v2008
  %v2010 = vmul.f32 %v1992, %v2009
  %v2011 = vmul.f32 %v1993, %v2009
  %v2012 = vlaneseq
  %v2013 = vshrl.u32 %v2012, 7
  %v2014 = vsub.s32 3, %v2013
  %v2015 = vrot.slane %v1967, %v2014
  %v2016 = vadd.f32 %v2010, %v2015
  %v2017 = vadd.f32 %v2011, %v2015
  %s2018 = scalar_lea.vmem %s5, 64
  %v2019 = vld [vmem:[%s2018] sm:$0xff]
  %v2020 = vld [vmem:[%s2018 + $0x8] sm:$0xff]
  %v2021 = vld [vmem:[%s2018 + $0x10] sm:$0xff]
  %v2022 = vld [vmem:[%s2018 + $0x18] sm:$0xff]
  %s2023 = scalar_lea.vmem %s6, 2
  %v2024 = vld [vmem:[%s2023] sm:$0x1]
  %v2026 = vlaneseq
  %v2027 = vshrl.u32 %v2026, 7
  %v2028 = vsub.s32 0, %v2027
  %v2029 = vrot.slane %v2024, %v2028
  %v2032 = vsel %vm152, %v2004, 0
  %v2035 = vsel %vm152, %v2005, 0
  %2037 = vmatprep.subr.mxu0 0.0
  %2038 = vmatpush1.msra.mxu0 0.0
  %2039 = vmatprep.subr.mxu0 0.0
  %2040 = vmatpush1.msra.mxu0 0.0
  %2041 = vmatprep.subr.mxu0 0.0
  %2042 = vmatpush1.msra.mxu0 0.0
  %2043 = vmatprep.subr.mxu0 0.0
  %2044 = vmatpush1.msra.mxu0 0.0
  %2045 = vmatprep.subr.mxu0 0.0
  %2046 = vmatpush1.msra.mxu0 0.0
  %2047 = vmatprep.subr.mxu0 0.0
  %2048 = vmatpush1.msra.mxu0 0.0
  %2049 = vmatprep.subr.mxu0 0.0
  %2050 = vmatpush1.msra.mxu0 0.0
  %2051 = vmatprep.subr.mxu0 0.0
  %2052 = vmatpush1.msra.mxu0 0.0
  %2053 = vmatprep.subr.mxu0 0.0
  %2054 = vmatpush1.msra.mxu0 0.0
  %2055 = vmatprep.subr.mxu0 0.0
  %2056 = vmatpush1.msra.mxu0 0.0
  %2057 = vmatprep.subr.mxu0 0.0
  %2058 = vmatpush1.msra.mxu0 0.0
  %2059 = vmatprep.subr.mxu0 0.0
  %2060 = vmatpush1.msra.mxu0 0.0
  %2061 = vmatprep.subr.mxu0 0.0
  %2062 = vmatpush1.msra.mxu0 %v2022
  %2063 = vmatprep.subr.mxu0 0.0
  %2064 = vmatpush1.msra.mxu0 %v2021
  %2065 = vmatprep.subr.mxu0 0.0
  %2066 = vmatpush1.msra.mxu0 %v2020
  %2067 = vmatprep.subr.mxu0 0.0
  %2068 = vmatpush1.msra.mxu0 %v2019
  %2069 = vmatprep.subr.mxu0 0.0
  %2070 = vmatpush2.msra.mxu0 0.0
  %2071 = vmatprep.subr.mxu0 0.0
  %2072 = vmatpush2.msra.mxu0 0.0
  %2073 = vmatprep.subr.mxu0 0.0
  %2074 = vmatpush2.msra.mxu0 0.0
  %2075 = vmatprep.subr.mxu0 0.0
  %2076 = vmatpush2.msra.mxu0 0.0
  %2077 = vmatprep.subr.mxu0 0.0
  %2078 = vmatpush2.msra.mxu0 0.0
  %2079 = vmatprep.subr.mxu0 0.0
  %2080 = vmatpush2.msra.mxu0 0.0
  %2081 = vmatprep.subr.mxu0 0.0
  %2082 = vmatpush2.msra.mxu0 0.0
  %2083 = vmatprep.subr.mxu0 0.0
  %2084 = vmatpush2.msra.mxu0 0.0
  %2085 = vmatprep.subr.mxu0 0.0
  %2086 = vmatpush2.msra.mxu0 0.0
  %2087 = vmatprep.subr.mxu0 0.0
  %2088 = vmatpush2.msra.mxu0 0.0
  %2089 = vmatprep.subr.mxu0 0.0
  %2090 = vmatpush2.msra.mxu0 0.0
  %2091 = vmatprep.subr.mxu0 0.0
  %2092 = vmatpush2.msra.mxu0 0.0
  %2093 = vmatprep.subr.mxu0 0.0
  %2094 = vmatpush2.msra.mxu0 0.0
  %2095 = vmatprep.subr.mxu0 0.0
  %2096 = vmatpush2.msra.mxu0 0.0
  %2097 = vmatprep.subr.mxu0 0.0
  %2098 = vmatpush2.msra.mxu0 0.0
  %2099 = vmatprep.subr.mxu0 0.0
  %2100 = vmatpush2.msra.mxu0 0.0
  %2101 = vmatprep.mubr.f32.mxu0 0.0
  %2102 = vmatmul.mubr.f32.gmra.mxu0 %v2032
  %v2103 = vpop.f32.mrf.mxu0
  %v2104 = vadd.f32 %v2029, %v2103
  %v2105 = vpop.f32.mrf.mxu0
  %2106 = vmatprep.mubr.f32.mxu0 0.0
  %2107 = vmatmul.mubr.f32.gmra.mxu0 %v2035
  %v2108 = vpop.f32.mrf.mxu0
  %v2109 = vadd.f32 %v2029, %v2108
  %v2110 = vpop.f32.mrf.mxu0
  %2111 = vdwg.mxu0
  %v2113 = vsel %vm152, %v2016, 0
  %v2116 = vsel %vm152, %v2017, 0
  %2118 = vmatprep.subr.mxu0 0.0
  %2119 = vmatpush1.msra.mxu0 0.0
  %2120 = vmatprep.subr.mxu0 0.0
  %2121 = vmatpush1.msra.mxu0 0.0
  %2122 = vmatprep.subr.mxu0 0.0
  %2123 = vmatpush1.msra.mxu0 0.0
  %2124 = vmatprep.subr.mxu0 0.0
  %2125 = vmatpush1.msra.mxu0 0.0
  %2126 = vmatprep.subr.mxu0 0.0
  %2127 = vmatpush1.msra.mxu0 0.0
  %2128 = vmatprep.subr.mxu0 0.0
  %2129 = vmatpush1.msra.mxu0 0.0
  %2130 = vmatprep.subr.mxu0 0.0
  %2131 = vmatpush1.msra.mxu0 0.0
  %2132 = vmatprep.subr.mxu0 0.0
  %2133 = vmatpush1.msra.mxu0 0.0
  %2134 = vmatprep.subr.mxu0 0.0
  %2135 = vmatpush1.msra.mxu0 0.0
  %2136 = vmatprep.subr.mxu0 0.0
  %2137 = vmatpush1.msra.mxu0 0.0
  %2138 = vmatprep.subr.mxu0 0.0
  %2139 = vmatpush1.msra.mxu0 0.0
  %2140 = vmatprep.subr.mxu0 0.0
  %2141 = vmatpush1.msra.mxu0 0.0
  %2142 = vmatprep.subr.mxu0 0.0
  %2143 = vmatpush1.msra.mxu0 %v2022
  %2144 = vmatprep.subr.mxu0 0.0
  %2145 = vmatpush1.msra.mxu0 %v2021
  %2146 = vmatprep.subr.mxu0 0.0
  %2147 = vmatpush1.msra.mxu0 %v2020
  %2148 = vmatprep.subr.mxu0 0.0
  %2149 = vmatpush1.msra.mxu0 %v2019
  %2150 = vmatprep.subr.mxu0 0.0
  %2151 = vmatpush2.msra.mxu0 0.0
  %2152 = vmatprep.subr.mxu0 0.0
  %2153 = vmatpush2.msra.mxu0 0.0
  %2154 = vmatprep.subr.mxu0 0.0
  %2155 = vmatpush2.msra.mxu0 0.0
  %2156 = vmatprep.subr.mxu0 0.0
  %2157 = vmatpush2.msra.mxu0 0.0
  %2158 = vmatprep.subr.mxu0 0.0
  %2159 = vmatpush2.msra.mxu0 0.0
  %2160 = vmatprep.subr.mxu0 0.0
  %2161 = vmatpush2.msra.mxu0 0.0
  %2162 = vmatprep.subr.mxu0 0.0
  %2163 = vmatpush2.msra.mxu0 0.0
  %2164 = vmatprep.subr.mxu0 0.0
  %2165 = vmatpush2.msra.mxu0 0.0
  %2166 = vmatprep.subr.mxu0 0.0
  %2167 = vmatpush2.msra.mxu0 0.0
  %2168 = vmatprep.subr.mxu0 0.0
  %2169 = vmatpush2.msra.mxu0 0.0
  %2170 = vmatprep.subr.mxu0 0.0
  %2171 = vmatpush2.msra.mxu0 0.0
  %2172 = vmatprep.subr.mxu0 0.0
  %2173 = vmatpush2.msra.mxu0 0.0
  %2174 = vmatprep.subr.mxu0 0.0
  %2175 = vmatpush2.msra.mxu0 0.0
  %2176 = vmatprep.subr.mxu0 0.0
  %2177 = vmatpush2.msra.mxu0 0.0
  %2178 = vmatprep.subr.mxu0 0.0
  %2179 = vmatpush2.msra.mxu0 0.0
  %2180 = vmatprep.subr.mxu0 0.0
  %2181 = vmatpush2.msra.mxu0 0.0
  %2182 = vmatprep.mubr.f32.mxu0 0.0
  %2183 = vmatmul.mubr.f32.gmra.mxu0 %v2113
  %v2184 = vpop.f32.mrf.mxu0
  %v2185 = vadd.f32 %v2029, %v2184
  %v2186 = vpop.f32.mrf.mxu0
  %2187 = vmatprep.mubr.f32.mxu0 0.0
  %2188 = vmatmul.mubr.f32.gmra.mxu0 %v2116
  %v2189 = vpop.f32.mrf.mxu0
  %v2190 = vadd.f32 %v2029, %v2189
  %v2191 = vpop.f32.mrf.mxu0
  %2192 = vdwg.mxu0
  %2194 = vrot.lane.b32.xlu0 %v2185, 96
  %v2195 = vpop.permute.xlu0 %2194
  %v2197 = vsel %vm152, %v2104, 0
  %v2199 = vsel %vm152, %v2195, 0
  %2201 = vmatprep.subr.mxu0 0.0
  %2202 = vmatpush1.xpose.msra.mxu0 0.0
  %2203 = vmatprep.subr.mxu0 0.0
  %2204 = vmatpush1.xpose.msra.mxu0 0.0
  %2205 = vmatprep.subr.mxu0 0.0
  %2206 = vmatpush1.xpose.msra.mxu0 0.0
  %2207 = vmatprep.subr.mxu0 0.0
  %2208 = vmatpush1.xpose.msra.mxu0 0.0
  %2209 = vmatprep.subr.mxu0 0.0
  %2210 = vmatpush1.xpose.msra.mxu0 0.0
  %2211 = vmatprep.subr.mxu0 0.0
  %2212 = vmatpush1.xpose.msra.mxu0 0.0
  %2213 = vmatprep.subr.mxu0 0.0
  %2214 = vmatpush1.xpose.msra.mxu0 0.0
  %2215 = vmatprep.subr.mxu0 0.0
  %2216 = vmatpush1.xpose.msra.mxu0 0.0
  %2217 = vmatprep.subr.mxu0 0.0
  %2218 = vmatpush1.xpose.msra.mxu0 0.0
  %2219 = vmatprep.subr.mxu0 0.0
  %2220 = vmatpush1.xpose.msra.mxu0 0.0
  %2221 = vmatprep.subr.mxu0 0.0
  %2222 = vmatpush1.xpose.msra.mxu0 0.0
  %2223 = vmatprep.subr.mxu0 0.0
  %2224 = vmatpush1.xpose.msra.mxu0 0.0
  %2225 = vmatprep.subr.mxu0 0.0
  %2226 = vmatpush1.xpose.msra.mxu0 0.0
  %2227 = vmatprep.subr.mxu0 0.0
  %2228 = vmatpush1.xpose.msra.mxu0 0.0
  %2229 = vmatprep.subr.mxu0 0.0
  %2230 = vmatpush1.xpose.msra.mxu0 0.0
  %2231 = vmatprep.subr.mxu0 0.0
  %2232 = vmatpush1.xpose.msra.mxu0 %v2199
  %2233 = vmatprep.subr.mxu0 0.0
  %2234 = vmatpush2.xpose.msra.mxu0 0.0
  %2235 = vmatprep.subr.mxu0 0.0
  %2236 = vmatpush2.xpose.msra.mxu0 0.0
  %2237 = vmatprep.subr.mxu0 0.0
  %2238 = vmatpush2.xpose.msra.mxu0 0.0
  %2239 = vmatprep.subr.mxu0 0.0
  %2240 = vmatpush2.xpose.msra.mxu0 0.0
  %2241 = vmatprep.subr.mxu0 0.0
  %2242 = vmatpush2.xpose.msra.mxu0 0.0
  %2243 = vmatprep.subr.mxu0 0.0
  %2244 = vmatpush2.xpose.msra.mxu0 0.0
  %2245 = vmatprep.subr.mxu0 0.0
  %2246 = vmatpush2.xpose.msra.mxu0 0.0
  %2247 = vmatprep.subr.mxu0 0.0
  %2248 = vmatpush2.xpose.msra.mxu0 0.0
  %2249 = vmatprep.subr.mxu0 0.0
  %2250 = vmatpush2.xpose.msra.mxu0 0.0
  %2251 = vmatprep.subr.mxu0 0.0
  %2252 = vmatpush2.xpose.msra.mxu0 0.0
  %2253 = vmatprep.subr.mxu0 0.0
  %2254 = vmatpush2.xpose.msra.mxu0 0.0
  %2255 = vmatprep.subr.mxu0 0.0
  %2256 = vmatpush2.xpose.msra.mxu0 0.0
  %2257 = vmatprep.subr.mxu0 0.0
  %2258 = vmatpush2.xpose.msra.mxu0 0.0
  %2259 = vmatprep.subr.mxu0 0.0
  %2260 = vmatpush2.xpose.msra.mxu0 0.0
  %2261 = vmatprep.subr.mxu0 0.0
  %2262 = vmatpush2.xpose.msra.mxu0 0.0
  %2263 = vmatprep.subr.mxu0 0.0
  %2264 = vmatpush2.xpose.msra.mxu0 0.0
  %2265 = vmatprep.mubr.f32.mxu0 0.0
  %2266 = vmatmul.mubr.f32.gmra.mxu0 %v2197
  %v2267 = vpop.f32.mrf.mxu0
  %v2268 = vadd.f32 0.0, %v2267
  %v2269 = vpop.f32.mrf.mxu0
  %2270 = vdwg.mxu0
  %2272 = vrot.lane.b32.xlu0 %v2190, 96
  %v2273 = vpop.permute.xlu0 %2272
  %v2275 = vsel %vm152, %v2109, 0
  %v2277 = vsel %vm152, %v2273, 0
  %2279 = vmatprep.subr.mxu0 0.0
  %2280 = vmatpush1.xpose.msra.mxu0 0.0
  %2281 = vmatprep.subr.mxu0 0.0
  %2282 = vmatpush1.xpose.msra.mxu0 0.0
  %2283 = vmatprep.subr.mxu0 0.0
  %2284 = vmatpush1.xpose.msra.mxu0 0.0
  %2285 = vmatprep.subr.mxu0 0.0
  %2286 = vmatpush1.xpose.msra.mxu0 0.0
  %2287 = vmatprep.subr.mxu0 0.0
  %2288 = vmatpush1.xpose.msra.mxu0 0.0
  %2289 = vmatprep.subr.mxu0 0.0
  %2290 = vmatpush1.xpose.msra.mxu0 0.0
  %2291 = vmatprep.subr.mxu0 0.0
  %2292 = vmatpush1.xpose.msra.mxu0 0.0
  %2293 = vmatprep.subr.mxu0 0.0
  %2294 = vmatpush1.xpose.msra.mxu0 0.0
  %2295 = vmatprep.subr.mxu0 0.0
  %2296 = vmatpush1.xpose.msra.mxu0 0.0
  %2297 = vmatprep.subr.mxu0 0.0
  %2298 = vmatpush1.xpose.msra.mxu0 0.0
  %2299 = vmatprep.subr.mxu0 0.0
  %2300 = vmatpush1.xpose.msra.mxu0 0.0
  %2301 = vmatprep.subr.mxu0 0.0
  %2302 = vmatpush1.xpose.msra.mxu0 0.0
  %2303 = vmatprep.subr.mxu0 0.0
  %2304 = vmatpush1.xpose.msra.mxu0 0.0
  %2305 = vmatprep.subr.mxu0 0.0
  %2306 = vmatpush1.xpose.msra.mxu0 0.0
  %2307 = vmatprep.subr.mxu0 0.0
  %2308 = vmatpush1.xpose.msra.mxu0 0.0
  %2309 = vmatprep.subr.mxu0 0.0
  %2310 = vmatpush1.xpose.msra.mxu0 %v2277
  %2311 = vmatprep.subr.mxu0 0.0
  %2312 = vmatpush2.xpose.msra.mxu0 0.0
  %2313 = vmatprep.subr.mxu0 0.0
  %2314 = vmatpush2.xpose.msra.mxu0 0.0
  %2315 = vmatprep.subr.mxu0 0.0
  %2316 = vmatpush2.xpose.msra.mxu0 0.0
  %2317 = vmatprep.subr.mxu0 0.0
  %2318 = vmatpush2.xpose.msra.mxu0 0.0
  %2319 = vmatprep.subr.mxu0 0.0
  %2320 = vmatpush2.xpose.msra.mxu0 0.0
  %2321 = vmatprep.subr.mxu0 0.0
  %2322 = vmatpush2.xpose.msra.mxu0 0.0
  %2323 = vmatprep.subr.mxu0 0.0
  %2324 = vmatpush2.xpose.msra.mxu0 0.0
  %2325 = vmatprep.subr.mxu0 0.0
  %2326 = vmatpush2.xpose.msra.mxu0 0.0
  %2327 = vmatprep.subr.mxu0 0.0
  %2328 = vmatpush2.xpose.msra.mxu0 0.0
  %2329 = vmatprep.subr.mxu0 0.0
  %2330 = vmatpush2.xpose.msra.mxu0 0.0
  %2331 = vmatprep.subr.mxu0 0.0
  %2332 = vmatpush2.xpose.msra.mxu0 0.0
  %2333 = vmatprep.subr.mxu0 0.0
  %2334 = vmatpush2.xpose.msra.mxu0 0.0
  %2335 = vmatprep.subr.mxu0 0.0
  %2336 = vmatpush2.xpose.msra.mxu0 0.0
  %2337 = vmatprep.subr.mxu0 0.0
  %2338 = vmatpush2.xpose.msra.mxu0 0.0
  %2339 = vmatprep.subr.mxu0 0.0
  %2340 = vmatpush2.xpose.msra.mxu0 0.0
  %2341 = vmatprep.subr.mxu0 0.0
  %2342 = vmatpush2.xpose.msra.mxu0 0.0
  %2343 = vmatprep.mubr.f32.mxu0 0.0
  %2344 = vmatmul.mubr.f32.gmra.mxu0 %v2275
  %v2345 = vpop.f32.mrf.mxu0
  %v2346 = vadd.f32 0.0, %v2345
  %v2347 = vpop.f32.mrf.mxu0
  %2348 = vdwg.mxu0
  %v2349 = vmul.f32 %v2268, 0.17677669
  %v2350 = vmul.f32 %v2346, 0.17677669
  %v2351 = vsel %vm68, %v2349, -inf
  %2352 = vmax.xlane.f32.xlu0 %v2351
  %v2353 = vpop.xlane.xlu0 %2352
  %v2354 = vsel %vm68, %v2350, -inf
  %2355 = vmax.xlane.f32.xlu0 %v2354
  %v2356 = vpop.xlane.xlu0 %2355
  %v2357 = vsub.f32 %v2349, %v2353
  %v2358 = vsub.f32 %v2350, %v2356
  %v2359 = vmul.f32 %v2357, 1.442695
  %v2360 = vpow.pop %v2359
  %v2361 = vmul.f32 %v2358, 1.442695
  %v2362 = vpow.pop %v2361
  %v2363 = vsel %vm68, %v2360, 0.0
  %2364 = vadd.xlane.f32.xlu0 %v2363
  %v2365 = vpop.xlane.xlu0 %2364
  %v2366 = vsel %vm68, %v2362, 0.0
  %2367 = vadd.xlane.f32.xlu0 %v2366
  %v2368 = vpop.xlane.xlu0 %2367
  %v2369 = vrcp.pop %v2365
  %v2370 = vrcp.pop %v2368
  %v2371 = vmul.f32 %v2360, %v2369
  %v2372 = vmul.f32 %v2362, %v2370
  %2373 = vrot.lane.b32.xlu0 %v2185, 64
  %v2374 = vpop.permute.xlu0 %2373
  %v2377 = vsel %vm68, %v2371, 0
  %2379 = vmatprep.subr.mxu0 0.0
  %2380 = vmatpush1.msra.mxu0 0.0
  %2381 = vmatprep.subr.mxu0 0.0
  %2382 = vmatpush1.msra.mxu0 0.0
  %2383 = vmatprep.subr.mxu0 0.0
  %2384 = vmatpush1.msra.mxu0 0.0
  %2385 = vmatprep.subr.mxu0 0.0
  %2386 = vmatpush1.msra.mxu0 0.0
  %2387 = vmatprep.subr.mxu0 0.0
  %2388 = vmatpush1.msra.mxu0 0.0
  %2389 = vmatprep.subr.mxu0 0.0
  %2390 = vmatpush1.msra.mxu0 0.0
  %2391 = vmatprep.subr.mxu0 0.0
  %2392 = vmatpush1.msra.mxu0 0.0
  %2393 = vmatprep.subr.mxu0 0.0
  %2394 = vmatpush1.msra.mxu0 0.0
  %2395 = vmatprep.subr.mxu0 0.0
  %2396 = vmatpush1.msra.mxu0 0.0
  %2397 = vmatprep.subr.mxu0 0.0
  %2398 = vmatpush1.msra.mxu0 0.0
  %2399 = vmatprep.subr.mxu0 0.0
  %2400 = vmatpush1.msra.mxu0 0.0
  %2401 = vmatprep.subr.mxu0 0.0
  %2402 = vmatpush1.msra.mxu0 0.0
  %2403 = vmatprep.subr.mxu0 0.0
  %2404 = vmatpush1.msra.mxu0 0.0
  %2405 = vmatprep.subr.mxu0 0.0
  %2406 = vmatpush1.msra.mxu0 0.0
  %2407 = vmatprep.subr.mxu0 0.0
  %2408 = vmatpush1.msra.mxu0 0.0
  %2409 = vmatprep.subr.mxu0 0.0
  %2410 = vmatpush1.msra.mxu0 %v2374
  %2411 = vmatprep.subr.mxu0 0.0
  %2412 = vmatpush2.msra.mxu0 0.0
  %2413 = vmatprep.subr.mxu0 0.0
  %2414 = vmatpush2.msra.mxu0 0.0
  %2415 = vmatprep.subr.mxu0 0.0
  %2416 = vmatpush2.msra.mxu0 0.0
  %2417 = vmatprep.subr.mxu0 0.0
  %2418 = vmatpush2.msra.mxu0 0.0
  %2419 = vmatprep.subr.mxu0 0.0
  %2420 = vmatpush2.msra.mxu0 0.0
  %2421 = vmatprep.subr.mxu0 0.0
  %2422 = vmatpush2.msra.mxu0 0.0
  %2423 = vmatprep.subr.mxu0 0.0
  %2424 = vmatpush2.msra.mxu0 0.0
  %2425 = vmatprep.subr.mxu0 0.0
  %2426 = vmatpush2.msra.mxu0 0.0
  %2427 = vmatprep.subr.mxu0 0.0
  %2428 = vmatpush2.msra.mxu0 0.0
  %2429 = vmatprep.subr.mxu0 0.0
  %2430 = vmatpush2.msra.mxu0 0.0
  %2431 = vmatprep.subr.mxu0 0.0
  %2432 = vmatpush2.msra.mxu0 0.0
  %2433 = vmatprep.subr.mxu0 0.0
  %2434 = vmatpush2.msra.mxu0 0.0
  %2435 = vmatprep.subr.mxu0 0.0
  %2436 = vmatpush2.msra.mxu0 0.0
  %2437 = vmatprep.subr.mxu0 0.0
  %2438 = vmatpush2.msra.mxu0 0.0
  %2439 = vmatprep.subr.mxu0 0.0
  %2440 = vmatpush2.msra.mxu0 0.0
  %2441 = vmatprep.subr.mxu0 0.0
  %2442 = vmatpush2.msra.mxu0 0.0
  %2443 = vmatprep.mubr.f32.mxu0 0.0
  %2444 = vmatmul.mubr.f32.gmra.mxu0 %v2377
  %v2445 = vpop.f32.mrf.mxu0
  %v2446 = vadd.f32 0.0, %v2445
  %v2447 = vpop.f32.mrf.mxu0
  %2448 = vdwg.mxu0
  %2449 = vrot.lane.b32.xlu0 %v2190, 64
  %v2450 = vpop.permute.xlu0 %2449
  %v2453 = vsel %vm68, %v2372, 0
  %2455 = vmatprep.subr.mxu0 0.0
  %2456 = vmatpush1.msra.mxu0 0.0
  %2457 = vmatprep.subr.mxu0 0.0
  %2458 = vmatpush1.msra.mxu0 0.0
  %2459 = vmatprep.subr.mxu0 0.0
  %2460 = vmatpush1.msra.mxu0 0.0
  %2461 = vmatprep.subr.mxu0 0.0
  %2462 = vmatpush1.msra.mxu0 0.0
  %2463 = vmatprep.subr.mxu0 0.0
  %2464 = vmatpush1.msra.mxu0 0.0
  %2465 = vmatprep.subr.mxu0 0.0
  %2466 = vmatpush1.msra.mxu0 0.0
  %2467 = vmatprep.subr.mxu0 0.0
  %2468 = vmatpush1.msra.mxu0 0.0
  %2469 = vmatprep.subr.mxu0 0.0
  %2470 = vmatpush1.msra.mxu0 0.0
  %2471 = vmatprep.subr.mxu0 0.0
  %2472 = vmatpush1.msra.mxu0 0.0
  %2473 = vmatprep.subr.mxu0 0.0
  %2474 = vmatpush1.msra.mxu0 0.0
  %2475 = vmatprep.subr.mxu0 0.0
  %2476 = vmatpush1.msra.mxu0 0.0
  %2477 = vmatprep.subr.mxu0 0.0
  %2478 = vmatpush1.msra.mxu0 0.0
  %2479 = vmatprep.subr.mxu0 0.0
  %2480 = vmatpush1.msra.mxu0 0.0
  %2481 = vmatprep.subr.mxu0 0.0
  %2482 = vmatpush1.msra.mxu0 0.0
  %2483 = vmatprep.subr.mxu0 0.0
  %2484 = vmatpush1.msra.mxu0 0.0
  %2485 = vmatprep.subr.mxu0 0.0
  %2486 = vmatpush1.msra.mxu0 %v2450
  %2487 = vmatprep.subr.mxu0 0.0
  %2488 = vmatpush2.msra.mxu0 0.0
  %2489 = vmatprep.subr.mxu0 0.0
  %2490 = vmatpush2.msra.mxu0 0.0
  %2491 = vmatprep.subr.mxu0 0.0
  %2492 = vmatpush2.msra.mxu0 0.0
  %2493 = vmatprep.subr.mxu0 0.0
  %2494 = vmatpush2.msra.mxu0 0.0
  %2495 = vmatprep.subr.mxu0 0.0
  %2496 = vmatpush2.msra.mxu0 0.0
  %2497 = vmatprep.subr.mxu0 0.0
  %2498 = vmatpush2.msra.mxu0 0.0
  %2499 = vmatprep.subr.mxu0 0.0
  %2500 = vmatpush2.msra.mxu0 0.0
  %2501 = vmatprep.subr.mxu0 0.0
  %2502 = vmatpush2.msra.mxu0 0.0
  %2503 = vmatprep.subr.mxu0 0.0
  %2504 = vmatpush2.msra.mxu0 0.0
  %2505 = vmatprep.subr.mxu0 0.0
  %2506 = vmatpush2.msra.mxu0 0.0
  %2507 = vmatprep.subr.mxu0 0.0
  %2508 = vmatpush2.msra.mxu0 0.0
  %2509 = vmatprep.subr.mxu0 0.0
  %2510 = vmatpush2.msra.mxu0 0.0
  %2511 = vmatprep.subr.mxu0 0.0
  %2512 = vmatpush2.msra.mxu0 0.0
  %2513 = vmatprep.subr.mxu0 0.0
  %2514 = vmatpush2.msra.mxu0 0.0
  %2515 = vmatprep.subr.mxu0 0.0
  %2516 = vmatpush2.msra.mxu0 0.0
  %2517 = vmatprep.subr.mxu0 0.0
  %2518 = vmatpush2.msra.mxu0 0.0
  %2519 = vmatprep.mubr.f32.mxu0 0.0
  %2520 = vmatmul.mubr.f32.gmra.mxu0 %v2453
  %v2521 = vpop.f32.mrf.mxu0
  %v2522 = vadd.f32 0.0, %v2521
  %v2523 = vpop.f32.mrf.mxu0
  %2524 = vdwg.mxu0
  %s2525 = scalar_lea.vmem %s7, 64
  %v2526 = vld [vmem:[%s2525] sm:$0xff]
  %v2527 = vld [vmem:[%s2525 + $0x8] sm:$0xff]
  %v2528 = vld [vmem:[%s2525 + $0x10] sm:$0xff]
  %v2529 = vld [vmem:[%s2525 + $0x18] sm:$0xff]
  %s2530 = scalar_lea.vmem %s8, 2
  %v2531 = vld [vmem:[%s2530] sm:$0x1]
  %v2533 = vlaneseq
  %v2534 = vshrl.u32 %v2533, 7
  %v2535 = vsub.s32 0, %v2534
  %v2536 = vrot.slane %v2531, %v2535
  %v2539 = vsel %vm152, %v2446, 0
  %v2542 = vsel %vm152, %v2522, 0
  %2544 = vmatprep.subr.mxu0 0.0
  %2545 = vmatpush1.msra.mxu0 0.0
  %2546 = vmatprep.subr.mxu0 0.0
  %2547 = vmatpush1.msra.mxu0 0.0
  %2548 = vmatprep.subr.mxu0 0.0
  %2549 = vmatpush1.msra.mxu0 0.0
  %2550 = vmatprep.subr.mxu0 0.0
  %2551 = vmatpush1.msra.mxu0 0.0
  %2552 = vmatprep.subr.mxu0 0.0
  %2553 = vmatpush1.msra.mxu0 0.0
  %2554 = vmatprep.subr.mxu0 0.0
  %2555 = vmatpush1.msra.mxu0 0.0
  %2556 = vmatprep.subr.mxu0 0.0
  %2557 = vmatpush1.msra.mxu0 0.0
  %2558 = vmatprep.subr.mxu0 0.0
  %2559 = vmatpush1.msra.mxu0 0.0
  %2560 = vmatprep.subr.mxu0 0.0
  %2561 = vmatpush1.msra.mxu0 0.0
  %2562 = vmatprep.subr.mxu0 0.0
  %2563 = vmatpush1.msra.mxu0 0.0
  %2564 = vmatprep.subr.mxu0 0.0
  %2565 = vmatpush1.msra.mxu0 0.0
  %2566 = vmatprep.subr.mxu0 0.0
  %2567 = vmatpush1.msra.mxu0 0.0
  %2568 = vmatprep.subr.mxu0 0.0
  %2569 = vmatpush1.msra.mxu0 %v2529
  %2570 = vmatprep.subr.mxu0 0.0
  %2571 = vmatpush1.msra.mxu0 %v2528
  %2572 = vmatprep.subr.mxu0 0.0
  %2573 = vmatpush1.msra.mxu0 %v2527
  %2574 = vmatprep.subr.mxu0 0.0
  %2575 = vmatpush1.msra.mxu0 %v2526
  %2576 = vmatprep.subr.mxu0 0.0
  %2577 = vmatpush2.msra.mxu0 0.0
  %2578 = vmatprep.subr.mxu0 0.0
  %2579 = vmatpush2.msra.mxu0 0.0
  %2580 = vmatprep.subr.mxu0 0.0
  %2581 = vmatpush2.msra.mxu0 0.0
  %2582 = vmatprep.subr.mxu0 0.0
  %2583 = vmatpush2.msra.mxu0 0.0
  %2584 = vmatprep.subr.mxu0 0.0
  %2585 = vmatpush2.msra.mxu0 0.0
  %2586 = vmatprep.subr.mxu0 0.0
  %2587 = vmatpush2.msra.mxu0 0.0
  %2588 = vmatprep.subr.mxu0 0.0
  %2589 = vmatpush2.msra.mxu0 0.0
  %2590 = vmatprep.subr.mxu0 0.0
  %2591 = vmatpush2.msra.mxu0 0.0
  %2592 = vmatprep.subr.mxu0 0.0
  %2593 = vmatpush2.msra.mxu0 0.0
  %2594 = vmatprep.subr.mxu0 0.0
  %2595 = vmatpush2.msra.mxu0 0.0
  %2596 = vmatprep.subr.mxu0 0.0
  %2597 = vmatpush2.msra.mxu0 0.0
  %2598 = vmatprep.subr.mxu0 0.0
  %2599 = vmatpush2.msra.mxu0 0.0
  %2600 = vmatprep.subr.mxu0 0.0
  %2601 = vmatpush2.msra.mxu0 0.0
  %2602 = vmatprep.subr.mxu0 0.0
  %2603 = vmatpush2.msra.mxu0 0.0
  %2604 = vmatprep.subr.mxu0 0.0
  %2605 = vmatpush2.msra.mxu0 0.0
  %2606 = vmatprep.subr.mxu0 0.0
  %2607 = vmatpush2.msra.mxu0 0.0
  %2608 = vmatprep.mubr.f32.mxu0 0.0
  %2609 = vmatmul.mubr.f32.gmra.mxu0 %v2539
  %v2610 = vpop.f32.mrf.mxu0
  %v2611 = vadd.f32 %v2536, %v2610
  %v2612 = vpop.f32.mrf.mxu0
  %2613 = vmatprep.mubr.f32.mxu0 0.0
  %2614 = vmatmul.mubr.f32.gmra.mxu0 %v2542
  %v2615 = vpop.f32.mrf.mxu0
  %v2616 = vadd.f32 %v2536, %v2615
  %v2617 = vpop.f32.mrf.mxu0
  %2618 = vdwg.mxu0
  %v2619 = vadd.f32 %v1964, %v2611
  %v2620 = vadd.f32 %v1965, %v2616
  %v2621 = vsel %vm152, %v2619, 0.0
  %2622 = vadd.xlane.f32.xlu0 %v2621
  %v2623 = vpop.xlane.xlu0 %2622
  %v2624 = vsel %vm152, %v2620, 0.0
  %2625 = vadd.xlane.f32.xlu0 %v2624
  %v2626 = vpop.xlane.xlu0 %2625
  %v2627 = vmul.f32 %v2623, %v156
  %v2628 = vmul.f32 %v2626, %v156
  %v2629 = vsub.f32 %v2619, %v2627
  %v2630 = vsub.f32 %v2620, %v2628
  %v2631 = vmul.f32 %v2629, %v2629
  %v2632 = vmul.f32 %v2630, %v2630
  %v2633 = vsel %vm152, %v2631, 0.0
  %2634 = vadd.xlane.f32.xlu0 %v2633
  %v2635 = vpop.xlane.xlu0 %2634
  %v2636 = vsel %vm152, %v2632, 0.0
  %2637 = vadd.xlane.f32.xlu0 %v2636
  %v2638 = vpop.xlane.xlu0 %2637
  %v2639 = vmul.f32 %v2635, %v156
  %v2640 = vmul.f32 %v2638, %v156
  %v2641 = vadd.f32 %v2639, 1e-05
  %v2642 = vadd.f32 %v2640, 1e-05
  %v2643 = vrsqrt.pop %v2641
  %v2644 = vrsqrt.pop %v2642
  %v2645 = vmul.f32 %v2629, %v2643
  %v2646 = vmul.f32 %v2630, %v2644
  %v2647 = vlaneseq
  %v2648 = vshrl.u32 %v2647, 7
  %v2649 = vsub.s32 4, %v2648
  %v2650 = vrot.slane %v1967, %v2649
  %v2651 = vmul.f32 %v2645, %v2650
  %v2652 = vmul.f32 %v2646, %v2650
  %v2653 = vlaneseq
  %v2654 = vshrl.u32 %v2653, 7
  %v2655 = vsub.s32 5, %v2654
  %v2656 = vrot.slane %v1967, %v2655
  %v2657 = vadd.f32 %v2651, %v2656
  %v2658 = vadd.f32 %v2652, %v2656
  %s2659 = scalar_lea.vmem %s9, 64
  %v2660 = vld [vmem:[%s2659] sm:$0xff]
  %v2661 = vld [vmem:[%s2659 + $0x8] sm:$0xff]
  %v2662 = vld [vmem:[%s2659 + $0x10] sm:$0xff]
  %v2663 = vld [vmem:[%s2659 + $0x18] sm:$0xff]
  %s2664 = scalar_lea.vmem %s10, 2
  %v2665 = vld [vmem:[%s2664] sm:$0x1]
  %v2667 = vlaneseq
  %v2668 = vshrl.u32 %v2667, 7
  %v2669 = vsub.s32 0, %v2668
  %v2670 = vrot.slane %v2665, %v2669
  %v2673 = vsel %vm152, %v2657, 0
  %v2676 = vsel %vm152, %v2658, 0
  %2678 = vmatprep.subr.mxu0 0.0
  %2679 = vmatpush1.msra.mxu0 0.0
  %2680 = vmatprep.subr.mxu0 0.0
  %2681 = vmatpush1.msra.mxu0 0.0
  %2682 = vmatprep.subr.mxu0 0.0
  %2683 = vmatpush1.msra.mxu0 0.0
  %2684 = vmatprep.subr.mxu0 0.0
  %2685 = vmatpush1.msra.mxu0 0.0
  %2686 = vmatprep.subr.mxu0 0.0
  %2687 = vmatpush1.msra.mxu0 0.0
  %2688 = vmatprep.subr.mxu0 0.0
  %2689 = vmatpush1.msra.mxu0 0.0
  %2690 = vmatprep.subr.mxu0 0.0
  %2691 = vmatpush1.msra.mxu0 0.0
  %2692 = vmatprep.subr.mxu0 0.0
  %2693 = vmatpush1.msra.mxu0 0.0
  %2694 = vmatprep.subr.mxu0 0.0
  %2695 = vmatpush1.msra.mxu0 0.0
  %2696 = vmatprep.subr.mxu0 0.0
  %2697 = vmatpush1.msra.mxu0 0.0
  %2698 = vmatprep.subr.mxu0 0.0
  %2699 = vmatpush1.msra.mxu0 0.0
  %2700 = vmatprep.subr.mxu0 0.0
  %2701 = vmatpush1.msra.mxu0 0.0
  %2702 = vmatprep.subr.mxu0 0.0
  %2703 = vmatpush1.msra.mxu0 %v2663
  %2704 = vmatprep.subr.mxu0 0.0
  %2705 = vmatpush1.msra.mxu0 %v2662
  %2706 = vmatprep.subr.mxu0 0.0
  %2707 = vmatpush1.msra.mxu0 %v2661
  %2708 = vmatprep.subr.mxu0 0.0
  %2709 = vmatpush1.msra.mxu0 %v2660
  %2710 = vmatprep.subr.mxu0 0.0
  %2711 = vmatpush2.msra.mxu0 0.0
  %2712 = vmatprep.subr.mxu0 0.0
  %2713 = vmatpush2.msra.mxu0 0.0
  %2714 = vmatprep.subr.mxu0 0.0
  %2715 = vmatpush2.msra.mxu0 0.0
  %2716 = vmatprep.subr.mxu0 0.0
  %2717 = vmatpush2.msra.mxu0 0.0
  %2718 = vmatprep.subr.mxu0 0.0
  %2719 = vmatpush2.msra.mxu0 0.0
  %2720 = vmatprep.subr.mxu0 0.0
  %2721 = vmatpush2.msra.mxu0 0.0
  %2722 = vmatprep.subr.mxu0 0.0
  %2723 = vmatpush2.msra.mxu0 0.0
  %2724 = vmatprep.subr.mxu0 0.0
  %2725 = vmatpush2.msra.mxu0 0.0
  %2726 = vmatprep.subr.mxu0 0.0
  %2727 = vmatpush2.msra.mxu0 0.0
  %2728 = vmatprep.subr.mxu0 0.0
  %2729 = vmatpush2.msra.mxu0 0.0
  %2730 = vmatprep.subr.mxu0 0.0
  %2731 = vmatpush2.msra.mxu0 0.0
  %2732 = vmatprep.subr.mxu0 0.0
  %2733 = vmatpush2.msra.mxu0 0.0
  %2734 = vmatprep.subr.mxu0 0.0
  %2735 = vmatpush2.msra.mxu0 0.0
  %2736 = vmatprep.subr.mxu0 0.0
  %2737 = vmatpush2.msra.mxu0 0.0
  %2738 = vmatprep.subr.mxu0 0.0
  %2739 = vmatpush2.msra.mxu0 0.0
  %2740 = vmatprep.subr.mxu0 0.0
  %2741 = vmatpush2.msra.mxu0 0.0
  %2742 = vmatprep.mubr.f32.mxu0 0.0
  %2743 = vmatmul.mubr.f32.gmra.mxu0 %v2673
  %v2744 = vpop.f32.mrf.mxu0
  %v2745 = vadd.f32 %v2670, %v2744
  %v2746 = vpop.f32.mrf.mxu0
  %2747 = vmatprep.mubr.f32.mxu0 0.0
  %2748 = vmatmul.mubr.f32.gmra.mxu0 %v2676
  %v2749 = vpop.f32.mrf.mxu0
  %v2750 = vadd.f32 %v2670, %v2749
  %v2751 = vpop.f32.mrf.mxu0
  %2752 = vdwg.mxu0
  %v2753 = vmul.f32 %v2745, %v2745
  %v2754 = vmul.f32 %v2750, %v2750
  %v2755 = vmul.f32 %v2745, %v2753
  %v2756 = vmul.f32 %v2750, %v2754
  %v2757 = vmul.f32 %v2755, 0.044715
  %v2758 = vmul.f32 %v2756, 0.044715
  %v2759 = vadd.f32 %v2745, %v2757
  %v2760 = vadd.f32 %v2750, %v2758
  %v2761 = vmul.f32 %v2759, 0.7978846
  %v2762 = vmul.f32 %v2760, 0.7978846
  %v2763 = vtanh.pop %v2761
  %v2764 = vtanh.pop %v2762
  %v2765 = vadd.f32 %v2763, 1.0
  %v2766 = vadd.f32 %v2764, 1.0
  %v2767 = vmul.f32 %v2765, 0.5
  %v2768 = vmul.f32 %v2766, 0.5
  %v2769 = vmul.f32 %v2745, %v2767
  %v2770 = vmul.f32 %v2750, %v2768
  %s2771 = scalar_lea.vmem %s11, 256
  %v2772 = vld [vmem:[%s2771] sm:$0xff]
  %v2773 = vld [vmem:[%s2771 + $0x8] sm:$0xff]
  %v2774 = vld [vmem:[%s2771 + $0x10] sm:$0xff]
  %v2775 = vld [vmem:[%s2771 + $0x18] sm:$0xff]
  %v2776 = vld [vmem:[%s2771 + $0x20] sm:$0xff]
  %v2777 = vld [vmem:[%s2771 + $0x28] sm:$0xff]
  %v2778 = vld [vmem:[%s2771 + $0x30] sm:$0xff]
  %v2779 = vld [vmem:[%s2771 + $0x38] sm:$0xff]
  %v2780 = vld [vmem:[%s2771 + $0x40] sm:$0xff]
  %v2781 = vld [vmem:[%s2771 + $0x48] sm:$0xff]
  %v2782 = vld [vmem:[%s2771 + $0x50] sm:$0xff]
  %v2783 = vld [vmem:[%s2771 + $0x58] sm:$0xff]
  %v2784 = vld [vmem:[%s2771 + $0x60] sm:$0xff]
  %v2785 = vld [vmem:[%s2771 + $0x68] sm:$0xff]
  %v2786 = vld [vmem:[%s2771 + $0x70] sm:$0xff]
  %v2787 = vld [vmem:[%s2771 + $0x78] sm:$0xff]
  %s2788 = scalar_lea.vmem %s12, 2
  %v2789 = vld [vmem:[%s2788] sm:$0x1]
  %v2791 = vlaneseq
  %v2792 = vshrl.u32 %v2791, 7
  %v2793 = vsub.s32 0, %v2792
  %v2794 = vrot.slane %v2789, %v2793
  %2796 = vmatprep.subr.mxu0 0.0
  %2797 = vmatpush1.msra.mxu0 %v2787
  %2798 = vmatprep.subr.mxu0 0.0
  %2799 = vmatpush1.msra.mxu0 %v2786
  %2800 = vmatprep.subr.mxu0 0.0
  %2801 = vmatpush1.msra.mxu0 %v2785
  %2802 = vmatprep.subr.mxu0 0.0
  %2803 = vmatpush1.msra.mxu0 %v2784
  %2804 = vmatprep.subr.mxu0 0.0
  %2805 = vmatpush1.msra.mxu0 %v2783
  %2806 = vmatprep.subr.mxu0 0.0
  %2807 = vmatpush1.msra.mxu0 %v2782
  %2808 = vmatprep.subr.mxu0 0.0
  %2809 = vmatpush1.msra.mxu0 %v2781
  %2810 = vmatprep.subr.mxu0 0.0
  %2811 = vmatpush1.msra.mxu0 %v2780
  %2812 = vmatprep.subr.mxu0 0.0
  %2813 = vmatpush1.msra.mxu0 %v2779
  %2814 = vmatprep.subr.mxu0 0.0
  %2815 = vmatpush1.msra.mxu0 %v2778
  %2816 = vmatprep.subr.mxu0 0.0
  %2817 = vmatpush1.msra.mxu0 %v2777
  %2818 = vmatprep.subr.mxu0 0.0
  %2819 = vmatpush1.msra.mxu0 %v2776
  %2820 = vmatprep.subr.mxu0 0.0
  %2821 = vmatpush1.msra.mxu0 %v2775
  %2822 = vmatprep.subr.mxu0 0.0
  %2823 = vmatpush1.msra.mxu0 %v2774
  %2824 = vmatprep.subr.mxu0 0.0
  %2825 = vmatpush1.msra.mxu0 %v2773
  %2826 = vmatprep.subr.mxu0 0.0
  %2827 = vmatpush1.msra.mxu0 %v2772
  %2828 = vmatprep.subr.mxu0 0.0
  %2829 = vmatpush2.msra.mxu0 0.0
  %2830 = vmatprep.subr.mxu0 0.0
  %2831 = vmatpush2.msra.mxu0 0.0
  %2832 = vmatprep.subr.mxu0 0.0
  %2833 = vmatpush2.msra.mxu0 0.0
  %2834 = vmatprep.subr.mxu0 0.0
  %2835 = vmatpush2.msra.mxu0 0.0
  %2836 = vmatprep.subr.mxu0 0.0
  %2837 = vmatpush2.msra.mxu0 0.0
  %2838 = vmatprep.subr.mxu0 0.0
  %2839 = vmatpush2.msra.mxu0 0.0
  %2840 = vmatprep.subr.mxu0 0.0
  %2841 = vmatpush2.msra.mxu0 0.0
  %2842 = vmatprep.subr.mxu0 0.0
  %2843 = vmatpush2.msra.mxu0 0.0
  %2844 = vmatprep.subr.mxu0 0.0
  %2845 = vmatpush2.msra.mxu0 0.0
  %2846 = vmatprep.subr.mxu0 0.0
  %2847 = vmatpush2.msra.mxu0 0.0
  %2848 = vmatprep.subr.mxu0 0.0
  %2849 = vmatpush2.msra.mxu0 0.0
  %2850 = vmatprep.subr.mxu0 0.0
  %2851 = vmatpush2.msra.mxu0 0.0
  %2852 = vmatprep.subr.mxu0 0.0
  %2853 = vmatpush2.msra.mxu0 0.0
  %2854 = vmatprep.subr.mxu0 0.0
  %2855 = vmatpush2.msra.mxu0 0.0
  %2856 = vmatprep.subr.mxu0 0.0
  %2857 = vmatpush2.msra.mxu0 0.0
  %2858 = vmatprep.subr.mxu0 0.0
  %2859 = vmatpush2.msra.mxu0 0.0
  %2860 = vmatprep.mubr.f32.mxu0 0.0
  %2861 = vmatmul.mubr.f32.gmra.mxu0 %v2769
  %v2862 = vpop.f32.mrf.mxu0
  %v2863 = vadd.f32 %v2794, %v2862
  %v2864 = vpop.f32.mrf.mxu0
  %2865 = vmatprep.mubr.f32.mxu0 0.0
  %2866 = vmatmul.mubr.f32.gmra.mxu0 %v2770
  %v2867 = vpop.f32.mrf.mxu0
  %v2868 = vadd.f32 %v2794, %v2867
  %v2869 = vpop.f32.mrf.mxu0
  %2870 = vdwg.mxu0
  %v2871 = vadd.f32 %v2619, %v2863
  %v2872 = vadd.f32 %v2620, %v2868
  %v2873 = vld [vmem:[%s13] sm:$0xff]
  %v2874 = vld [vmem:[%s13 + $0x8] sm:$0xff]
  %v2875 = vld [vmem:[%s13 + $0x10] sm:$0xff]
  %v2876 = vld [vmem:[%s13 + $0x18] sm:$0xff]
  %v2877 = vld [vmem:[%s14] sm:$0x1]
  %v2879 = vlaneseq
  %v2880 = vshrl.u32 %v2879, 7
  %v2881 = vsub.s32 0, %v2880
  %v2882 = vrot.slane %v2877, %v2881
  %v2885 = vsel %vm152, %v2871, 0
  %v2888 = vsel %vm152, %v2872, 0
  %2890 = vmatprep.subr.mxu0 0.0
  %2891 = vmatpush1.msra.mxu0 0.0
  %2892 = vmatprep.subr.mxu0 0.0
  %2893 = vmatpush1.msra.mxu0 0.0
  %2894 = vmatprep.subr.mxu0 0.0
  %2895 = vmatpush1.msra.mxu0 0.0
  %2896 = vmatprep.subr.mxu0 0.0
  %2897 = vmatpush1.msra.mxu0 0.0
  %2898 = vmatprep.subr.mxu0 0.0
  %2899 = vmatpush1.msra.mxu0 0.0
  %2900 = vmatprep.subr.mxu0 0.0
  %2901 = vmatpush1.msra.mxu0 0.0
  %2902 = vmatprep.subr.mxu0 0.0
  %2903 = vmatpush1.msra.mxu0 0.0
  %2904 = vmatprep.subr.mxu0 0.0
  %2905 = vmatpush1.msra.mxu0 0.0
  %2906 = vmatprep.subr.mxu0 0.0
  %2907 = vmatpush1.msra.mxu0 0.0
  %2908 = vmatprep.subr.mxu0 0.0
  %2909 = vmatpush1.msra.mxu0 0.0
  %2910 = vmatprep.subr.mxu0 0.0
  %2911 = vmatpush1.msra.mxu0 0.0
  %2912 = vmatprep.subr.mxu0 0.0
  %2913 = vmatpush1.msra.mxu0 0.0
  %2914 = vmatprep.subr.mxu0 0.0
  %2915 = vmatpush1.msra.mxu0 %v2876
  %2916 = vmatprep.subr.mxu0 0.0
  %2917 = vmatpush1.msra.mxu0 %v2875
  %2918 = vmatprep.subr.mxu0 0.0
  %2919 = vmatpush1.msra.mxu0 %v2874
  %2920 = vmatprep.subr.mxu0 0.0
  %2921 = vmatpush1.msra.mxu0 %v2873
  %2922 = vmatprep.subr.mxu0 0.0
  %2923 = vmatpush2.msra.mxu0 0.0
  %2924 = vmatprep.subr.mxu0 0.0
  %2925 = vmatpush2.msra.mxu0 0.0
  %2926 = vmatprep.subr.mxu0 0.0
  %2927 = vmatpush2.msra.mxu0 0.0
  %2928 = vmatprep.subr.mxu0 0.0
  %2929 = vmatpush2.msra.mxu0 0.0
  %2930 = vmatprep.subr.mxu0 0.0
  %2931 = vmatpush2.msra.mxu0 0.0
  %2932 = vmatprep.subr.mxu0 0.0
  %2933 = vmatpush2.msra.mxu0 0.0
  %2934 = vmatprep.subr.mxu0 0.0
  %2935 = vmatpush2.msra.mxu0 0.0
  %2936 = vmatprep.subr.mxu0 0.0
  %2937 = vmatpush2.msra.mxu0 0.0
  %2938 = vmatprep.subr.mxu0 0.0
  %2939 = vmatpush2.msra.mxu0 0.0
  %2940 = vmatprep.subr.mxu0 0.0
  %2941 = vmatpush2.msra.mxu0 0.0
  %2942 = vmatprep.subr.mxu0 0.0
  %2943 = vmatpush2.msra.mxu0 0.0
  %2944 = vmatprep.subr.mxu0 0.0
  %2945 = vmatpush2.msra.mxu0 0.0
  %2946 = vmatprep.subr.mxu0 0.0
  %2947 = vmatpush2.msra.mxu0 0.0
  %2948 = vmatprep.subr.mxu0 0.0
  %2949 = vmatpush2.msra.mxu0 0.0
  %2950 = vmatprep.subr.mxu0 0.0
  %2951 = vmatpush2.msra.mxu0 0.0
  %2952 = vmatprep.subr.mxu0 0.0
  %2953 = vmatpush2.msra.mxu0 0.0
  %2954 = vmatprep.mubr.f32.mxu0 0.0
  %2955 = vmatmul.mubr.f32.gmra.mxu0 %v2885
  %v2956 = vpop.f32.mrf.mxu0
  %v2957 = vadd.f32 %v2882, %v2956
  %v2958 = vpop.f32.mrf.mxu0
  %2959 = vmatprep.mubr.f32.mxu0 0.0
  %2960 = vmatmul.mubr.f32.gmra.mxu0 %v2888
  %v2961 = vpop.f32.mrf.mxu0
  %v2962 = vadd.f32 %v2882, %v2961
  %v2963 = vpop.f32.mrf.mxu0
  %2964 = vdwg.mxu0
  %2965 = vst [vmem:[%s15] sm:$0xff] %v2957
  %2966 = vst [vmem:[%s15 + $0x8] sm:$0xff] %v2962
  // Predicated region
  $region62: #{grokking_perceiver_forward.1} parent=0 // pred_check
    _
  $region63: #{grokking_perceiver_forward.1} parent=0 // pred_check_branch
    %2968 = sbr.rel (0) target = $region65
  $region64: #{grokking_perceiver_forward.1} parent=0 // pred_region
    _
  $region65: #{grokking_perceiver_forward.1} parent=0 // pred_fallthru
    _
  // Predicated region
  $region66: #{grokking_perceiver_forward.1} parent=0 // pred_check
    _
  $region67: #{grokking_perceiver_forward.1} parent=0 // pred_check_branch
    %2970 = sbr.rel (0) target = $region69
  $region68: #{grokking_perceiver_forward.1} parent=0 // pred_region
    _
  $region69: #{grokking_perceiver_forward.1} parent=0 // pred_fallthru
    _

</llo_original>
